<compile_context>
chip_gen: v7x
topology: tpu7x:2x2x1
jax: 0.10.0
libtpu: 0.0.40
codegen_flags: <defaults>
</compile_context>

<pallas_src>
import functools

import jax
import jax.numpy as jnp
from jax.experimental import pallas as pl
from jax.experimental.pallas import tpu as pltpu


def _round_up(x, m):
    return (x + m - 1) // m * m


def _pick_row_tile(ho, wo, cap):
    """Largest t_h dividing ho with t_h*wo <= cap and t_h*wo % 8 == 0."""
    for t in range(ho, 0, -1):
        if ho % t == 0 and t * wo <= cap and (t * wo) % 8 == 0:
            return t
    return ho  # whole image (block == full dim is always legal)


def _pick_hw_tile(hw, cap=2048):
    """Largest multiple of 128 dividing hw, capped; else the full hw."""
    top = min(cap, hw)
    for t in range(top - top % 128, 0, -128):
        if hw % t == 0:
            return t
    return hw


# --------------------------- Kernel A: conv + stats ---------------------------

def _conv_stats_kernel(x_ref, w_ref, conv_ref, sum_ref, sq_ref, acc_ref,
                       *, kh, kw, t_h, wo, c_in):
    # x_ref:    (1, Hp, Wp, C_in)   bf16  full padded image (resident across row tiles)
    # w_ref:    (KH*KW, C_in, OCp)  bf16
    # conv_ref: (1, t_h*Wo, OCp)    bf16  conv rows of this tile
    # sum_ref:  (1, 1, OCp)         f32   per-image channel sums   (accumulated over tiles)
    # sq_ref:   (1, 1, OCp)         f32   per-image channel sum-sq (accumulated over tiles)
    # acc_ref:  (t_h*Wo, OCp)       f32   VMEM scratch accumulator
    j_tile = pl.program_id(1)
    r0 = j_tile * t_h
    thw = t_h * wo

    # Fused im2col: shifted windows of the resident padded image -> MXU dots.
    # One accumulator RMW per kernel row (3 total), no separate zero-init pass.
    for i in range(kh):
        row_acc = None
        for j in range(kw):
            patch = x_ref[0, pl.ds(r0 + i, t_h), pl.ds(j, wo), :].reshape(thw, c_in)
            d = jnp.dot(patch, w_ref[i * kw + j],
                        preferred_element_type=jnp.float32)
            row_acc = d if row_acc is None else row_acc + d
        if i == 0:
            acc_ref[...] = row_acc
        else:
            acc_ref[...] += row_acc

    acc = acc_ref[...]                                   # f32
    # BN renormalizes, so a bf16 conv intermediate is safe; stats come from the
    # f32 accumulator and are accumulated across row tiles of this image.
    conv_ref[0] = acc.astype(conv_ref.dtype)

    s = jnp.sum(acc, axis=0, keepdims=True)              # (1, OCp)
    q = jnp.sum(acc * acc, axis=0, keepdims=True)        # (1, OCp)

    @pl.when(j_tile == 0)
    def _():
        sum_ref[0] = s
        sq_ref[0] = q

    @pl.when(j_tile > 0)
    def _():
        sum_ref[0] += s
        sq_ref[0] += q


# --------------------- Kernel B: BN affine + LeakyReLU + NCHW ------------------

def _bn_lrelu_nchw_kernel(x_ref, scale_ref, shift_ref, o_ref, *, oc):
    # x_ref:     (1, t_hw, OCp) bf16
    # scale_ref: (oc, 1)        f32
    # shift_ref: (oc, 1)        f32
    # o_ref:     (1, oc, t_hw)  f32  -> NCHW, HW in the (dense) lane dim
    xt = x_ref[0].T                                      # bf16 transpose (XLU): half the f32 traffic
    y = xt[:oc, :].astype(jnp.float32)                   # drop zero-padded channels, upcast
    y = y * scale_ref[...] + shift_ref[...]              # BN affine (f32)
    o_ref[0] = jnp.where(y > 0.0, y, 0.1 * y)            # LeakyReLU(0.1)


# ------------------------------- host wrapper ---------------------------------

@functools.partial(jax.jit, static_argnames=("padding", "row_tile_cap"))
def cnn_block_forward(x, conv_w, gamma, beta, *, padding=1, eps=1e-5,
                      row_tile_cap=2048):
    """x: (N, C_in, H, W), conv_w: (OC, C_in, KH, KW) -> (N, OC, H_out, W_out)."""
    n, c_in, h, w = x.shape
    oc, _, kh, kw = conv_w.shape
    ho = h + 2 * padding - kh + 1
    wo = w + 2 * padding - kw + 1
    hw = ho * wo
    m = n * hw
    hp, wp = h + 2 * padding, w + 2 * padding
    ocp = max(128, _round_up(oc, 128))                   # lane-dense OC for matmul/stores

    # Row tiling for Kernel A: bounds per-step VMEM (v7x: 64 MiB/TC).
    t_h = _pick_row_tile(ho, wo, row_tile_cap)
    n_ht = ho // t_h
    thw = t_h * wo

    # Input: NCHW -> padded NHWC, bf16 for the MXU.
    x_nhwc = jnp.transpose(x, (0, 2, 3, 1)).astype(jnp.bfloat16)
    x_pad = jnp.pad(x_nhwc, ((0, 0), (padding, padding), (padding, padding), (0, 0)))

    # Weights: (OC, C_in, KH, KW) -> (KH*KW, C_in, OC_pad), bf16, zero-pad OC.
    w_k = jnp.transpose(conv_w, (2, 3, 1, 0)).reshape(kh * kw, c_in, oc)
    w_k = jnp.pad(w_k, ((0, 0), (0, 0), (0, ocp - oc))).astype(jnp.bfloat16)

    kernel_a = functools.partial(_conv_stats_kernel,
                                 kh=kh, kw=kw, t_h=t_h, wo=wo, c_in=c_in)
    conv_out, csum, csq = pl.pallas_call(
        kernel_a,
        out_shape=(jax.ShapeDtypeStruct((n, hw, ocp), jnp.bfloat16),
                   jax.ShapeDtypeStruct((n, 1, ocp), jnp.float32),
                   jax.ShapeDtypeStruct((n, 1, ocp), jnp.float32)),
        grid=(n, n_ht),
        in_specs=[
            # Full padded image; index does not depend on the row-tile axis, so
            # it is DMA'd once per image and stays resident across row tiles.
            pl.BlockSpec((1, hp, wp, c_in), lambda i, j: (i, 0, 0, 0)),
            pl.BlockSpec((kh * kw, c_in, ocp), lambda i, j: (0, 0, 0)),
        ],
        out_specs=(
            pl.BlockSpec((1, thw, ocp), lambda i, j: (i, j, 0)),
            pl.BlockSpec((1, 1, ocp), lambda i, j: (i, 0, 0)),   # accumulator over j
            pl.BlockSpec((1, 1, ocp), lambda i, j: (i, 0, 0)),   # accumulator over j
        ),
        scratch_shapes=[pltpu.VMEM((thw, ocp), jnp.float32)],
        compiler_params=pltpu.CompilerParams(
            # Row-tile axis carries the stats accumulation -> "arbitrary".
            dimension_semantics=("parallel", "arbitrary"),
            vmem_limit_bytes=32 * 1024 * 1024),          # fits v5e/v6e/v7x budgets
    )(x_pad, w_k)

    # --- BN statistics -> affine coefficients (tiny, f32, plain JAX) ----------
    total = jnp.sum(csum[:, 0, :], axis=0)               # (OCp,)
    total_sq = jnp.sum(csq[:, 0, :], axis=0)              # (OCp,)
    mean = total[:oc] / m
    var = jnp.maximum(total_sq[:oc] / m - mean * mean, 0.0)   # biased var (training BN)
    inv_std = jax.lax.rsqrt(var + eps)
    scale = (gamma.astype(jnp.float32) * inv_std).reshape(oc, 1)
    shift = (beta.astype(jnp.float32) - mean * gamma.astype(jnp.float32) * inv_std
             ).reshape(oc, 1)

    # Lane-dense HW tile for the HBM-bound epilogue.
    t_hw = _pick_hw_tile(hw)

    kernel_b = functools.partial(_bn_lrelu_nchw_kernel, oc=oc)
    y = pl.pallas_call(
        kernel_b,
        out_shape=jax.ShapeDtypeStruct((n, oc, hw), jnp.float32),
        grid=(n, hw // t_hw),
        in_specs=[
            pl.BlockSpec((1, t_hw, ocp), lambda i, j: (i, j, 0)),
            pl.BlockSpec((oc, 1), lambda i, j: (0, 0)),
            pl.BlockSpec((oc, 1), lambda i, j: (0, 0)),
        ],
        out_specs=pl.BlockSpec((1, oc, t_hw), lambda i, j: (i, 0, j)),
        compiler_params=pltpu.CompilerParams(
            dimension_semantics=("parallel", "parallel"),
            vmem_limit_bytes=32 * 1024 * 1024),
    )(conv_out, scale, shift)

    # (N, OC, Ho*Wo) is already channel-major: this reshape is free.
    return y.reshape(n, oc, ho, wo)


# ----------------------------------- main --------------------------------------

if __name__ == "__main__":
    # Small YOLO-like config: kernel_size=3, stride=1, padding=1, bias=False.
    N, C_IN, H, W = 2, 4, 16, 16
    OC, KH, KW = 8, 3, 3

    key = jax.random.PRNGKey(0)
    kx, kw_, kg, kb = jax.random.split(key, 4)

    x = jax.random.normal(kx, (N, C_IN, H, W), dtype=jnp.float32)
    conv_w = 0.1 * jax.random.normal(kw_, (OC, C_IN, KH, KW), dtype=jnp.float32)
    gamma = 1.0 + 0.1 * jax.random.normal(kg, (OC,), dtype=jnp.float32)
    beta = 0.1 * jax.random.normal(kb, (OC,), dtype=jnp.float32)

    # row_tile_cap=128 forces 2 row tiles per image at this tiny size, so the
    # tiled path (dynamic row offsets + in-kernel stats accumulation) is tested.
    out = cnn_block_forward(x, conv_w, gamma, beta, padding=1, row_tile_cap=128)
    out = jax.block_until_ready(out)

    # Reference (pure f32 JAX) of the same semantics.
    ref_conv = jax.lax.conv_general_dilated(
        x, conv_w, window_strides=(1, 1), padding=((1, 1), (1, 1)),
        dimension_numbers=("NCHW", "OIHW", "NCHW"))
    mu = jnp.mean(ref_conv, axis=(0, 2, 3), keepdims=True)
    var = jnp.var(ref_conv, axis=(0, 2, 3), keepdims=True)
    ref = (ref_conv - mu) * jax.lax.rsqrt(var + 1e-5)
    ref = ref * gamma.reshape(1, OC, 1, 1) + beta.reshape(1, OC, 1, 1)
    ref = jnp.where(ref > 0, ref, 0.1 * ref)

    assert out.shape == (N, OC, H, W)
    # Tolerance accounts for bf16 matmul operands / bf16 conv intermediate
    # (stats and the affine epilogue stay in f32).
    max_err = float(jnp.max(jnp.abs(out - ref)))
    assert max_err < 5e-2, f"max abs err {max_err}"
    print("KERNEL_OK")
</pallas_src>

<mosaic_0001>
module attributes {stable_mosaic.version = 11 : i64} {
  func.func @_conv_stats_kernel(%arg0: i32, %arg1: i32, %arg2: memref<1x18x18x4xbf16, #tpu.memory_space<vmem>>, %arg3: memref<9x4x128xbf16, #tpu.memory_space<vmem>>, %arg4: memref<1x128x128xbf16, #tpu.memory_space<vmem>>, %arg5: memref<1x1x128xf32, #tpu.memory_space<vmem>>, %arg6: memref<1x1x128xf32, #tpu.memory_space<vmem>>, %arg7: memref<128x128xf32, #tpu.memory_space<vmem>>) attributes {dimension_semantics = [#tpu.dimension_semantics<parallel>, #tpu.dimension_semantics<arbitrary>], iteration_bounds = array<i64: 2, 2>, scalar_prefetch = 0 : i64, scratch_operands = 1 : i64, tpu.core_type = #tpu.core_type<tc>, window_params = [{transform_indices = @transform_0, window_bounds = array<i64: 1, 18, 18, 4>}, {pipeline_mode = #tpu.pipeline_mode<synchronous>, transform_indices = @transform_1, window_bounds = array<i64: 9, 4, 128>}, {transform_indices = @transform_2, window_bounds = array<i64: 1, 128, 128>}, {transform_indices = @transform_3, window_bounds = array<i64: 1, 1, 128>}, {transform_indices = @transform_4, window_bounds = array<i64: 1, 1, 128>}]} {
    %c8_i32 = arith.constant 8 : i32
    %0 = arith.muli %arg1, %c8_i32 : i32
    %c0_i32 = arith.constant 0 : i32
    %1 = arith.addi %0, %c0_i32 : i32
    %c0 = arith.constant 0 : index
    %2 = arith.index_cast %1 : i32 to index
    %c0_0 = arith.constant 0 : index
    %c0_1 = arith.constant 0 : index
    %3 = vector.load %arg2[%c0, %2, %c0_0, %c0_1] : memref<1x18x18x4xbf16, #tpu.memory_space<vmem>>, vector<1x8x16x4xbf16>
    %4 = vector.shape_cast %3 : vector<1x8x16x4xbf16> to vector<8x16x4xbf16>
    %5 = vector.shape_cast %4 : vector<8x16x4xbf16> to vector<128x4xbf16>
    %c0_2 = arith.constant 0 : index
    %c0_3 = arith.constant 0 : index
    %c0_4 = arith.constant 0 : index
    %6 = vector.load %arg3[%c0_2, %c0_3, %c0_4] : memref<9x4x128xbf16, #tpu.memory_space<vmem>>, vector<1x4x128xbf16>
    %7 = vector.shape_cast %6 : vector<1x4x128xbf16> to vector<4x128xbf16>
    %cst = arith.constant dense<0.000000e+00> : vector<128x128xf32>
    %8 = tpu.matmul %5, %7, %cst {dimension_numbers = #tpu.dot_dimension_numbers<[1], [0], [0], [1], [0, 0, 1, 1], [], []>} : vector<128x4xbf16>, vector<4x128xbf16>, vector<128x128xf32> -> vector<128x128xf32>
    %c0_i32_5 = arith.constant 0 : i32
    %9 = arith.addi %0, %c0_i32_5 : i32
    %c0_6 = arith.constant 0 : index
    %10 = arith.index_cast %9 : i32 to index
    %c1 = arith.constant 1 : index
    %c0_7 = arith.constant 0 : index
    %11 = vector.load %arg2[%c0_6, %10, %c1, %c0_7] : memref<1x18x18x4xbf16, #tpu.memory_space<vmem>>, vector<1x8x16x4xbf16>
    %12 = vector.shape_cast %11 : vector<1x8x16x4xbf16> to vector<8x16x4xbf16>
    %13 = vector.shape_cast %12 : vector<8x16x4xbf16> to vector<128x4xbf16>
    %c1_8 = arith.constant 1 : index
    %c0_9 = arith.constant 0 : index
    %c0_10 = arith.constant 0 : index
    %14 = vector.load %arg3[%c1_8, %c0_9, %c0_10] : memref<9x4x128xbf16, #tpu.memory_space<vmem>>, vector<1x4x128xbf16>
    %15 = vector.shape_cast %14 : vector<1x4x128xbf16> to vector<4x128xbf16>
    %cst_11 = arith.constant dense<0.000000e+00> : vector<128x128xf32>
    %16 = tpu.matmul %13, %15, %cst_11 {dimension_numbers = #tpu.dot_dimension_numbers<[1], [0], [0], [1], [0, 0, 1, 1], [], []>} : vector<128x4xbf16>, vector<4x128xbf16>, vector<128x128xf32> -> vector<128x128xf32>
    %17 = arith.addf %8, %16 : vector<128x128xf32>
    %c0_i32_12 = arith.constant 0 : i32
    %18 = arith.addi %0, %c0_i32_12 : i32
    %c0_13 = arith.constant 0 : index
    %19 = arith.index_cast %18 : i32 to index
    %c2 = arith.constant 2 : index
    %c0_14 = arith.constant 0 : index
    %20 = vector.load %arg2[%c0_13, %19, %c2, %c0_14] : memref<1x18x18x4xbf16, #tpu.memory_space<vmem>>, vector<1x8x16x4xbf16>
    %21 = vector.shape_cast %20 : vector<1x8x16x4xbf16> to vector<8x16x4xbf16>
    %22 = vector.shape_cast %21 : vector<8x16x4xbf16> to vector<128x4xbf16>
    %c2_15 = arith.constant 2 : index
    %c0_16 = arith.constant 0 : index
    %c0_17 = arith.constant 0 : index
    %23 = vector.load %arg3[%c2_15, %c0_16, %c0_17] : memref<9x4x128xbf16, #tpu.memory_space<vmem>>, vector<1x4x128xbf16>
    %24 = vector.shape_cast %23 : vector<1x4x128xbf16> to vector<4x128xbf16>
    %cst_18 = arith.constant dense<0.000000e+00> : vector<128x128xf32>
    %25 = tpu.matmul %22, %24, %cst_18 {dimension_numbers = #tpu.dot_dimension_numbers<[1], [0], [0], [1], [0, 0, 1, 1], [], []>} : vector<128x4xbf16>, vector<4x128xbf16>, vector<128x128xf32> -> vector<128x128xf32>
    %26 = arith.addf %17, %25 : vector<128x128xf32>
    %c0_19 = arith.constant 0 : index
    %c0_20 = arith.constant 0 : index
    %27 = vector.load %arg7[%c0_19, %c0_20] : memref<128x128xf32, #tpu.memory_space<vmem>>, vector<128x128xf32>
    tpu.vector_store %arg7[%c0_19, %c0_20], %26 {strides = array<i32>} : memref<128x128xf32, #tpu.memory_space<vmem>>, vector<128x128xf32>,
    %c1_i32 = arith.constant 1 : i32
    %28 = arith.addi %0, %c1_i32 : i32
    %c0_21 = arith.constant 0 : index
    %29 = arith.index_cast %28 : i32 to index
    %c0_22 = arith.constant 0 : index
    %c0_23 = arith.constant 0 : index
    %30 = vector.load %arg2[%c0_21, %29, %c0_22, %c0_23] : memref<1x18x18x4xbf16, #tpu.memory_space<vmem>>, vector<1x8x16x4xbf16>
    %31 = vector.shape_cast %30 : vector<1x8x16x4xbf16> to vector<8x16x4xbf16>
    %32 = vector.shape_cast %31 : vector<8x16x4xbf16> to vector<128x4xbf16>
    %c3 = arith.constant 3 : index
    %c0_24 = arith.constant 0 : index
    %c0_25 = arith.constant 0 : index
    %33 = vector.load %arg3[%c3, %c0_24, %c0_25] : memref<9x4x128xbf16, #tpu.memory_space<vmem>>, vector<1x4x128xbf16>
    %34 = vector.shape_cast %33 : vector<1x4x128xbf16> to vector<4x128xbf16>
    %cst_26 = arith.constant dense<0.000000e+00> : vector<128x128xf32>
    %35 = tpu.matmul %32, %34, %cst_26 {dimension_numbers = #tpu.dot_dimension_numbers<[1], [0], [0], [1], [0, 0, 1, 1], [], []>} : vector<128x4xbf16>, vector<4x128xbf16>, vector<128x128xf32> -> vector<128x128xf32>
    %c1_i32_27 = arith.constant 1 : i32
    %36 = arith.addi %0, %c1_i32_27 : i32
    %c0_28 = arith.constant 0 : index
    %37 = arith.index_cast %36 : i32 to index
    %c1_29 = arith.constant 1 : index
    %c0_30 = arith.constant 0 : index
    %38 = vector.load %arg2[%c0_28, %37, %c1_29, %c0_30] : memref<1x18x18x4xbf16, #tpu.memory_space<vmem>>, vector<1x8x16x4xbf16>
    %39 = vector.shape_cast %38 : vector<1x8x16x4xbf16> to vector<8x16x4xbf16>
    %40 = vector.shape_cast %39 : vector<8x16x4xbf16> to vector<128x4xbf16>
    %c4 = arith.constant 4 : index
    %c0_31 = arith.constant 0 : index
    %c0_32 = arith.constant 0 : index
    %41 = vector.load %arg3[%c4, %c0_31, %c0_32] : memref<9x4x128xbf16, #tpu.memory_space<vmem>>, vector<1x4x128xbf16>
    %42 = vector.shape_cast %41 : vector<1x4x128xbf16> to vector<4x128xbf16>
    %cst_33 = arith.constant dense<0.000000e+00> : vector<128x128xf32>
    %43 = tpu.matmul %40, %42, %cst_33 {dimension_numbers = #tpu.dot_dimension_numbers<[1], [0], [0], [1], [0, 0, 1, 1], [], []>} : vector<128x4xbf16>, vector<4x128xbf16>, vector<128x128xf32> -> vector<128x128xf32>
    %44 = arith.addf %35, %43 : vector<128x128xf32>
    %c1_i32_34 = arith.constant 1 : i32
    %45 = arith.addi %0, %c1_i32_34 : i32
    %c0_35 = arith.constant 0 : index
    %46 = arith.index_cast %45 : i32 to index
    %c2_36 = arith.constant 2 : index
    %c0_37 = arith.constant 0 : index
    %47 = vector.load %arg2[%c0_35, %46, %c2_36, %c0_37] : memref<1x18x18x4xbf16, #tpu.memory_space<vmem>>, vector<1x8x16x4xbf16>
    %48 = vector.shape_cast %47 : vector<1x8x16x4xbf16> to vector<8x16x4xbf16>
    %49 = vector.shape_cast %48 : vector<8x16x4xbf16> to vector<128x4xbf16>
    %c5 = arith.constant 5 : index
    %c0_38 = arith.constant 0 : index
    %c0_39 = arith.constant 0 : index
    %50 = vector.load %arg3[%c5, %c0_38, %c0_39] : memref<9x4x128xbf16, #tpu.memory_space<vmem>>, vector<1x4x128xbf16>
    %51 = vector.shape_cast %50 : vector<1x4x128xbf16> to vector<4x128xbf16>
    %cst_40 = arith.constant dense<0.000000e+00> : vector<128x128xf32>
    %52 = tpu.matmul %49, %51, %cst_40 {dimension_numbers = #tpu.dot_dimension_numbers<[1], [0], [0], [1], [0, 0, 1, 1], [], []>} : vector<128x4xbf16>, vector<4x128xbf16>, vector<128x128xf32> -> vector<128x128xf32>
    %53 = arith.addf %44, %52 : vector<128x128xf32>
    %c0_41 = arith.constant 0 : index
    %c0_42 = arith.constant 0 : index
    %54 = vector.load %arg7[%c0_41, %c0_42] : memref<128x128xf32, #tpu.memory_space<vmem>>, vector<128x128xf32>
    %55 = arith.addf %54, %53 : vector<128x128xf32>
    %c0_43 = arith.constant 0 : index
    %c0_44 = arith.constant 0 : index
    %56 = vector.load %arg7[%c0_43, %c0_44] : memref<128x128xf32, #tpu.memory_space<vmem>>, vector<128x128xf32>
    tpu.vector_store %arg7[%c0_43, %c0_44], %55 {strides = array<i32>} : memref<128x128xf32, #tpu.memory_space<vmem>>, vector<128x128xf32>,
    %c2_i32 = arith.constant 2 : i32
    %57 = arith.addi %0, %c2_i32 : i32
    %c0_45 = arith.constant 0 : index
    %58 = arith.index_cast %57 : i32 to index
    %c0_46 = arith.constant 0 : index
    %c0_47 = arith.constant 0 : index
    %59 = vector.load %arg2[%c0_45, %58, %c0_46, %c0_47] : memref<1x18x18x4xbf16, #tpu.memory_space<vmem>>, vector<1x8x16x4xbf16>
    %60 = vector.shape_cast %59 : vector<1x8x16x4xbf16> to vector<8x16x4xbf16>
    %61 = vector.shape_cast %60 : vector<8x16x4xbf16> to vector<128x4xbf16>
    %c6 = arith.constant 6 : index
    %c0_48 = arith.constant 0 : index
    %c0_49 = arith.constant 0 : index
    %62 = vector.load %arg3[%c6, %c0_48, %c0_49] : memref<9x4x128xbf16, #tpu.memory_space<vmem>>, vector<1x4x128xbf16>
    %63 = vector.shape_cast %62 : vector<1x4x128xbf16> to vector<4x128xbf16>
    %cst_50 = arith.constant dense<0.000000e+00> : vector<128x128xf32>
    %64 = tpu.matmul %61, %63, %cst_50 {dimension_numbers = #tpu.dot_dimension_numbers<[1], [0], [0], [1], [0, 0, 1, 1], [], []>} : vector<128x4xbf16>, vector<4x128xbf16>, vector<128x128xf32> -> vector<128x128xf32>
    %c2_i32_51 = arith.constant 2 : i32
    %65 = arith.addi %0, %c2_i32_51 : i32
    %c0_52 = arith.constant 0 : index
    %66 = arith.index_cast %65 : i32 to index
    %c1_53 = arith.constant 1 : index
    %c0_54 = arith.constant 0 : index
    %67 = vector.load %arg2[%c0_52, %66, %c1_53, %c0_54] : memref<1x18x18x4xbf16, #tpu.memory_space<vmem>>, vector<1x8x16x4xbf16>
    %68 = vector.shape_cast %67 : vector<1x8x16x4xbf16> to vector<8x16x4xbf16>
    %69 = vector.shape_cast %68 : vector<8x16x4xbf16> to vector<128x4xbf16>
    %c7 = arith.constant 7 : index
    %c0_55 = arith.constant 0 : index
    %c0_56 = arith.constant 0 : index
    %70 = vector.load %arg3[%c7, %c0_55, %c0_56] : memref<9x4x128xbf16, #tpu.memory_space<vmem>>, vector<1x4x128xbf16>
    %71 = vector.shape_cast %70 : vector<1x4x128xbf16> to vector<4x128xbf16>
    %cst_57 = arith.constant dense<0.000000e+00> : vector<128x128xf32>
    %72 = tpu.matmul %69, %71, %cst_57 {dimension_numbers = #tpu.dot_dimension_numbers<[1], [0], [0], [1], [0, 0, 1, 1], [], []>} : vector<128x4xbf16>, vector<4x128xbf16>, vector<128x128xf32> -> vector<128x128xf32>
    %73 = arith.addf %64, %72 : vector<128x128xf32>
    %c2_i32_58 = arith.constant 2 : i32
    %74 = arith.addi %0, %c2_i32_58 : i32
    %c0_59 = arith.constant 0 : index
    %75 = arith.index_cast %74 : i32 to index
    %c2_60 = arith.constant 2 : index
    %c0_61 = arith.constant 0 : index
    %76 = vector.load %arg2[%c0_59, %75, %c2_60, %c0_61] : memref<1x18x18x4xbf16, #tpu.memory_space<vmem>>, vector<1x8x16x4xbf16>
    %77 = vector.shape_cast %76 : vector<1x8x16x4xbf16> to vector<8x16x4xbf16>
    %78 = vector.shape_cast %77 : vector<8x16x4xbf16> to vector<128x4xbf16>
    %c8 = arith.constant 8 : index
    %c0_62 = arith.constant 0 : index
    %c0_63 = arith.constant 0 : index
    %79 = vector.load %arg3[%c8, %c0_62, %c0_63] : memref<9x4x128xbf16, #tpu.memory_space<vmem>>, vector<1x4x128xbf16>
    %80 = vector.shape_cast %79 : vector<1x4x128xbf16> to vector<4x128xbf16>
    %cst_64 = arith.constant dense<0.000000e+00> : vector<128x128xf32>
    %81 = tpu.matmul %78, %80, %cst_64 {dimension_numbers = #tpu.dot_dimension_numbers<[1], [0], [0], [1], [0, 0, 1, 1], [], []>} : vector<128x4xbf16>, vector<4x128xbf16>, vector<128x128xf32> -> vector<128x128xf32>
    %82 = arith.addf %73, %81 : vector<128x128xf32>
    %c0_65 = arith.constant 0 : index
    %c0_66 = arith.constant 0 : index
    %83 = vector.load %arg7[%c0_65, %c0_66] : memref<128x128xf32, #tpu.memory_space<vmem>>, vector<128x128xf32>
    %84 = arith.addf %83, %82 : vector<128x128xf32>
    %c0_67 = arith.constant 0 : index
    %c0_68 = arith.constant 0 : index
    %85 = vector.load %arg7[%c0_67, %c0_68] : memref<128x128xf32, #tpu.memory_space<vmem>>, vector<128x128xf32>
    tpu.vector_store %arg7[%c0_67, %c0_68], %84 {strides = array<i32>} : memref<128x128xf32, #tpu.memory_space<vmem>>, vector<128x128xf32>,
    %c0_69 = arith.constant 0 : index
    %c0_70 = arith.constant 0 : index
    %86 = vector.load %arg7[%c0_69, %c0_70] : memref<128x128xf32, #tpu.memory_space<vmem>>, vector<128x128xf32>
    %87 = arith.truncf %86 : vector<128x128xf32> to vector<128x128xbf16>
    %c0_71 = arith.constant 0 : index
    %c0_72 = arith.constant 0 : index
    %c0_73 = arith.constant 0 : index
    %88 = vector.load %arg4[%c0_71, %c0_72, %c0_73] : memref<1x128x128xbf16, #tpu.memory_space<vmem>>, vector<1x128x128xbf16>
    %89 = vector.shape_cast %88 : vector<1x128x128xbf16> to vector<128x128xbf16>
    %90 = vector.shape_cast %87 : vector<128x128xbf16> to vector<1x128x128xbf16>
    tpu.vector_store %arg4[%c0_71, %c0_72, %c0_73], %90 {strides = array<i32>} : memref<1x128x128xbf16, #tpu.memory_space<vmem>>, vector<1x128x128xbf16>,
    %cst_74 = arith.constant dense<0.000000e+00> : vector<128xf32>
    %91 = vector.multi_reduction <add>, %86, %cst_74 [0] : vector<128x128xf32> to vector<128xf32>
    %92 = vector.shape_cast %91 : vector<128xf32> to vector<1x128xf32>
    %93 = arith.mulf %86, %86 : vector<128x128xf32>
    %cst_75 = arith.constant dense<0.000000e+00> : vector<128xf32>
    %94 = vector.multi_reduction <add>, %93, %cst_75 [0] : vector<128x128xf32> to vector<128xf32>
    %95 = vector.shape_cast %94 : vector<128xf32> to vector<1x128xf32>
    %c0_i32_76 = arith.constant 0 : i32
    %96 = arith.cmpi eq, %arg1, %c0_i32_76 : i32
    %97 = arith.extui %96 : i1 to i32
    %c0_i32_77 = arith.constant 0 : i32
    %98 = arith.cmpi ne, %97, %c0_i32_77 : i32
    scf.if %98 {
      %c0_80 = arith.constant 0 : index
      %c0_81 = arith.constant 0 : index
      %c0_82 = arith.constant 0 : index
      %102 = vector.load %arg5[%c0_80, %c0_81, %c0_82] : memref<1x1x128xf32, #tpu.memory_space<vmem>>, vector<1x1x128xf32>
      %103 = vector.shape_cast %102 : vector<1x1x128xf32> to vector<1x128xf32>
      %104 = vector.shape_cast %92 : vector<1x128xf32> to vector<1x1x128xf32>
      tpu.vector_store %arg5[%c0_80, %c0_81, %c0_82], %104 {strides = array<i32>} : memref<1x1x128xf32, #tpu.memory_space<vmem>>, vector<1x1x128xf32>,
      %c0_83 = arith.constant 0 : index
      %c0_84 = arith.constant 0 : index
      %c0_85 = arith.constant 0 : index
      %105 = vector.load %arg6[%c0_83, %c0_84, %c0_85] : memref<1x1x128xf32, #tpu.memory_space<vmem>>, vector<1x1x128xf32>
      %106 = vector.shape_cast %105 : vector<1x1x128xf32> to vector<1x128xf32>
      %107 = vector.shape_cast %95 : vector<1x128xf32> to vector<1x1x128xf32>
      tpu.vector_store %arg6[%c0_83, %c0_84, %c0_85], %107 {strides = array<i32>} : memref<1x1x128xf32, #tpu.memory_space<vmem>>, vector<1x1x128xf32>,
    } else {
    }
    %c0_i32_78 = arith.constant 0 : i32
    %99 = arith.cmpi sgt, %arg1, %c0_i32_78 : i32
    %100 = arith.extui %99 : i1 to i32
    %c0_i32_79 = arith.constant 0 : i32
    %101 = arith.cmpi ne, %100, %c0_i32_79 : i32
    scf.if %101 {
      %c0_80 = arith.constant 0 : index
      %c0_81 = arith.constant 0 : index
      %c0_82 = arith.constant 0 : index
      %102 = vector.load %arg5[%c0_80, %c0_81, %c0_82] : memref<1x1x128xf32, #tpu.memory_space<vmem>>, vector<1x1x128xf32>
      %103 = vector.shape_cast %102 : vector<1x1x128xf32> to vector<1x128xf32>
      %104 = arith.addf %103, %92 : vector<1x128xf32>
      %c0_83 = arith.constant 0 : index
      %c0_84 = arith.constant 0 : index
      %c0_85 = arith.constant 0 : index
      %105 = vector.load %arg5[%c0_83, %c0_84, %c0_85] : memref<1x1x128xf32, #tpu.memory_space<vmem>>, vector<1x1x128xf32>
      %106 = vector.shape_cast %105 : vector<1x1x128xf32> to vector<1x128xf32>
      %107 = vector.shape_cast %104 : vector<1x128xf32> to vector<1x1x128xf32>
      tpu.vector_store %arg5[%c0_83, %c0_84, %c0_85], %107 {strides = array<i32>} : memref<1x1x128xf32, #tpu.memory_space<vmem>>, vector<1x1x128xf32>,
      %c0_86 = arith.constant 0 : index
      %c0_87 = arith.constant 0 : index
      %c0_88 = arith.constant 0 : index
      %108 = vector.load %arg6[%c0_86, %c0_87, %c0_88] : memref<1x1x128xf32, #tpu.memory_space<vmem>>, vector<1x1x128xf32>
      %109 = vector.shape_cast %108 : vector<1x1x128xf32> to vector<1x128xf32>
      %110 = arith.addf %109, %95 : vector<1x128xf32>
      %c0_89 = arith.constant 0 : index
      %c0_90 = arith.constant 0 : index
      %c0_91 = arith.constant 0 : index
      %111 = vector.load %arg6[%c0_89, %c0_90, %c0_91] : memref<1x1x128xf32, #tpu.memory_space<vmem>>, vector<1x1x128xf32>
      %112 = vector.shape_cast %111 : vector<1x1x128xf32> to vector<1x128xf32>
      %113 = vector.shape_cast %110 : vector<1x128xf32> to vector<1x1x128xf32>
      tpu.vector_store %arg6[%c0_89, %c0_90, %c0_91], %113 {strides = array<i32>} : memref<1x1x128xf32, #tpu.memory_space<vmem>>, vector<1x1x128xf32>,
    } else {
    }
    return
  }
  func.func @transform_0(%arg0: i32, %arg1: i32) -> (i32, i32, i32, i32) {
    %c0_i32 = arith.constant 0 : i32
    %c0_i32_0 = arith.constant 0 : i32
    %c0_i32_1 = arith.constant 0 : i32
    %c0_i32_2 = arith.constant 0 : i32
    return %arg0, %c0_i32, %c0_i32_0, %c0_i32_1 : i32, i32, i32, i32
  }
  func.func @transform_1(%arg0: i32, %arg1: i32) -> (i32, i32, i32) {
    %c0_i32 = arith.constant 0 : i32
    %c0_i32_0 = arith.constant 0 : i32
    %c0_i32_1 = arith.constant 0 : i32
    %c0_i32_2 = arith.constant 0 : i32
    return %c0_i32, %c0_i32_0, %c0_i32_1 : i32, i32, i32
  }
  func.func @transform_2(%arg0: i32, %arg1: i32) -> (i32, i32, i32) {
    %c0_i32 = arith.constant 0 : i32
    %c0_i32_0 = arith.constant 0 : i32
    return %arg0, %arg1, %c0_i32 : i32, i32, i32
  }
  func.func @transform_3(%arg0: i32, %arg1: i32) -> (i32, i32, i32) {
    %c0_i32 = arith.constant 0 : i32
    %c0_i32_0 = arith.constant 0 : i32
    %c0_i32_1 = arith.constant 0 : i32
    return %arg0, %c0_i32, %c0_i32_0 : i32, i32, i32
  }
  func.func @transform_4(%arg0: i32, %arg1: i32) -> (i32, i32, i32) {
    %c0_i32 = arith.constant 0 : i32
    %c0_i32_0 = arith.constant 0 : i32
    %c0_i32_1 = arith.constant 0 : i32
    return %arg0, %c0_i32, %c0_i32_0 : i32, i32, i32
  }
}

module attributes {stable_mosaic.version = 11 : i64} {
  func.func @_bn_lrelu_nchw_kernel(%arg0: i32, %arg1: i32, %arg2: memref<1x256x128xbf16, #tpu.memory_space<vmem>>, %arg3: memref<8x1xf32, #tpu.memory_space<vmem>>, %arg4: memref<8x1xf32, #tpu.memory_space<vmem>>, %arg5: memref<1x8x256xf32, #tpu.memory_space<vmem>>) attributes {dimension_semantics = [#tpu.dimension_semantics<parallel>, #tpu.dimension_semantics<parallel>], iteration_bounds = array<i64: 2, 1>, scalar_prefetch = 0 : i64, scratch_operands = 0 : i64, tpu.core_type = #tpu.core_type<tc>, window_params = [{transform_indices = @transform_0, window_bounds = array<i64: 1, 256, 128>}, {pipeline_mode = #tpu.pipeline_mode<synchronous>, transform_indices = @transform_1, window_bounds = array<i64: 8, 1>}, {pipeline_mode = #tpu.pipeline_mode<synchronous>, transform_indices = @transform_2, window_bounds = array<i64: 8, 1>}, {transform_indices = @transform_3, window_bounds = array<i64: 1, 8, 256>}]} {
    %c0 = arith.constant 0 : index
    %c0_0 = arith.constant 0 : index
    %c0_1 = arith.constant 0 : index
    %0 = vector.load %arg2[%c0, %c0_0, %c0_1] : memref<1x256x128xbf16, #tpu.memory_space<vmem>>, vector<1x256x128xbf16>
    %1 = vector.shape_cast %0 : vector<1x256x128xbf16> to vector<256x128xbf16>
    %2 = tpu.transpose %1, [1, 0] : vector<256x128xbf16> -> vector<128x256xbf16>
    %3 = vector.extract_strided_slice %2 {offsets = [0, 0], sizes = [8, 256], strides = [1, 1]} : vector<128x256xbf16> to vector<8x256xbf16>
    %4 = arith.extf %3 : vector<8x256xbf16> to vector<8x256xf32>
    %c0_2 = arith.constant 0 : index
    %c0_3 = arith.constant 0 : index
    %5 = vector.load %arg3[%c0_2, %c0_3] : memref<8x1xf32, #tpu.memory_space<vmem>>, vector<8x1xf32>
    %6 = vector.broadcast %5 : vector<8x1xf32> to vector<8x256xf32>
    %7 = arith.mulf %4, %6 : vector<8x256xf32>
    %c0_4 = arith.constant 0 : index
    %c0_5 = arith.constant 0 : index
    %8 = vector.load %arg4[%c0_4, %c0_5] : memref<8x1xf32, #tpu.memory_space<vmem>>, vector<8x1xf32>
    %9 = vector.broadcast %8 : vector<8x1xf32> to vector<8x256xf32>
    %10 = arith.addf %7, %9 : vector<8x256xf32>
    %cst = arith.constant 0.000000e+00 : f32
    %11 = vector.broadcast %cst : f32 to vector<8x256xf32>
    %12 = arith.cmpf ogt, %10, %11 : vector<8x256xf32>
    %cst_6 = arith.constant 1.000000e-01 : f32
    %13 = vector.broadcast %cst_6 : f32 to vector<8x256xf32>
    %14 = arith.mulf %13, %10 : vector<8x256xf32>
    %15 = arith.select %12, %10, %14 : vector<8x256xi1>, vector<8x256xf32>
    %c0_7 = arith.constant 0 : index
    %c0_8 = arith.constant 0 : index
    %c0_9 = arith.constant 0 : index
    %16 = vector.load %arg5[%c0_7, %c0_8, %c0_9] : memref<1x8x256xf32, #tpu.memory_space<vmem>>, vector<1x8x256xf32>
    %17 = vector.shape_cast %16 : vector<1x8x256xf32> to vector<8x256xf32>
    %18 = vector.shape_cast %15 : vector<8x256xf32> to vector<1x8x256xf32>
    tpu.vector_store %arg5[%c0_7, %c0_8, %c0_9], %18 {strides = array<i32>} : memref<1x8x256xf32, #tpu.memory_space<vmem>>, vector<1x8x256xf32>,
    return
  }
  func.func @transform_0(%arg0: i32, %arg1: i32) -> (i32, i32, i32) {
    %c0_i32 = arith.constant 0 : i32
    %c0_i32_0 = arith.constant 0 : i32
    return %arg0, %arg1, %c0_i32 : i32, i32, i32
  }
  func.func @transform_1(%arg0: i32, %arg1: i32) -> (i32, i32) {
    %c0_i32 = arith.constant 0 : i32
    %c0_i32_0 = arith.constant 0 : i32
    %c0_i32_1 = arith.constant 0 : i32
    return %c0_i32, %c0_i32_0 : i32, i32
  }
  func.func @transform_2(%arg0: i32, %arg1: i32) -> (i32, i32) {
    %c0_i32 = arith.constant 0 : i32
    %c0_i32_0 = arith.constant 0 : i32
    %c0_i32_1 = arith.constant 0 : i32
    return %c0_i32, %c0_i32_0 : i32, i32
  }
  func.func @transform_3(%arg0: i32, %arg1: i32) -> (i32, i32, i32) {
    %c0_i32 = arith.constant 0 : i32
    %c0_i32_0 = arith.constant 0 : i32
    return %arg0, %c0_i32, %arg1 : i32, i32, i32
  }
}

</mosaic_0001>

<llo_original>
// kernel: cnn_block_forward.3
$region0: #{cnn_block_forward.3}
  #allocation0 [shape = 'u32[]', space=smem, size = 0x4, offset = 0x4, fixed_abs, tag = 'smem constant byte address 0x4 - core index']
  #allocation1 [shape = 'u32[144,128]{1,0:T(1,128)}', space=vmem, size = 0x12000, scoped, tag = 'internal scratch']
  %s0 = inlined_call_operand.vmem [shape: bf16[2,256,128], index: 0, kind: input, shape index: {}]
  %s1 = inlined_call_operand.vmem [shape: f32[8,1], index: 1, kind: input, shape index: {}]
  %s2 = inlined_call_operand.vmem [shape: f32[8,1], index: 2, kind: input, shape index: {}]
  %s3 = inlined_call_operand.vmem [shape: f32[2,8,256], index: 3, kind: output, shape index: {}]
  %s4 = sld [smem:[#allocation0]]
  $region45: #{cnn_block_forward.3} parent=0
    _
  %s6 = ssub.s32 1, %s4
  %s7 = scalar_select 0, %s6, %s4
  loop: start=0, step=1, limit=4
  $region2: #{cnn_block_forward.3} parent=0 // loop_pre_header
    _
  $region3: #{cnn_block_forward.3} parent=0 // loop_header
    %s9 = sphi 0, %s13
    %p10 = scmp.ge.s32.totalorder %s9, 4
    %s16 = sphi 0, %s28
    %s17 = sphi 0, %s24
    %s18 = sphi 0, %s16
    %s19 = sphi 0, %s17
    %s20 = sphi 0, %s18
    %s21 = sphi 0, %s19
    %s33 = sphi 0, %s35
    %s36 = sphi 0, %s33
    %s37 = sphi 0, %s36
    %s53 = sphi 0, %s37
    %s57 = sphi 0, %s57
    %s59 = sphi 0, %s57
    %s60 = sphi 0, %s59
    %s74 = sphi 0, %s60
    %s78 = sphi 0, %s78
    %s80 = sphi 0, %s78
    %s81 = sphi 0, %s80
    %s95 = sphi 0, %s81
    %s103 = sphi 0, %s105
    %s106 = sphi 0, %s103
    %s107 = sphi 0, %s106
    %s123 = sphi 0, %s107
  $region4: #{cnn_block_forward.3} parent=0 // loop_header_branch
    %12 = sbr.rel (%p10) target = $region8
  $region5: #{cnn_block_forward.3} parent=0 // loop_body
    %s14 = ssub.s32 %s9, 1
    %s15 = ssub.s32 %s9, 2
    %s22 = sadd.s32 1, %s17
    %p23 = scmp.ge.s32.totalorder %s22, 1
    %s24 = scalar_select %p23, 0, %s22
    %s25 = sadd.s32 1, %s16
    %s26 = scalar_select %p23, %s25, %s16
    %p27 = scmp.ge.s32.totalorder %s26, 2
    %s28 = scalar_select %p27, 0, %s26
    %s29 = ssub.s32 %s16, %s28
    %s30 = ssub.s32 %s17, %s24
    %s31 = sor.u32 %s29, %s30
    %p32 = scmp.eq.s32.totalorder %s31, 0
    %s34 = sadd.s32 %s33, 1
    %s35 = scalar_select %p32, %s33, %s34
    %p38 = pneg %p32
    %p39 = scmp.eq.s32.totalorder %s9, 1
    %p40 = por %p38, %p39
    %p41 = scmp.ne.s32.totalorder %s33, %s36
    %p42 = scmp.eq.s32.totalorder %s9, 0
    %p43 = por %p41, %p42
    %p44 = scmp.ne.s32.totalorder %s33, %s36
    %p45 = scmp.eq.s32.totalorder %s14, 1
    %p46 = por %p44, %p45
    %p47 = scmp.ne.s32.totalorder %s36, %s37
    %p48 = scmp.eq.s32.totalorder %s14, 0
    %p49 = por %p47, %p48
    %p50 = scmp.ne.s32.totalorder %s36, %s37
    %p51 = scmp.eq.s32.totalorder %s15, 1
    %p52 = por %p50, %p51
    %p54 = scmp.ne.s32.totalorder %s37, %s53
    %p55 = scmp.eq.s32.totalorder %s15, 0
    %p56 = por %p54, %p55
    %s58 = sadd.s32 %s57, 1
    %p61 = scmp.eq.s32.totalorder %s9, 1
    %p62 = scmp.ne.s32.totalorder %s57, %s59
    %p63 = scmp.eq.s32.totalorder %s9, 0
    %p64 = por %p62, %p63
    %p65 = scmp.ne.s32.totalorder %s57, %s59
    %p66 = scmp.eq.s32.totalorder %s14, 1
    %p67 = por %p65, %p66
    %p68 = scmp.ne.s32.totalorder %s59, %s60
    %p69 = scmp.eq.s32.totalorder %s14, 0
    %p70 = por %p68, %p69
    %p71 = scmp.ne.s32.totalorder %s59, %s60
    %p72 = scmp.eq.s32.totalorder %s15, 1
    %p73 = por %p71, %p72
    %p75 = scmp.ne.s32.totalorder %s60, %s74
    %p76 = scmp.eq.s32.totalorder %s15, 0
    %p77 = por %p75, %p76
    %s79 = sadd.s32 %s78, 1
    %p82 = scmp.eq.s32.totalorder %s9, 1
    %p83 = scmp.ne.s32.totalorder %s78, %s80
    %p84 = scmp.eq.s32.totalorder %s9, 0
    %p85 = por %p83, %p84
    %p86 = scmp.ne.s32.totalorder %s78, %s80
    %p87 = scmp.eq.s32.totalorder %s14, 1
    %p88 = por %p86, %p87
    %p89 = scmp.ne.s32.totalorder %s80, %s81
    %p90 = scmp.eq.s32.totalorder %s14, 0
    %p91 = por %p89, %p90
    %p92 = scmp.ne.s32.totalorder %s80, %s81
    %p93 = scmp.eq.s32.totalorder %s15, 1
    %p94 = por %p92, %p93
    %p96 = scmp.ne.s32.totalorder %s81, %s95
    %p97 = scmp.eq.s32.totalorder %s15, 0
    %p98 = por %p96, %p97
    %s99 = ssub.s32 %s16, %s28
    %s100 = ssub.s32 %s17, %s24
    %s101 = sor.u32 %s99, %s100
    %p102 = scmp.eq.s32.totalorder %s101, 0
    %s104 = sadd.s32 %s103, 1
    %s105 = scalar_select %p102, %s103, %s104
    %p108 = pneg %p102
    %p109 = scmp.eq.s32.totalorder %s9, 1
    %p110 = por %p108, %p109
    %p111 = scmp.ne.s32.totalorder %s103, %s106
    %p112 = scmp.eq.s32.totalorder %s9, 0
    %p113 = por %p111, %p112
    %p114 = scmp.ne.s32.totalorder %s103, %s106
    %p115 = scmp.eq.s32.totalorder %s14, 1
    %p116 = por %p114, %p115
    %p117 = scmp.ne.s32.totalorder %s106, %s107
    %p118 = scmp.eq.s32.totalorder %s14, 0
    %p119 = por %p117, %p118
    %p120 = scmp.ne.s32.totalorder %s106, %s107
    %p121 = scmp.eq.s32.totalorder %s15, 1
    %p122 = por %p120, %p121
    %p124 = scmp.ne.s32.totalorder %s107, %s123
    %p125 = scmp.eq.s32.totalorder %s15, 0
    %p126 = por %p124, %p125
    %p127 = scmp.le.s32.totalorder 1, %s9
    %p128 = scmp.lt.s32.totalorder %s9, 3
    %p129 = pnand %p127, %p128
    %p130 = pneg %p129
    // Predicated region
    $region9: #{cnn_block_forward.3} parent=5 // pred_check
      _
    $region10: #{cnn_block_forward.3} parent=5 // pred_check_branch
      %132 = sbr.rel (%p129) target = $region12
    $region11: #{cnn_block_forward.3} parent=5 // pred_region
      %s133 = ssub.s32 %s9, 1
      // Predicated region
      $region13: #{cnn_block_forward.3} parent=11 // pred_check
        %p134 = pneg %p70
      $region14: #{cnn_block_forward.3} parent=11 // pred_check_branch
        %136 = sbr.rel (%p134) target = $region16
      $region15: #{cnn_block_forward.3} parent=11 // pred_region
        _
      $region16: #{cnn_block_forward.3} parent=11 // pred_fallthru
        _
      // Predicated region
      $region17: #{cnn_block_forward.3} parent=11 // pred_check
        %p137 = pneg %p91
      $region18: #{cnn_block_forward.3} parent=11 // pred_check_branch
        %139 = sbr.rel (%p137) target = $region20
      $region19: #{cnn_block_forward.3} parent=11 // pred_region
        _
      $region20: #{cnn_block_forward.3} parent=11 // pred_fallthru
        _
    $region12: #{cnn_block_forward.3} parent=5 // pred_fallthru
      _
    %p140 = scmp.lt.s32.totalorder %s9, 2
    // Predicated region
    $region21: #{cnn_block_forward.3} parent=5 // pred_check
      %p141 = pneg %p140
    $region22: #{cnn_block_forward.3} parent=5 // pred_check_branch
      %143 = sbr.rel (%p141) target = $region24
    $region23: #{cnn_block_forward.3} parent=5 // pred_region
      // Predicated region
      $region25: #{cnn_block_forward.3} parent=23 // pred_check
        %p144 = pneg %p43
      $region26: #{cnn_block_forward.3} parent=23 // pred_check_branch
        %146 = sbr.rel (%p144) target = $region28
      $region27: #{cnn_block_forward.3} parent=23 // pred_region
        %s147 = smul.u32 32, %s17
        %p148 = scmp.lt.s32.totalorder %s16, 1
        %s149 = scalar_select %p148, %s16, 1
        %p150 = scmp.lt.s32.totalorder %s147, 31
        %s151 = scalar_select %p150, %s147, 31
        %s152 = smul.addr %s149, 32
        %s153 = sadd.s32 %s151, %s152
        %s154 = smul.addr %s153, 4
        %s155 = scalar_lea.vmem %s0, %s154
        %s156 = smul.u32 32, %s17
      $region28: #{cnn_block_forward.3} parent=23 // pred_fallthru
        _
    $region24: #{cnn_block_forward.3} parent=5 // pred_fallthru
      _
    %p157 = scmp.le.s32.totalorder 1, %s9
    %p158 = scmp.lt.s32.totalorder %s9, 3
    %p159 = pnand %p157, %p158
    %p160 = pneg %p159
    // Predicated region
    $region29: #{cnn_block_forward.3} parent=5 // pred_check
      _
    $region30: #{cnn_block_forward.3} parent=5 // pred_check_branch
      %162 = sbr.rel (%p159) target = $region32
    $region31: #{cnn_block_forward.3} parent=5 // pred_region
      %s163 = ssub.s32 %s9, 1
      %s164 = smul.u32 32, %s19
      %p165 = scmp.lt.s32.totalorder %s18, 1
      %s166 = scalar_select %p165, %s18, 1
      %p167 = scmp.lt.s32.totalorder %s164, 31
      %s168 = scalar_select %p167, %s164, 31
      %s169 = smul.addr %s166, 32
      %s170 = sadd.s32 %s168, %s169
      %s171 = smul.addr %s170, 4
      %s172 = scalar_lea.vmem %s0, %s171
      %p173 = pneg %p49
      %p174 = pneg %p46
      %p175 = pneg %p70
      %p176 = pneg %p67
      %p177 = pneg %p91
      %p178 = pneg %p88
      %p179 = pneg %p119
      %p180 = pneg %p116
      %s181 = smul.u32 2, %s19
      %p182 = scmp.lt.s32.totalorder %s18, 1
      %s183 = scalar_select %p182, %s18, 1
      %p184 = scmp.lt.s32.totalorder %s181, 1
      %s185 = scalar_select %p184, %s181, 1
      %s186 = smul.addr %s183, 2
      %s187 = sadd.s32 %s185, %s186
      %s188 = smul.addr %s187, 8
      %s189 = scalar_lea.vmem %s3, %s188
      %s190 = smul.u32 32, %s19
      %p191 = scmp.lt.s32.totalorder %s18, 1
      %s192 = scalar_select %p191, %s18, 1
      %p193 = scmp.lt.s32.totalorder %s190, 31
      %s194 = scalar_select %p193, %s190, 31
      %s195 = smul.addr %s192, 32
      %s196 = sadd.s32 %s194, %s195
      %s197 = smul.addr %s196, 4
      %s198 = scalar_lea.vmem %s0, %s197
      %s199 = smul.u32 32, %s19
      %s200 = smul.u32 2, %s19
      %p201 = scmp.lt.s32.totalorder %s18, 1
      %s202 = scalar_select %p201, %s18, 1
      %p203 = scmp.lt.s32.totalorder %s200, 1
      %s204 = scalar_select %p203, %s200, 1
      %s205 = smul.addr %s202, 2
      %s206 = sadd.s32 %s204, %s205
      %s207 = smul.addr %s206, 8
      %s208 = scalar_lea.vmem %s3, %s207
      %s209 = smul.u32 2, %s19
      %v210 = vld [vmem:[%s198] sm:$0xf]
      %v211 = vld [vmem:[%s198 + $0x4] sm:$0xf]
      %v212 = vld [vmem:[%s198 + $0x8] sm:$0xf]
      %v213 = vld [vmem:[%s198 + $0xc] sm:$0xf]
      %v214 = vld [vmem:[%s198 + $0x10] sm:$0xf]
      %v215 = vld [vmem:[%s198 + $0x14] sm:$0xf]
      %v216 = vld [vmem:[%s198 + $0x18] sm:$0xf]
      %v217 = vld [vmem:[%s198 + $0x1c] sm:$0xf]
      %v218 = vld [vmem:[%s198 + $0x20] sm:$0xf]
      %v219 = vld [vmem:[%s198 + $0x24] sm:$0xf]
      %v220 = vld [vmem:[%s198 + $0x28] sm:$0xf]
      %v221 = vld [vmem:[%s198 + $0x2c] sm:$0xf]
      %v222 = vld [vmem:[%s198 + $0x30] sm:$0xf]
      %v223 = vld [vmem:[%s198 + $0x34] sm:$0xf]
      %v224 = vld [vmem:[%s198 + $0x38] sm:$0xf]
      %v225 = vld [vmem:[%s198 + $0x3c] sm:$0xf]
      %v226 = vld [vmem:[%s198 + $0x40] sm:$0xf]
      %v227 = vld [vmem:[%s198 + $0x44] sm:$0xf]
      %v228 = vld [vmem:[%s198 + $0x48] sm:$0xf]
      %v229 = vld [vmem:[%s198 + $0x4c] sm:$0xf]
      %v230 = vld [vmem:[%s198 + $0x50] sm:$0xf]
      %v231 = vld [vmem:[%s198 + $0x54] sm:$0xf]
      %v232 = vld [vmem:[%s198 + $0x58] sm:$0xf]
      %v233 = vld [vmem:[%s198 + $0x5c] sm:$0xf]
      %v234 = vld [vmem:[%s198 + $0x60] sm:$0xf]
      %v235 = vld [vmem:[%s198 + $0x64] sm:$0xf]
      %v236 = vld [vmem:[%s198 + $0x68] sm:$0xf]
      %v237 = vld [vmem:[%s198 + $0x6c] sm:$0xf]
      %v238 = vld [vmem:[%s198 + $0x70] sm:$0xf]
      %v239 = vld [vmem:[%s198 + $0x74] sm:$0xf]
      %v240 = vld [vmem:[%s198 + $0x78] sm:$0xf]
      %v241 = vld [vmem:[%s198 + $0x7c] sm:$0xf]
      %v274 = vunpack.c.l.b16 %v210
      %v275 = vunpack.c.l.b16 %v211
      %v276 = vunpack.c.l.b16 %v212
      %v277 = vunpack.c.l.b16 %v213
      %v278 = vunpack.c.l.b16 %v214
      %v279 = vunpack.c.l.b16 %v215
      %v280 = vunpack.c.l.b16 %v216
      %v281 = vunpack.c.l.b16 %v217
      %v282 = vunpack.c.l.b16 %v218
      %v283 = vunpack.c.l.b16 %v219
      %v284 = vunpack.c.l.b16 %v220
      %v285 = vunpack.c.l.b16 %v221
      %v286 = vunpack.c.l.b16 %v222
      %v287 = vunpack.c.l.b16 %v223
      %v288 = vunpack.c.l.b16 %v224
      %v289 = vunpack.c.l.b16 %v225
      %v290 = vunpack.c.l.b16 %v226
      %v291 = vunpack.c.l.b16 %v227
      %v292 = vunpack.c.l.b16 %v228
      %v293 = vunpack.c.l.b16 %v229
      %v294 = vunpack.c.l.b16 %v230
      %v295 = vunpack.c.l.b16 %v231
      %v296 = vunpack.c.l.b16 %v232
      %v297 = vunpack.c.l.b16 %v233
      %v298 = vunpack.c.l.b16 %v234
      %v299 = vunpack.c.l.b16 %v235
      %v300 = vunpack.c.l.b16 %v236
      %v301 = vunpack.c.l.b16 %v237
      %v302 = vunpack.c.l.b16 %v238
      %v303 = vunpack.c.l.b16 %v239
      %v304 = vunpack.c.l.b16 %v240
      %v305 = vunpack.c.l.b16 %v241
      %v306 = vpack.c.b16 %v275, %v274
      %v307 = vpack.c.b16 %v277, %v276
      %v308 = vpack.c.b16 %v279, %v278
      %v309 = vpack.c.b16 %v281, %v280
      %v310 = vpack.c.b16 %v283, %v282
      %v311 = vpack.c.b16 %v285, %v284
      %v312 = vpack.c.b16 %v287, %v286
      %v313 = vpack.c.b16 %v289, %v288
      %v314 = vpack.c.b16 %v291, %v290
      %v315 = vpack.c.b16 %v293, %v292
      %v316 = vpack.c.b16 %v295, %v294
      %v317 = vpack.c.b16 %v297, %v296
      %v318 = vpack.c.b16 %v299, %v298
      %v319 = vpack.c.b16 %v301, %v300
      %v320 = vpack.c.b16 %v303, %v302
      %v321 = vpack.c.b16 %v305, %v304
      %338 = vxpose.xlu0.c.b16.start [1/8] %v306, 128
      %339 = vxpose.xlu0.c.b16.cont [2/8] %v307, 128
      %340 = vxpose.xlu0.c.b16.cont [3/8] %v308, 128
      %341 = vxpose.xlu0.c.b16.cont [4/8] %v309, 128
      %342 = vxpose.xlu0.c.b16.cont [5/8] %v310, 128
      %343 = vxpose.xlu0.c.b16.cont [6/8] %v311, 128
      %344 = vxpose.xlu0.c.b16.cont [7/8] %v312, 128
      %345 = vxpose.xlu0.c.b16.end [8/8] %v313, 128
      %v346 = vpop.trf.xlu0
      %v347 = vpop.trf.xlu0
      %v348 = vpop.trf.xlu0
      %v349 = vpop.trf.xlu0
      %v350 = vpop.trf.xlu0
      %v351 = vpop.trf.xlu0
      %v352 = vpop.trf.xlu0
      %v353 = vpop.trf.xlu0
      %354 = vxpose.xlu0.c.b16.start [1/8] %v314, 128
      %355 = vxpose.xlu0.c.b16.cont [2/8] %v315, 128
      %356 = vxpose.xlu0.c.b16.cont [3/8] %v316, 128
      %357 = vxpose.xlu0.c.b16.cont [4/8] %v317, 128
      %358 = vxpose.xlu0.c.b16.cont [5/8] %v318, 128
      %359 = vxpose.xlu0.c.b16.cont [6/8] %v319, 128
      %360 = vxpose.xlu0.c.b16.cont [7/8] %v320, 128
      %361 = vxpose.xlu0.c.b16.end [8/8] %v321, 128
      %v362 = vpop.trf.xlu0
      %v363 = vpop.trf.xlu0
      %v364 = vpop.trf.xlu0
      %v365 = vpop.trf.xlu0
      %v366 = vpop.trf.xlu0
      %v367 = vpop.trf.xlu0
      %v368 = vpop.trf.xlu0
      %v369 = vpop.trf.xlu0
      %v370 = vunpack.c.l.bf16 %v346
      %v371 = vunpack.c.l.bf16 %v362
      %v372 = vld [vmem:[%s1] sm:$0xff]
      %374 = vset.pattern.permute.xlu0 0
      %375 = vperm.xlu0 %374, %v372
      %v376 = vpop.permute.xlu0 %375
      %v378 = vmul.f32 %v370, %v376
      %v379 = vmul.f32 %v371, %v376
      %v380 = vld [vmem:[%s2] sm:$0xff]
      %382 = vset.pattern.permute.xlu0 0
      %383 = vperm.xlu0 %382, %v380
      %v384 = vpop.permute.xlu0 %383
      %v386 = vadd.f32 %v378, %v384
      %v387 = vadd.f32 %v379, %v384
      %vm388 = vcmp.gt.f32.partialorder %v386, 0.0
      %vm389 = vcmp.gt.f32.partialorder %v387, 0.0
      %v390 = vmul.f32 %v386, 0.1
      %v391 = vmul.f32 %v387, 0.1
      %v392 = vsel %vm388, %v386, %v390
      %v393 = vsel %vm389, %v387, %v391
      %394 = vst [vmem:[%s208] sm:$0xff] %v392
      %395 = vst [vmem:[%s208 + $0x8] sm:$0xff] %v393
      %s396 = smul.u32 2, %s19
      %p397 = scmp.lt.s32.totalorder %s18, 1
      %s398 = scalar_select %p397, %s18, 1
      %p399 = scmp.lt.s32.totalorder %s396, 1
      %s400 = scalar_select %p399, %s396, 1
      %s401 = smul.addr %s398, 2
      %s402 = sadd.s32 %s400, %s401
      %s403 = smul.addr %s402, 8
      %s404 = scalar_lea.vmem %s3, %s403
      // Predicated region
      $region33: #{cnn_block_forward.3} parent=31 // pred_check
        %p405 = pneg %p116
      $region34: #{cnn_block_forward.3} parent=31 // pred_check_branch
        %407 = sbr.rel (%p405) target = $region36
      $region35: #{cnn_block_forward.3} parent=31 // pred_region
        %s408 = smul.u32 2, %s19
      $region36: #{cnn_block_forward.3} parent=31 // pred_fallthru
        _
    $region32: #{cnn_block_forward.3} parent=5 // pred_fallthru
      _
    %p409 = scmp.le.s32.totalorder 2, %s9
    // Predicated region
    $region37: #{cnn_block_forward.3} parent=5 // pred_check
      %p410 = pneg %p409
    $region38: #{cnn_block_forward.3} parent=5 // pred_check_branch
      %412 = sbr.rel (%p410) target = $region40
    $region39: #{cnn_block_forward.3} parent=5 // pred_region
      %s413 = ssub.s32 %s9, 2
      // Predicated region
      $region41: #{cnn_block_forward.3} parent=39 // pred_check
        %p414 = pneg %p122
      $region42: #{cnn_block_forward.3} parent=39 // pred_check_branch
        %416 = sbr.rel (%p414) target = $region44
      $region43: #{cnn_block_forward.3} parent=39 // pred_region
        %s417 = smul.u32 2, %s21
        %p418 = scmp.lt.s32.totalorder %s20, 1
        %s419 = scalar_select %p418, %s20, 1
        %p420 = scmp.lt.s32.totalorder %s417, 1
        %s421 = scalar_select %p420, %s417, 1
        %s422 = smul.addr %s419, 2
        %s423 = sadd.s32 %s421, %s422
        %s424 = smul.addr %s423, 8
        %s425 = scalar_lea.vmem %s3, %s424
      $region44: #{cnn_block_forward.3} parent=39 // pred_fallthru
        _
    $region40: #{cnn_block_forward.3} parent=5 // pred_fallthru
      _
  $region6: #{cnn_block_forward.3} parent=0 // loop_footer
    %s13 = sadd.s32 1, %s9
  $region7: #{cnn_block_forward.3} parent=0 // loop_footer_branch
    %8 = sbr.rel target = $region3
  $region8: #{cnn_block_forward.3} parent=0 // loop_exit
    _

// kernel: cnn_block_forward.2
$region0: #{cnn_block_forward.2}
  #allocation0 [shape = 'u32[]', space=smem, size = 0x4, offset = 0x4, fixed_abs, tag = 'smem constant byte address 0x4 - core index']
  #allocation1 [shape = 'u32[144,128]{1,0:T(1,128)}', space=vmem, size = 0x12000, scoped, tag = 'internal scratch']
  #allocation2 [shape = 'f32[128,128]{1,0:T(8,128)}', space=vmem, size = 0x10000, scoped, tag = 'scratch operand']
  %s0 = inlined_call_operand.vmem [shape: bf16[2,18,18,4], index: 0, kind: input, shape index: {}]
  %s1 = inlined_call_operand.vmem [shape: bf16[9,4,128], index: 1, kind: input, shape index: {}]
  %s2 = inlined_call_operand.vmem [shape: bf16[2,256,128], index: 2, kind: output, shape index: {0}]
  %s3 = inlined_call_operand.vmem [shape: f32[2,1,128], index: 3, kind: output, shape index: {1}]
  %s4 = inlined_call_operand.vmem [shape: f32[2,1,128], index: 4, kind: output, shape index: {2}]
  %5 = xla_tuple %s2, %s3, %s4
  %s6 = sld [smem:[#allocation0]]
  $region65: #{cnn_block_forward.2} parent=0
    _
  %s8 = ssub.s32 1, %s6
  %s9 = scalar_select 0, %s8, %s6
  loop: start=0, step=1, limit=6
  $region2: #{cnn_block_forward.2} parent=0 // loop_pre_header
    _
  $region3: #{cnn_block_forward.2} parent=0 // loop_header
    %s11 = sphi 0, %s15
    %p12 = scmp.ge.s32.totalorder %s11, 6
    %s18 = sphi 0, %s30
    %s19 = sphi 0, %s26
    %s20 = sphi 0, %s18
    %s21 = sphi 0, %s19
    %s22 = sphi 0, %s20
    %s23 = sphi 0, %s21
    %s33 = sphi 0, %s35
    %s36 = sphi 0, %s33
    %s37 = sphi 0, %s36
    %s53 = sphi 0, %s37
    %s57 = sphi 0, %s57
    %s59 = sphi 0, %s57
    %s60 = sphi 0, %s59
    %s74 = sphi 0, %s60
    %s82 = sphi 0, %s84
    %s85 = sphi 0, %s82
    %s86 = sphi 0, %s85
    %s102 = sphi 0, %s86
    %s108 = sphi 0, %s110
    %s111 = sphi 0, %s108
    %s112 = sphi 0, %s111
    %s128 = sphi 0, %s112
    %s134 = sphi 0, %s136
    %s137 = sphi 0, %s134
    %s138 = sphi 0, %s137
    %s154 = sphi 0, %s138
  $region4: #{cnn_block_forward.2} parent=0 // loop_header_branch
    %14 = sbr.rel (%p12) target = $region8
  $region5: #{cnn_block_forward.2} parent=0 // loop_body
    %s16 = ssub.s32 %s11, 1
    %s17 = ssub.s32 %s11, 2
    %s24 = sadd.s32 1, %s19
    %p25 = scmp.ge.s32.totalorder %s24, 2
    %s26 = scalar_select %p25, 0, %s24
    %s27 = sadd.s32 1, %s18
    %s28 = scalar_select %p25, %s27, %s18
    %p29 = scmp.ge.s32.totalorder %s28, 2
    %s30 = scalar_select %p29, 0, %s28
    %s31 = ssub.s32 %s18, %s30
    %p32 = scmp.eq.s32.totalorder %s31, 0
    %s34 = sadd.s32 %s33, 1
    %s35 = scalar_select %p32, %s33, %s34
    %p38 = pneg %p32
    %p39 = scmp.eq.s32.totalorder %s11, 3
    %p40 = por %p38, %p39
    %p41 = scmp.ne.s32.totalorder %s33, %s36
    %p42 = scmp.eq.s32.totalorder %s11, 0
    %p43 = por %p41, %p42
    %p44 = scmp.ne.s32.totalorder %s33, %s36
    %p45 = scmp.eq.s32.totalorder %s16, 3
    %p46 = por %p44, %p45
    %p47 = scmp.ne.s32.totalorder %s36, %s37
    %p48 = scmp.eq.s32.totalorder %s16, 0
    %p49 = por %p47, %p48
    %p50 = scmp.ne.s32.totalorder %s36, %s37
    %p51 = scmp.eq.s32.totalorder %s17, 3
    %p52 = por %p50, %p51
    %p54 = scmp.ne.s32.totalorder %s37, %s53
    %p55 = scmp.eq.s32.totalorder %s17, 0
    %p56 = por %p54, %p55
    %s58 = sadd.s32 %s57, 1
    %p61 = scmp.eq.s32.totalorder %s11, 3
    %p62 = scmp.ne.s32.totalorder %s57, %s59
    %p63 = scmp.eq.s32.totalorder %s11, 0
    %p64 = por %p62, %p63
    %p65 = scmp.ne.s32.totalorder %s57, %s59
    %p66 = scmp.eq.s32.totalorder %s16, 3
    %p67 = por %p65, %p66
    %p68 = scmp.ne.s32.totalorder %s59, %s60
    %p69 = scmp.eq.s32.totalorder %s16, 0
    %p70 = por %p68, %p69
    %p71 = scmp.ne.s32.totalorder %s59, %s60
    %p72 = scmp.eq.s32.totalorder %s17, 3
    %p73 = por %p71, %p72
    %p75 = scmp.ne.s32.totalorder %s60, %s74
    %p76 = scmp.eq.s32.totalorder %s17, 0
    %p77 = por %p75, %p76
    %s78 = ssub.s32 %s18, %s30
    %s79 = ssub.s32 %s19, %s26
    %s80 = sor.u32 %s78, %s79
    %p81 = scmp.eq.s32.totalorder %s80, 0
    %s83 = sadd.s32 %s82, 1
    %s84 = scalar_select %p81, %s82, %s83
    %p87 = pneg %p81
    %p88 = scmp.eq.s32.totalorder %s11, 3
    %p89 = por %p87, %p88
    %p90 = scmp.ne.s32.totalorder %s82, %s85
    %p91 = scmp.eq.s32.totalorder %s11, 0
    %p92 = por %p90, %p91
    %p93 = scmp.ne.s32.totalorder %s82, %s85
    %p94 = scmp.eq.s32.totalorder %s16, 3
    %p95 = por %p93, %p94
    %p96 = scmp.ne.s32.totalorder %s85, %s86
    %p97 = scmp.eq.s32.totalorder %s16, 0
    %p98 = por %p96, %p97
    %p99 = scmp.ne.s32.totalorder %s85, %s86
    %p100 = scmp.eq.s32.totalorder %s17, 3
    %p101 = por %p99, %p100
    %p103 = scmp.ne.s32.totalorder %s86, %s102
    %p104 = scmp.eq.s32.totalorder %s17, 0
    %p105 = por %p103, %p104
    %s106 = ssub.s32 %s18, %s30
    %p107 = scmp.eq.s32.totalorder %s106, 0
    %s109 = sadd.s32 %s108, 1
    %s110 = scalar_select %p107, %s108, %s109
    %p113 = pneg %p107
    %p114 = scmp.eq.s32.totalorder %s11, 3
    %p115 = por %p113, %p114
    %p116 = scmp.ne.s32.totalorder %s108, %s111
    %p117 = scmp.eq.s32.totalorder %s11, 0
    %p118 = por %p116, %p117
    %p119 = scmp.ne.s32.totalorder %s108, %s111
    %p120 = scmp.eq.s32.totalorder %s16, 3
    %p121 = por %p119, %p120
    %p122 = scmp.ne.s32.totalorder %s111, %s112
    %p123 = scmp.eq.s32.totalorder %s16, 0
    %p124 = por %p122, %p123
    %p125 = scmp.ne.s32.totalorder %s111, %s112
    %p126 = scmp.eq.s32.totalorder %s17, 3
    %p127 = por %p125, %p126
    %p129 = scmp.ne.s32.totalorder %s112, %s128
    %p130 = scmp.eq.s32.totalorder %s17, 0
    %p131 = por %p129, %p130
    %s132 = ssub.s32 %s18, %s30
    %p133 = scmp.eq.s32.totalorder %s132, 0
    %s135 = sadd.s32 %s134, 1
    %s136 = scalar_select %p133, %s134, %s135
    %p139 = pneg %p133
    %p140 = scmp.eq.s32.totalorder %s11, 3
    %p141 = por %p139, %p140
    %p142 = scmp.ne.s32.totalorder %s134, %s137
    %p143 = scmp.eq.s32.totalorder %s11, 0
    %p144 = por %p142, %p143
    %p145 = scmp.ne.s32.totalorder %s134, %s137
    %p146 = scmp.eq.s32.totalorder %s16, 3
    %p147 = por %p145, %p146
    %p148 = scmp.ne.s32.totalorder %s137, %s138
    %p149 = scmp.eq.s32.totalorder %s16, 0
    %p150 = por %p148, %p149
    %p151 = scmp.ne.s32.totalorder %s137, %s138
    %p152 = scmp.eq.s32.totalorder %s17, 3
    %p153 = por %p151, %p152
    %p155 = scmp.ne.s32.totalorder %s138, %s154
    %p156 = scmp.eq.s32.totalorder %s17, 0
    %p157 = por %p155, %p156
    %p158 = scmp.le.s32.totalorder 1, %s11
    %p159 = scmp.lt.s32.totalorder %s11, 5
    %p160 = pnand %p158, %p159
    %p161 = pneg %p160
    // Predicated region
    $region9: #{cnn_block_forward.2} parent=5 // pred_check
      _
    $region10: #{cnn_block_forward.2} parent=5 // pred_check_branch
      %163 = sbr.rel (%p160) target = $region12
    $region11: #{cnn_block_forward.2} parent=5 // pred_region
      %s164 = ssub.s32 %s11, 1
      // Predicated region
      $region13: #{cnn_block_forward.2} parent=11 // pred_check
        %p165 = pneg %p70
      $region14: #{cnn_block_forward.2} parent=11 // pred_check_branch
        %167 = sbr.rel (%p165) target = $region16
      $region15: #{cnn_block_forward.2} parent=11 // pred_region
        _
      $region16: #{cnn_block_forward.2} parent=11 // pred_fallthru
        _
    $region12: #{cnn_block_forward.2} parent=5 // pred_fallthru
      _
    %p168 = scmp.lt.s32.totalorder %s11, 4
    // Predicated region
    $region17: #{cnn_block_forward.2} parent=5 // pred_check
      %p169 = pneg %p168
    $region18: #{cnn_block_forward.2} parent=5 // pred_check_branch
      %171 = sbr.rel (%p169) target = $region20
    $region19: #{cnn_block_forward.2} parent=5 // pred_region
      // Predicated region
      $region21: #{cnn_block_forward.2} parent=19 // pred_check
        %p172 = pneg %p43
      $region22: #{cnn_block_forward.2} parent=19 // pred_check_branch
        %174 = sbr.rel (%p172) target = $region24
      $region23: #{cnn_block_forward.2} parent=19 // pred_region
        %p175 = scmp.lt.s32.totalorder %s18, 1
        %s176 = scalar_select %p175, %s18, 1
        %s177 = smul.addr %s176, 54
        %s178 = smul.addr %s177, 4
        %s179 = scalar_lea.vmem %s0, %s178
      $region24: #{cnn_block_forward.2} parent=19 // pred_fallthru
        _
    $region20: #{cnn_block_forward.2} parent=5 // pred_fallthru
      _
    %p180 = scmp.le.s32.totalorder 1, %s11
    %p181 = scmp.lt.s32.totalorder %s11, 5
    %p182 = pnand %p180, %p181
    %p183 = pneg %p182
    // Predicated region
    $region25: #{cnn_block_forward.2} parent=5 // pred_check
      _
    $region26: #{cnn_block_forward.2} parent=5 // pred_check_branch
      %185 = sbr.rel (%p182) target = $region28
    $region27: #{cnn_block_forward.2} parent=5 // pred_region
      %s186 = ssub.s32 %s11, 1
      %p187 = scmp.lt.s32.totalorder %s20, 1
      %s188 = scalar_select %p187, %s20, 1
      %s189 = smul.addr %s188, 54
      %s190 = smul.addr %s189, 4
      %s191 = scalar_lea.vmem %s0, %s190
      %p192 = pneg %p49
      %p193 = pneg %p46
      %p194 = pneg %p70
      %p195 = pneg %p67
      %p196 = pneg %p98
      %p197 = pneg %p95
      %s198 = smul.u32 16, %s21
      %p199 = scmp.lt.s32.totalorder %s20, 1
      %s200 = scalar_select %p199, %s20, 1
      %p201 = scmp.lt.s32.totalorder %s198, 31
      %s202 = scalar_select %p201, %s198, 31
      %s203 = smul.addr %s200, 32
      %s204 = sadd.s32 %s202, %s203
      %s205 = smul.addr %s204, 4
      %s206 = scalar_lea.vmem %s2, %s205
      %p207 = pneg %p124
      %p208 = pneg %p121
      %p209 = scmp.lt.s32.totalorder %s20, 1
      %s210 = scalar_select %p209, %s20, 1
      %s211 = scalar_lea.vmem %s3, %s210
      %p212 = pneg %p150
      %p213 = pneg %p147
      %p214 = scmp.lt.s32.totalorder %s20, 1
      %s215 = scalar_select %p214, %s20, 1
      %s216 = scalar_lea.vmem %s4, %s215
      %p217 = scmp.lt.s32.totalorder %s20, 1
      %s218 = scalar_select %p217, %s20, 1
      %s219 = smul.addr %s218, 54
      %s220 = smul.addr %s219, 4
      %s221 = scalar_lea.vmem %s0, %s220
      %s222 = smul.u32 16, %s21
      %p223 = scmp.lt.s32.totalorder %s20, 1
      %s224 = scalar_select %p223, %s20, 1
      %p225 = scmp.lt.s32.totalorder %s222, 31
      %s226 = scalar_select %p225, %s222, 31
      %s227 = smul.addr %s224, 32
      %s228 = sadd.s32 %s226, %s227
      %s229 = smul.addr %s228, 4
      %s230 = scalar_lea.vmem %s2, %s229
      %s231 = smul.u32 16, %s21
      %p232 = scmp.lt.s32.totalorder %s20, 1
      %s233 = scalar_select %p232, %s20, 1
      %s234 = scalar_lea.vmem %s3, %s233
      %p235 = scmp.lt.s32.totalorder %s20, 1
      %s236 = scalar_select %p235, %s20, 1
      %s237 = scalar_lea.vmem %s4, %s236
      %s239 = smul.u32 %s21, 8
      %s240 = smul.u32 %s239, 3
      %s241 = smul.addr %s240, 4
      %s242 = scalar_lea.vmem %s221, %s241
      %v243 = vld [vmem:[%s242] sm:$0xf]
      %v244 = vld [vmem:[%s242 + $0x4] sm:$0xf]
      %v245 = vld [vmem:[%s242 + $0xc] sm:$0xf]
      %v246 = vld [vmem:[%s242 + $0x10] sm:$0xf]
      %v247 = vld [vmem:[%s242 + $0x18] sm:$0xf]
      %v248 = vld [vmem:[%s242 + $0x1c] sm:$0xf]
      %v249 = vld [vmem:[%s242 + $0x24] sm:$0xf]
      %v250 = vld [vmem:[%s242 + $0x28] sm:$0xf]
      %v251 = vld [vmem:[%s242 + $0x30] sm:$0xf]
      %v252 = vld [vmem:[%s242 + $0x34] sm:$0xf]
      %v253 = vld [vmem:[%s242 + $0x3c] sm:$0xf]
      %v254 = vld [vmem:[%s242 + $0x40] sm:$0xf]
      %v255 = vld [vmem:[%s242 + $0x48] sm:$0xf]
      %v256 = vld [vmem:[%s242 + $0x4c] sm:$0xf]
      %v257 = vld [vmem:[%s242 + $0x54] sm:$0xf]
      %v258 = vld [vmem:[%s242 + $0x58] sm:$0xf]
      %v259 = vld [vmem:[%s1] sm:$0x3]
      %v260 = vld [vmem:[%s242 + $0x8] sm:$0x1]
      %v261 = vld [vmem:[%s242 + $0x14] sm:$0x1]
      %v262 = vld [vmem:[%s242 + $0x20] sm:$0x1]
      %v263 = vld [vmem:[%s242 + $0x2c] sm:$0x1]
      %v264 = vld [vmem:[%s242 + $0x38] sm:$0x1]
      %v265 = vld [vmem:[%s242 + $0x44] sm:$0x1]
      %v266 = vld [vmem:[%s242 + $0x50] sm:$0x1]
      %v267 = vld [vmem:[%s242 + $0x5c] sm:$0x1]
      %vm268 = vsmask.f32 3328
      %vm269 = vsmask.f32 7440
      %vm270 = vmor %vm268, %vm269
      %v272 = vshrl.u32 %v243, 16
      %v274 = vrot.slane %v272, 4
      %v275 = vshll.u32 %v243, 16
      %v277 = vrot.slane %v275, 5
      %v278 = vor.u32 %v274, %v277
      %v279 = vrot.slane %v278, 4
      %v281 = vshll.u32 %v244, 16
      %v283 = vrot.slane %v281, 5
      %v284 = vsel %vm270, %v279, %v283
      %v285 = vshrl.u32 %v244, 16
      %v287 = vrot.slane %v285, 4
      %v288 = vor.u32 %v287, %v283
      %v289 = vrot.slane %v288, 4
      %v291 = vshll.u32 %v260, 16
      %v293 = vrot.slane %v291, 5
      %v294 = vsel %vm270, %v289, %v293
      %v296 = vshrl.u32 %v245, 16
      %v298 = vrot.slane %v296, 4
      %v299 = vshll.u32 %v245, 16
      %v301 = vrot.slane %v299, 5
      %v302 = vor.u32 %v298, %v301
      %v303 = vrot.slane %v302, 4
      %v305 = vshll.u32 %v246, 16
      %v307 = vrot.slane %v305, 5
      %v308 = vsel %vm270, %v303, %v307
      %v309 = vshrl.u32 %v246, 16
      %v311 = vrot.slane %v309, 4
      %v312 = vor.u32 %v311, %v307
      %v313 = vrot.slane %v312, 4
      %v315 = vshll.u32 %v261, 16
      %v317 = vrot.slane %v315, 5
      %v318 = vsel %vm270, %v313, %v317
      %v320 = vshrl.u32 %v247, 16
      %v322 = vrot.slane %v320, 4
      %v323 = vshll.u32 %v247, 16
      %v325 = vrot.slane %v323, 5
      %v326 = vor.u32 %v322, %v325
      %v327 = vrot.slane %v326, 4
      %v329 = vshll.u32 %v248, 16
      %v331 = vrot.slane %v329, 5
      %v332 = vsel %vm270, %v327, %v331
      %v333 = vshrl.u32 %v248, 16
      %v335 = vrot.slane %v333, 4
      %v336 = vor.u32 %v335, %v331
      %v337 = vrot.slane %v336, 4
      %v339 = vshll.u32 %v262, 16
      %v341 = vrot.slane %v339, 5
      %v342 = vsel %vm270, %v337, %v341
      %v344 = vshrl.u32 %v249, 16
      %v346 = vrot.slane %v344, 4
      %v347 = vshll.u32 %v249, 16
      %v349 = vrot.slane %v347, 5
      %v350 = vor.u32 %v346, %v349
      %v351 = vrot.slane %v350, 4
      %v353 = vshll.u32 %v250, 16
      %v355 = vrot.slane %v353, 5
      %v356 = vsel %vm270, %v351, %v355
      %v357 = vshrl.u32 %v250, 16
      %v359 = vrot.slane %v357, 4
      %v360 = vor.u32 %v359, %v355
      %v361 = vrot.slane %v360, 4
      %v363 = vshll.u32 %v263, 16
      %v365 = vrot.slane %v363, 5
      %v366 = vsel %vm270, %v361, %v365
      %v368 = vshrl.u32 %v251, 16
      %v370 = vrot.slane %v368, 4
      %v371 = vshll.u32 %v251, 16
      %v373 = vrot.slane %v371, 5
      %v374 = vor.u32 %v370, %v373
      %v375 = vrot.slane %v374, 4
      %v377 = vshll.u32 %v252, 16
      %v379 = vrot.slane %v377, 5
      %v380 = vsel %vm270, %v375, %v379
      %v381 = vshrl.u32 %v252, 16
      %v383 = vrot.slane %v381, 4
      %v384 = vor.u32 %v383, %v379
      %v385 = vrot.slane %v384, 4
      %v387 = vshll.u32 %v264, 16
      %v389 = vrot.slane %v387, 5
      %v390 = vsel %vm270, %v385, %v389
      %v392 = vshrl.u32 %v253, 16
      %v394 = vrot.slane %v392, 4
      %v395 = vshll.u32 %v253, 16
      %v397 = vrot.slane %v395, 5
      %v398 = vor.u32 %v394, %v397
      %v399 = vrot.slane %v398, 4
      %v401 = vshll.u32 %v254, 16
      %v403 = vrot.slane %v401, 5
      %v404 = vsel %vm270, %v399, %v403
      %v405 = vshrl.u32 %v254, 16
      %v407 = vrot.slane %v405, 4
      %v408 = vor.u32 %v407, %v403
      %v409 = vrot.slane %v408, 4
      %v411 = vshll.u32 %v265, 16
      %v413 = vrot.slane %v411, 5
      %v414 = vsel %vm270, %v409, %v413
      %v416 = vshrl.u32 %v255, 16
      %v418 = vrot.slane %v416, 4
      %v419 = vshll.u32 %v255, 16
      %v421 = vrot.slane %v419, 5
      %v422 = vor.u32 %v418, %v421
      %v423 = vrot.slane %v422, 4
      %v425 = vshll.u32 %v256, 16
      %v427 = vrot.slane %v425, 5
      %v428 = vsel %vm270, %v423, %v427
      %v429 = vshrl.u32 %v256, 16
      %v431 = vrot.slane %v429, 4
      %v432 = vor.u32 %v431, %v427
      %v433 = vrot.slane %v432, 4
      %v435 = vshll.u32 %v266, 16
      %v437 = vrot.slane %v435, 5
      %v438 = vsel %vm270, %v433, %v437
      %v440 = vshrl.u32 %v257, 16
      %v442 = vrot.slane %v440, 4
      %v443 = vshll.u32 %v257, 16
      %v445 = vrot.slane %v443, 5
      %v446 = vor.u32 %v442, %v445
      %v447 = vrot.slane %v446, 4
      %v449 = vshll.u32 %v258, 16
      %v451 = vrot.slane %v449, 5
      %v452 = vsel %vm270, %v447, %v451
      %v453 = vshrl.u32 %v258, 16
      %v455 = vrot.slane %v453, 4
      %v456 = vor.u32 %v455, %v451
      %v457 = vrot.slane %v456, 4
      %v459 = vshll.u32 %v267, 16
      %v461 = vrot.slane %v459, 5
      %v462 = vsel %vm270, %v457, %v461
      %s463 = scalar_lea.vmem %s1, 2
      %v464 = vld [vmem:[%s463] sm:$0x3]
      %v465 = vunpack.c.l.b16 %v284
      %v466 = vunpack.c.l.b16 %v294
      %v467 = vunpack.c.l.b16 %v308
      %v468 = vunpack.c.l.b16 %v318
      %v469 = vunpack.c.l.b16 %v332
      %v470 = vunpack.c.l.b16 %v342
      %v471 = vunpack.c.l.b16 %v356
      %v472 = vunpack.c.l.b16 %v366
      %v473 = vunpack.c.l.b16 %v380
      %v474 = vunpack.c.l.b16 %v390
      %v475 = vunpack.c.l.b16 %v404
      %v476 = vunpack.c.l.b16 %v414
      %v477 = vunpack.c.l.b16 %v428
      %v478 = vunpack.c.l.b16 %v438
      %v479 = vunpack.c.l.b16 %v452
      %v480 = vunpack.c.l.b16 %v462
      %v481 = vpack.c.b16 %v466, %v465
      %v482 = vpack.c.b16 %v468, %v467
      %v483 = vpack.c.b16 %v470, %v469
      %v484 = vpack.c.b16 %v472, %v471
      %v485 = vpack.c.b16 %v474, %v473
      %v486 = vpack.c.b16 %v476, %v475
      %v487 = vpack.c.b16 %v478, %v477
      %v488 = vpack.c.b16 %v480, %v479
      %vm489 = vcmask 31744
      %v491 = vsel %vm489, %v481, 0
      %v494 = vsel %vm489, %v482, 0
      %v497 = vsel %vm489, %v483, 0
      %v500 = vsel %vm489, %v484, 0
      %v503 = vsel %vm489, %v485, 0
      %v506 = vsel %vm489, %v486, 0
      %v509 = vsel %vm489, %v487, 0
      %v512 = vsel %vm489, %v488, 0
      %vm514 = vcmask 1041408
      %v516 = vsel %vm514, %v464, 0
      %518 = vmatprep.subr.bf16.mxu0 0
      %519 = vmatpush1.bf16.msra.mxu0 %v516
      %520 = vmatprep.subr.bf16.mxu0 0
      %521 = vmatpush1.bf16.msra.mxu0 0
      %522 = vmatprep.subr.bf16.mxu0 0
      %523 = vmatpush1.bf16.msra.mxu0 0
      %524 = vmatprep.subr.bf16.mxu0 0
      %525 = vmatpush1.bf16.msra.mxu0 0
      %526 = vmatprep.subr.bf16.mxu0 0
      %527 = vmatpush1.bf16.msra.mxu0 0
      %528 = vmatprep.subr.bf16.mxu0 0
      %529 = vmatpush1.bf16.msra.mxu0 0
      %530 = vmatprep.subr.bf16.mxu0 0
      %531 = vmatpush1.bf16.msra.mxu0 0
      %532 = vmatprep.subr.bf16.mxu0 0
      %533 = vmatpush1.bf16.msra.mxu0 0
      %534 = vmatprep.subr.bf16.mxu0 0
      %535 = vmatpush1.bf16.msra.mxu0 0
      %536 = vmatprep.subr.bf16.mxu0 0
      %537 = vmatpush1.bf16.msra.mxu0 0
      %538 = vmatprep.subr.bf16.mxu0 0
      %539 = vmatpush1.bf16.msra.mxu0 0
      %540 = vmatprep.subr.bf16.mxu0 0
      %541 = vmatpush1.bf16.msra.mxu0 0
      %542 = vmatprep.subr.bf16.mxu0 0
      %543 = vmatpush1.bf16.msra.mxu0 0
      %544 = vmatprep.subr.bf16.mxu0 0
      %545 = vmatpush1.bf16.msra.mxu0 0
      %546 = vmatprep.subr.bf16.mxu0 0
      %547 = vmatpush1.bf16.msra.mxu0 0
      %548 = vmatprep.subr.bf16.mxu0 0
      %549 = vmatpush1.bf16.msra.mxu0 0
      %550 = vmatprep.mubr.bf16.mxu0 0
      %551 = vmatmul.mubr.bf16.gmra.mrb[0].mxu0 %v491
      %v552 = vpop.f32.mrb[0].mxu0
      %v553 = vadd.f32 0.0, %v552
      %v554 = vpop.f32.mrb[0].mxu0
      %v555 = vpop.f32.mrb[0].mxu0
      %v556 = vadd.f32 0.0, %v555
      %v557 = vpop.f32.mrb[0].mxu0
      %558 = vmatprep.mubr.bf16.mxu0 0
      %559 = vmatmul.mubr.bf16.gmra.mrb[0].mxu0 %v494
      %v560 = vpop.f32.mrb[0].mxu0
      %v561 = vadd.f32 0.0, %v560
      %v562 = vpop.f32.mrb[0].mxu0
      %v563 = vpop.f32.mrb[0].mxu0
      %v564 = vadd.f32 0.0, %v563
      %v565 = vpop.f32.mrb[0].mxu0
      %566 = vmatprep.mubr.bf16.mxu0 0
      %567 = vmatmul.mubr.bf16.gmra.mrb[0].mxu0 %v497
      %v568 = vpop.f32.mrb[0].mxu0
      %v569 = vadd.f32 0.0, %v568
      %v570 = vpop.f32.mrb[0].mxu0
      %v571 = vpop.f32.mrb[0].mxu0
      %v572 = vadd.f32 0.0, %v571
      %v573 = vpop.f32.mrb[0].mxu0
      %574 = vmatprep.mubr.bf16.mxu0 0
      %575 = vmatmul.mubr.bf16.gmra.mrb[0].mxu0 %v500
      %v576 = vpop.f32.mrb[0].mxu0
      %v577 = vadd.f32 0.0, %v576
      %v578 = vpop.f32.mrb[0].mxu0
      %v579 = vpop.f32.mrb[0].mxu0
      %v580 = vadd.f32 0.0, %v579
      %v581 = vpop.f32.mrb[0].mxu0
      %582 = vmatprep.mubr.bf16.mxu0 0
      %583 = vmatmul.mubr.bf16.gmra.mrb[0].mxu0 %v503
      %v584 = vpop.f32.mrb[0].mxu0
      %v585 = vadd.f32 0.0, %v584
      %v586 = vpop.f32.mrb[0].mxu0
      %v587 = vpop.f32.mrb[0].mxu0
      %v588 = vadd.f32 0.0, %v587
      %v589 = vpop.f32.mrb[0].mxu0
      %590 = vmatprep.mubr.bf16.mxu0 0
      %591 = vmatmul.mubr.bf16.gmra.mrb[0].mxu0 %v506
      %v592 = vpop.f32.mrb[0].mxu0
      %v593 = vadd.f32 0.0, %v592
      %v594 = vpop.f32.mrb[0].mxu0
      %v595 = vpop.f32.mrb[0].mxu0
      %v596 = vadd.f32 0.0, %v595
      %v597 = vpop.f32.mrb[0].mxu0
      %598 = vmatprep.mubr.bf16.mxu0 0
      %599 = vmatmul.mubr.bf16.gmra.mrb[0].mxu0 %v509
      %v600 = vpop.f32.mrb[0].mxu0
      %v601 = vadd.f32 0.0, %v600
      %v602 = vpop.f32.mrb[0].mxu0
      %v603 = vpop.f32.mrb[0].mxu0
      %v604 = vadd.f32 0.0, %v603
      %v605 = vpop.f32.mrb[0].mxu0
      %606 = vmatprep.mubr.bf16.mxu0 0
      %607 = vmatmul.mubr.bf16.gmra.mrb[0].mxu0 %v512
      %v608 = vpop.f32.mrb[0].mxu0
      %v609 = vadd.f32 0.0, %v608
      %v610 = vpop.f32.mrb[0].mxu0
      %v611 = vpop.f32.mrb[0].mxu0
      %v612 = vadd.f32 0.0, %v611
      %v613 = vpop.f32.mrb[0].mxu0
      %614 = vdwg.mxu0
      %v631 = vunpack.c.l.b16 %v243
      %v632 = vunpack.c.l.b16 %v244
      %v633 = vunpack.c.l.b16 %v245
      %v634 = vunpack.c.l.b16 %v246
      %v635 = vunpack.c.l.b16 %v247
      %v636 = vunpack.c.l.b16 %v248
      %v637 = vunpack.c.l.b16 %v249
      %v638 = vunpack.c.l.b16 %v250
      %v639 = vunpack.c.l.b16 %v251
      %v640 = vunpack.c.l.b16 %v252
      %v641 = vunpack.c.l.b16 %v253
      %v642 = vunpack.c.l.b16 %v254
      %v643 = vunpack.c.l.b16 %v255
      %v644 = vunpack.c.l.b16 %v256
      %v645 = vunpack.c.l.b16 %v257
      %v646 = vunpack.c.l.b16 %v258
      %v647 = vpack.c.b16 %v632, %v631
      %v648 = vpack.c.b16 %v634, %v633
      %v649 = vpack.c.b16 %v636, %v635
      %v650 = vpack.c.b16 %v638, %v637
      %v651 = vpack.c.b16 %v640, %v639
      %v652 = vpack.c.b16 %v642, %v641
      %v653 = vpack.c.b16 %v644, %v643
      %v654 = vpack.c.b16 %v646, %v645
      %v656 = vsel %vm489, %v647, 0
      %v659 = vsel %vm489, %v648, 0
      %v662 = vsel %vm489, %v649, 0
      %v665 = vsel %vm489, %v650, 0
      %v668 = vsel %vm489, %v651, 0
      %v671 = vsel %vm489, %v652, 0
      %v674 = vsel %vm489, %v653, 0
      %v677 = vsel %vm489, %v654, 0
      %v680 = vsel %vm514, %v259, 0
      %682 = vmatprep.subr.bf16.mxu0 0
      %683 = vmatpush1.bf16.msra.mxu0 %v680
      %684 = vmatprep.subr.bf16.mxu0 0
      %685 = vmatpush1.bf16.msra.mxu0 0
      %686 = vmatprep.subr.bf16.mxu0 0
      %687 = vmatpush1.bf16.msra.mxu0 0
      %688 = vmatprep.subr.bf16.mxu0 0
      %689 = vmatpush1.bf16.msra.mxu0 0
      %690 = vmatprep.subr.bf16.mxu0 0
      %691 = vmatpush1.bf16.msra.mxu0 0
      %692 = vmatprep.subr.bf16.mxu0 0
      %693 = vmatpush1.bf16.msra.mxu0 0
      %694 = vmatprep.subr.bf16.mxu0 0
      %695 = vmatpush1.bf16.msra.mxu0 0
      %696 = vmatprep.subr.bf16.mxu0 0
      %697 = vmatpush1.bf16.msra.mxu0 0
      %698 = vmatprep.subr.bf16.mxu0 0
      %699 = vmatpush1.bf16.msra.mxu0 0
      %700 = vmatprep.subr.bf16.mxu0 0
      %701 = vmatpush1.bf16.msra.mxu0 0
      %702 = vmatprep.subr.bf16.mxu0 0
      %703 = vmatpush1.bf16.msra.mxu0 0
      %704 = vmatprep.subr.bf16.mxu0 0
      %705 = vmatpush1.bf16.msra.mxu0 0
      %706 = vmatprep.subr.bf16.mxu0 0
      %707 = vmatpush1.bf16.msra.mxu0 0
      %708 = vmatprep.subr.bf16.mxu0 0
      %709 = vmatpush1.bf16.msra.mxu0 0
      %710 = vmatprep.subr.bf16.mxu0 0
      %711 = vmatpush1.bf16.msra.mxu0 0
      %712 = vmatprep.subr.bf16.mxu0 0
      %713 = vmatpush1.bf16.msra.mxu0 0
      %714 = vmatprep.mubr.bf16.mxu0 0
      %715 = vmatmul.mubr.bf16.gmra.mrb[0].mxu0 %v656
      %v716 = vpop.f32.mrb[0].mxu0
      %v717 = vadd.f32 %v553, %v716
      %v718 = vpop.f32.mrb[0].mxu0
      %v719 = vpop.f32.mrb[0].mxu0
      %v720 = vadd.f32 %v556, %v719
      %v721 = vpop.f32.mrb[0].mxu0
      %722 = vmatprep.mubr.bf16.mxu0 0
      %723 = vmatmul.mubr.bf16.gmra.mrb[0].mxu0 %v659
      %v724 = vpop.f32.mrb[0].mxu0
      %v725 = vadd.f32 %v561, %v724
      %v726 = vpop.f32.mrb[0].mxu0
      %v727 = vpop.f32.mrb[0].mxu0
      %v728 = vadd.f32 %v564, %v727
      %v729 = vpop.f32.mrb[0].mxu0
      %730 = vmatprep.mubr.bf16.mxu0 0
      %731 = vmatmul.mubr.bf16.gmra.mrb[0].mxu0 %v662
      %v732 = vpop.f32.mrb[0].mxu0
      %v733 = vadd.f32 %v569, %v732
      %v734 = vpop.f32.mrb[0].mxu0
      %v735 = vpop.f32.mrb[0].mxu0
      %v736 = vadd.f32 %v572, %v735
      %v737 = vpop.f32.mrb[0].mxu0
      %738 = vmatprep.mubr.bf16.mxu0 0
      %739 = vmatmul.mubr.bf16.gmra.mrb[0].mxu0 %v665
      %v740 = vpop.f32.mrb[0].mxu0
      %v741 = vadd.f32 %v577, %v740
      %v742 = vpop.f32.mrb[0].mxu0
      %v743 = vpop.f32.mrb[0].mxu0
      %v744 = vadd.f32 %v580, %v743
      %v745 = vpop.f32.mrb[0].mxu0
      %746 = vmatprep.mubr.bf16.mxu0 0
      %747 = vmatmul.mubr.bf16.gmra.mrb[0].mxu0 %v668
      %v748 = vpop.f32.mrb[0].mxu0
      %v749 = vadd.f32 %v585, %v748
      %v750 = vpop.f32.mrb[0].mxu0
      %v751 = vpop.f32.mrb[0].mxu0
      %v752 = vadd.f32 %v588, %v751
      %v753 = vpop.f32.mrb[0].mxu0
      %754 = vmatprep.mubr.bf16.mxu0 0
      %755 = vmatmul.mubr.bf16.gmra.mrb[0].mxu0 %v671
      %v756 = vpop.f32.mrb[0].mxu0
      %v757 = vadd.f32 %v593, %v756
      %v758 = vpop.f32.mrb[0].mxu0
      %v759 = vpop.f32.mrb[0].mxu0
      %v760 = vadd.f32 %v596, %v759
      %v761 = vpop.f32.mrb[0].mxu0
      %762 = vmatprep.mubr.bf16.mxu0 0
      %763 = vmatmul.mubr.bf16.gmra.mrb[0].mxu0 %v674
      %v764 = vpop.f32.mrb[0].mxu0
      %v765 = vadd.f32 %v601, %v764
      %v766 = vpop.f32.mrb[0].mxu0
      %v767 = vpop.f32.mrb[0].mxu0
      %v768 = vadd.f32 %v604, %v767
      %v769 = vpop.f32.mrb[0].mxu0
      %770 = vmatprep.mubr.bf16.mxu0 0
      %771 = vmatmul.mubr.bf16.gmra.mrb[0].mxu0 %v677
      %v772 = vpop.f32.mrb[0].mxu0
      %v773 = vadd.f32 %v609, %v772
      %v774 = vpop.f32.mrb[0].mxu0
      %v775 = vpop.f32.mrb[0].mxu0
      %v776 = vadd.f32 %v612, %v775
      %v777 = vpop.f32.mrb[0].mxu0
      %778 = vdwg.mxu0
      %v779 = vld [vmem:[%s242] sm:$0xe]
      %v780 = vld [vmem:[%s242 + $0xc] sm:$0xe]
      %v781 = vld [vmem:[%s242 + $0x18] sm:$0xe]
      %v782 = vld [vmem:[%s242 + $0x24] sm:$0xe]
      %v783 = vld [vmem:[%s242 + $0x30] sm:$0xe]
      %v784 = vld [vmem:[%s242 + $0x3c] sm:$0xe]
      %v785 = vld [vmem:[%s242 + $0x48] sm:$0xe]
      %v786 = vld [vmem:[%s242 + $0x54] sm:$0xe]
      %vm803 = vcmask 1042432
      %vm804 = vcmask 1046532
      %vm805 = vmor %vm803, %vm804
      %v806 = vrot.slane %v779, 5
      %v807 = vrot.slane %v806, 4
      %v808 = vrot.slane %v244, 5
      %v809 = vsel %vm805, %v807, %v808
      %v810 = vrot.slane %v808, 4
      %v811 = vrot.slane %v260, 5
      %v812 = vsel %vm805, %v810, %v811
      %v813 = vrot.slane %v780, 5
      %v814 = vrot.slane %v813, 4
      %v815 = vrot.slane %v246, 5
      %v816 = vsel %vm805, %v814, %v815
      %v817 = vrot.slane %v815, 4
      %v818 = vrot.slane %v261, 5
      %v819 = vsel %vm805, %v817, %v818
      %v820 = vrot.slane %v781, 5
      %v821 = vrot.slane %v820, 4
      %v822 = vrot.slane %v248, 5
      %v823 = vsel %vm805, %v821, %v822
      %v824 = vrot.slane %v822, 4
      %v825 = vrot.slane %v262, 5
      %v826 = vsel %vm805, %v824, %v825
      %v827 = vrot.slane %v782, 5
      %v828 = vrot.slane %v827, 4
      %v829 = vrot.slane %v250, 5
      %v830 = vsel %vm805, %v828, %v829
      %v831 = vrot.slane %v829, 4
      %v832 = vrot.slane %v263, 5
      %v833 = vsel %vm805, %v831, %v832
      %v834 = vrot.slane %v783, 5
      %v835 = vrot.slane %v834, 4
      %v836 = vrot.slane %v252, 5
      %v837 = vsel %vm805, %v835, %v836
      %v838 = vrot.slane %v836, 4
      %v839 = vrot.slane %v264, 5
      %v840 = vsel %vm805, %v838, %v839
      %v841 = vrot.slane %v784, 5
      %v842 = vrot.slane %v841, 4
      %v843 = vrot.slane %v254, 5
      %v844 = vsel %vm805, %v842, %v843
      %v845 = vrot.slane %v843, 4
      %v846 = vrot.slane %v265, 5
      %v847 = vsel %vm805, %v845, %v846
      %v848 = vrot.slane %v785, 5
      %v849 = vrot.slane %v848, 4
      %v850 = vrot.slane %v256, 5
      %v851 = vsel %vm805, %v849, %v850
      %v852 = vrot.slane %v850, 4
      %v853 = vrot.slane %v266, 5
      %v854 = vsel %vm805, %v852, %v853
      %v855 = vrot.slane %v786, 5
      %v856 = vrot.slane %v855, 4
      %v857 = vrot.slane %v258, 5
      %v858 = vsel %vm805, %v856, %v857
      %v859 = vrot.slane %v857, 4
      %v860 = vrot.slane %v267, 5
      %v861 = vsel %vm805, %v859, %v860
      %s862 = scalar_lea.vmem %s1, 4
      %v863 = vld [vmem:[%s862] sm:$0x3]
      %v864 = vunpack.c.l.b16 %v809
      %v865 = vunpack.c.l.b16 %v812
      %v866 = vunpack.c.l.b16 %v816
      %v867 = vunpack.c.l.b16 %v819
      %v868 = vunpack.c.l.b16 %v823
      %v869 = vunpack.c.l.b16 %v826
      %v870 = vunpack.c.l.b16 %v830
      %v871 = vunpack.c.l.b16 %v833
      %v872 = vunpack.c.l.b16 %v837
      %v873 = vunpack.c.l.b16 %v840
      %v874 = vunpack.c.l.b16 %v844
      %v875 = vunpack.c.l.b16 %v847
      %v876 = vunpack.c.l.b16 %v851
      %v877 = vunpack.c.l.b16 %v854
      %v878 = vunpack.c.l.b16 %v858
      %v879 = vunpack.c.l.b16 %v861
      %v880 = vpack.c.b16 %v865, %v864
      %v881 = vpack.c.b16 %v867, %v866
      %v882 = vpack.c.b16 %v869, %v868
      %v883 = vpack.c.b16 %v871, %v870
      %v884 = vpack.c.b16 %v873, %v872
      %v885 = vpack.c.b16 %v875, %v874
      %v886 = vpack.c.b16 %v877, %v876
      %v887 = vpack.c.b16 %v879, %v878
      %v889 = vsel %vm489, %v880, 0
      %v892 = vsel %vm489, %v881, 0
      %v895 = vsel %vm489, %v882, 0
      %v898 = vsel %vm489, %v883, 0
      %v901 = vsel %vm489, %v884, 0
      %v904 = vsel %vm489, %v885, 0
      %v907 = vsel %vm489, %v886, 0
      %v910 = vsel %vm489, %v887, 0
      %v913 = vsel %vm514, %v863, 0
      %915 = vmatprep.subr.bf16.mxu0 0
      %916 = vmatpush1.bf16.msra.mxu0 %v913
      %917 = vmatprep.subr.bf16.mxu0 0
      %918 = vmatpush1.bf16.msra.mxu0 0
      %919 = vmatprep.subr.bf16.mxu0 0
      %920 = vmatpush1.bf16.msra.mxu0 0
      %921 = vmatprep.subr.bf16.mxu0 0
      %922 = vmatpush1.bf16.msra.mxu0 0
      %923 = vmatprep.subr.bf16.mxu0 0
      %924 = vmatpush1.bf16.msra.mxu0 0
      %925 = vmatprep.subr.bf16.mxu0 0
      %926 = vmatpush1.bf16.msra.mxu0 0
      %927 = vmatprep.subr.bf16.mxu0 0
      %928 = vmatpush1.bf16.msra.mxu0 0
      %929 = vmatprep.subr.bf16.mxu0 0
      %930 = vmatpush1.bf16.msra.mxu0 0
      %931 = vmatprep.subr.bf16.mxu0 0
      %932 = vmatpush1.bf16.msra.mxu0 0
      %933 = vmatprep.subr.bf16.mxu0 0
      %934 = vmatpush1.bf16.msra.mxu0 0
      %935 = vmatprep.subr.bf16.mxu0 0
      %936 = vmatpush1.bf16.msra.mxu0 0
      %937 = vmatprep.subr.bf16.mxu0 0
      %938 = vmatpush1.bf16.msra.mxu0 0
      %939 = vmatprep.subr.bf16.mxu0 0
      %940 = vmatpush1.bf16.msra.mxu0 0
      %941 = vmatprep.subr.bf16.mxu0 0
      %942 = vmatpush1.bf16.msra.mxu0 0
      %943 = vmatprep.subr.bf16.mxu0 0
      %944 = vmatpush1.bf16.msra.mxu0 0
      %945 = vmatprep.subr.bf16.mxu0 0
      %946 = vmatpush1.bf16.msra.mxu0 0
      %947 = vmatprep.mubr.bf16.mxu0 0
      %948 = vmatmul.mubr.bf16.gmra.mrb[0].mxu0 %v889
      %v949 = vpop.f32.mrb[0].mxu0
      %v950 = vadd.f32 0.0, %v949
      %v951 = vpop.f32.mrb[0].mxu0
      %v952 = vpop.f32.mrb[0].mxu0
      %v953 = vadd.f32 0.0, %v952
      %v954 = vpop.f32.mrb[0].mxu0
      %955 = vmatprep.mubr.bf16.mxu0 0
      %956 = vmatmul.mubr.bf16.gmra.mrb[0].mxu0 %v892
      %v957 = vpop.f32.mrb[0].mxu0
      %v958 = vadd.f32 0.0, %v957
      %v959 = vpop.f32.mrb[0].mxu0
      %v960 = vpop.f32.mrb[0].mxu0
      %v961 = vadd.f32 0.0, %v960
      %v962 = vpop.f32.mrb[0].mxu0
      %963 = vmatprep.mubr.bf16.mxu0 0
      %964 = vmatmul.mubr.bf16.gmra.mrb[0].mxu0 %v895
      %v965 = vpop.f32.mrb[0].mxu0
      %v966 = vadd.f32 0.0, %v965
      %v967 = vpop.f32.mrb[0].mxu0
      %v968 = vpop.f32.mrb[0].mxu0
      %v969 = vadd.f32 0.0, %v968
      %v970 = vpop.f32.mrb[0].mxu0
      %971 = vmatprep.mubr.bf16.mxu0 0
      %972 = vmatmul.mubr.bf16.gmra.mrb[0].mxu0 %v898
      %v973 = vpop.f32.mrb[0].mxu0
      %v974 = vadd.f32 0.0, %v973
      %v975 = vpop.f32.mrb[0].mxu0
      %v976 = vpop.f32.mrb[0].mxu0
      %v977 = vadd.f32 0.0, %v976
      %v978 = vpop.f32.mrb[0].mxu0
      %979 = vmatprep.mubr.bf16.mxu0 0
      %980 = vmatmul.mubr.bf16.gmra.mrb[0].mxu0 %v901
      %v981 = vpop.f32.mrb[0].mxu0
      %v982 = vadd.f32 0.0, %v981
      %v983 = vpop.f32.mrb[0].mxu0
      %v984 = vpop.f32.mrb[0].mxu0
      %v985 = vadd.f32 0.0, %v984
      %v986 = vpop.f32.mrb[0].mxu0
      %987 = vmatprep.mubr.bf16.mxu0 0
      %988 = vmatmul.mubr.bf16.gmra.mrb[0].mxu0 %v904
      %v989 = vpop.f32.mrb[0].mxu0
      %v990 = vadd.f32 0.0, %v989
      %v991 = vpop.f32.mrb[0].mxu0
      %v992 = vpop.f32.mrb[0].mxu0
      %v993 = vadd.f32 0.0, %v992
      %v994 = vpop.f32.mrb[0].mxu0
      %995 = vmatprep.mubr.bf16.mxu0 0
      %996 = vmatmul.mubr.bf16.gmra.mrb[0].mxu0 %v907
      %v997 = vpop.f32.mrb[0].mxu0
      %v998 = vadd.f32 0.0, %v997
      %v999 = vpop.f32.mrb[0].mxu0
      %v1000 = vpop.f32.mrb[0].mxu0
      %v1001 = vadd.f32 0.0, %v1000
      %v1002 = vpop.f32.mrb[0].mxu0
      %1003 = vmatprep.mubr.bf16.mxu0 0
      %1004 = vmatmul.mubr.bf16.gmra.mrb[0].mxu0 %v910
      %v1005 = vpop.f32.mrb[0].mxu0
      %v1006 = vadd.f32 0.0, %v1005
      %v1007 = vpop.f32.mrb[0].mxu0
      %v1008 = vpop.f32.mrb[0].mxu0
      %v1009 = vadd.f32 0.0, %v1008
      %v1010 = vpop.f32.mrb[0].mxu0
      %1011 = vdwg.mxu0
      %v1012 = vadd.f32 %v717, %v950
      %v1013 = vadd.f32 %v720, %v953
      %v1014 = vadd.f32 %v725, %v958
      %v1015 = vadd.f32 %v728, %v961
      %v1016 = vadd.f32 %v733, %v966
      %v1017 = vadd.f32 %v736, %v969
      %v1018 = vadd.f32 %v741, %v974
      %v1019 = vadd.f32 %v744, %v977
      %v1020 = vadd.f32 %v749, %v982
      %v1021 = vadd.f32 %v752, %v985
      %v1022 = vadd.f32 %v757, %v990
      %v1023 = vadd.f32 %v760, %v993
      %v1024 = vadd.f32 %v765, %v998
      %v1025 = vadd.f32 %v768, %v1001
      %v1026 = vadd.f32 %v773, %v1006
      %v1027 = vadd.f32 %v776, %v1009
      %1028 = vst [vmem:[#allocation2] sm:$0xff] %v1012
      %1029 = vst [vmem:[#allocation2 + $0x8] sm:$0xff] %v1013
      %1030 = vst [vmem:[#allocation2 + $0x10] sm:$0xff] %v1014
      %1031 = vst [vmem:[#allocation2 + $0x18] sm:$0xff] %v1015
      %1032 = vst [vmem:[#allocation2 + $0x20] sm:$0xff] %v1016
      %1033 = vst [vmem:[#allocation2 + $0x28] sm:$0xff] %v1017
      %1034 = vst [vmem:[#allocation2 + $0x30] sm:$0xff] %v1018
      %1035 = vst [vmem:[#allocation2 + $0x38] sm:$0xff] %v1019
      %1036 = vst [vmem:[#allocation2 + $0x40] sm:$0xff] %v1020
      %1037 = vst [vmem:[#allocation2 + $0x48] sm:$0xff] %v1021
      %1038 = vst [vmem:[#allocation2 + $0x50] sm:$0xff] %v1022
      %1039 = vst [vmem:[#allocation2 + $0x58] sm:$0xff] %v1023
      %1040 = vst [vmem:[#allocation2 + $0x60] sm:$0xff] %v1024
      %1041 = vst [vmem:[#allocation2 + $0x68] sm:$0xff] %v1025
      %1042 = vst [vmem:[#allocation2 + $0x70] sm:$0xff] %v1026
      %1043 = vst [vmem:[#allocation2 + $0x78] sm:$0xff] %v1027
      %s1044 = sadd.s32 %s239, 1
      %s1045 = smul.u32 %s1044, 3
      %s1046 = smul.addr %s1045, 4
      %s1047 = scalar_lea.vmem %s221, %s1046
      %v1048 = vld [vmem:[%s1047] sm:$0xf]
      %v1049 = vld [vmem:[%s1047 + $0x4] sm:$0xf]
      %v1050 = vld [vmem:[%s1047 + $0xc] sm:$0xf]
      %v1051 = vld [vmem:[%s1047 + $0x10] sm:$0xf]
      %v1052 = vld [vmem:[%s1047 + $0x18] sm:$0xf]
      %v1053 = vld [vmem:[%s1047 + $0x1c] sm:$0xf]
      %v1054 = vld [vmem:[%s1047 + $0x24] sm:$0xf]
      %v1055 = vld [vmem:[%s1047 + $0x28] sm:$0xf]
      %v1056 = vld [vmem:[%s1047 + $0x30] sm:$0xf]
      %v1057 = vld [vmem:[%s1047 + $0x34] sm:$0xf]
      %v1058 = vld [vmem:[%s1047 + $0x3c] sm:$0xf]
      %v1059 = vld [vmem:[%s1047 + $0x40] sm:$0xf]
      %v1060 = vld [vmem:[%s1047 + $0x48] sm:$0xf]
      %v1061 = vld [vmem:[%s1047 + $0x4c] sm:$0xf]
      %v1062 = vld [vmem:[%s1047 + $0x54] sm:$0xf]
      %v1063 = vld [vmem:[%s1047 + $0x58] sm:$0xf]
      %s1064 = scalar_lea.vmem %s1, 6
      %v1065 = vld [vmem:[%s1064] sm:$0x3]
      %v1066 = vld [vmem:[%s1047 + $0x8] sm:$0x1]
      %v1067 = vld [vmem:[%s1047 + $0x14] sm:$0x1]
      %v1068 = vld [vmem:[%s1047 + $0x20] sm:$0x1]
      %v1069 = vld [vmem:[%s1047 + $0x2c] sm:$0x1]
      %v1070 = vld [vmem:[%s1047 + $0x38] sm:$0x1]
      %v1071 = vld [vmem:[%s1047 + $0x44] sm:$0x1]
      %v1072 = vld [vmem:[%s1047 + $0x50] sm:$0x1]
      %v1073 = vld [vmem:[%s1047 + $0x5c] sm:$0x1]
      %v1075 = vshrl.u32 %v1048, 16
      %v1077 = vrot.slane %v1075, 4
      %v1078 = vshll.u32 %v1048, 16
      %v1080 = vrot.slane %v1078, 5
      %v1081 = vor.u32 %v1077, %v1080
      %v1082 = vrot.slane %v1081, 4
      %v1084 = vshll.u32 %v1049, 16
      %v1086 = vrot.slane %v1084, 5
      %v1087 = vsel %vm270, %v1082, %v1086
      %v1088 = vshrl.u32 %v1049, 16
      %v1090 = vrot.slane %v1088, 4
      %v1091 = vor.u32 %v1090, %v1086
      %v1092 = vrot.slane %v1091, 4
      %v1094 = vshll.u32 %v1066, 16
      %v1096 = vrot.slane %v1094, 5
      %v1097 = vsel %vm270, %v1092, %v1096
      %v1099 = vshrl.u32 %v1050, 16
      %v1101 = vrot.slane %v1099, 4
      %v1102 = vshll.u32 %v1050, 16
      %v1104 = vrot.slane %v1102, 5
      %v1105 = vor.u32 %v1101, %v1104
      %v1106 = vrot.slane %v1105, 4
      %v1108 = vshll.u32 %v1051, 16
      %v1110 = vrot.slane %v1108, 5
      %v1111 = vsel %vm270, %v1106, %v1110
      %v1112 = vshrl.u32 %v1051, 16
      %v1114 = vrot.slane %v1112, 4
      %v1115 = vor.u32 %v1114, %v1110
      %v1116 = vrot.slane %v1115, 4
      %v1118 = vshll.u32 %v1067, 16
      %v1120 = vrot.slane %v1118, 5
      %v1121 = vsel %vm270, %v1116, %v1120
      %v1123 = vshrl.u32 %v1052, 16
      %v1125 = vrot.slane %v1123, 4
      %v1126 = vshll.u32 %v1052, 16
      %v1128 = vrot.slane %v1126, 5
      %v1129 = vor.u32 %v1125, %v1128
      %v1130 = vrot.slane %v1129, 4
      %v1132 = vshll.u32 %v1053, 16
      %v1134 = vrot.slane %v1132, 5
      %v1135 = vsel %vm270, %v1130, %v1134
      %v1136 = vshrl.u32 %v1053, 16
      %v1138 = vrot.slane %v1136, 4
      %v1139 = vor.u32 %v1138, %v1134
      %v1140 = vrot.slane %v1139, 4
      %v1142 = vshll.u32 %v1068, 16
      %v1144 = vrot.slane %v1142, 5
      %v1145 = vsel %vm270, %v1140, %v1144
      %v1147 = vshrl.u32 %v1054, 16
      %v1149 = vrot.slane %v1147, 4
      %v1150 = vshll.u32 %v1054, 16
      %v1152 = vrot.slane %v1150, 5
      %v1153 = vor.u32 %v1149, %v1152
      %v1154 = vrot.slane %v1153, 4
      %v1156 = vshll.u32 %v1055, 16
      %v1158 = vrot.slane %v1156, 5
      %v1159 = vsel %vm270, %v1154, %v1158
      %v1160 = vshrl.u32 %v1055, 16
      %v1162 = vrot.slane %v1160, 4
      %v1163 = vor.u32 %v1162, %v1158
      %v1164 = vrot.slane %v1163, 4
      %v1166 = vshll.u32 %v1069, 16
      %v1168 = vrot.slane %v1166, 5
      %v1169 = vsel %vm270, %v1164, %v1168
      %v1171 = vshrl.u32 %v1056, 16
      %v1173 = vrot.slane %v1171, 4
      %v1174 = vshll.u32 %v1056, 16
      %v1176 = vrot.slane %v1174, 5
      %v1177 = vor.u32 %v1173, %v1176
      %v1178 = vrot.slane %v1177, 4
      %v1180 = vshll.u32 %v1057, 16
      %v1182 = vrot.slane %v1180, 5
      %v1183 = vsel %vm270, %v1178, %v1182
      %v1184 = vshrl.u32 %v1057, 16
      %v1186 = vrot.slane %v1184, 4
      %v1187 = vor.u32 %v1186, %v1182
      %v1188 = vrot.slane %v1187, 4
      %v1190 = vshll.u32 %v1070, 16
      %v1192 = vrot.slane %v1190, 5
      %v1193 = vsel %vm270, %v1188, %v1192
      %v1195 = vshrl.u32 %v1058, 16
      %v1197 = vrot.slane %v1195, 4
      %v1198 = vshll.u32 %v1058, 16
      %v1200 = vrot.slane %v1198, 5
      %v1201 = vor.u32 %v1197, %v1200
      %v1202 = vrot.slane %v1201, 4
      %v1204 = vshll.u32 %v1059, 16
      %v1206 = vrot.slane %v1204, 5
      %v1207 = vsel %vm270, %v1202, %v1206
      %v1208 = vshrl.u32 %v1059, 16
      %v1210 = vrot.slane %v1208, 4
      %v1211 = vor.u32 %v1210, %v1206
      %v1212 = vrot.slane %v1211, 4
      %v1214 = vshll.u32 %v1071, 16
      %v1216 = vrot.slane %v1214, 5
      %v1217 = vsel %vm270, %v1212, %v1216
      %v1219 = vshrl.u32 %v1060, 16
      %v1221 = vrot.slane %v1219, 4
      %v1222 = vshll.u32 %v1060, 16
      %v1224 = vrot.slane %v1222, 5
      %v1225 = vor.u32 %v1221, %v1224
      %v1226 = vrot.slane %v1225, 4
      %v1228 = vshll.u32 %v1061, 16
      %v1230 = vrot.slane %v1228, 5
      %v1231 = vsel %vm270, %v1226, %v1230
      %v1232 = vshrl.u32 %v1061, 16
      %v1234 = vrot.slane %v1232, 4
      %v1235 = vor.u32 %v1234, %v1230
      %v1236 = vrot.slane %v1235, 4
      %v1238 = vshll.u32 %v1072, 16
      %v1240 = vrot.slane %v1238, 5
      %v1241 = vsel %vm270, %v1236, %v1240
      %v1243 = vshrl.u32 %v1062, 16
      %v1245 = vrot.slane %v1243, 4
      %v1246 = vshll.u32 %v1062, 16
      %v1248 = vrot.slane %v1246, 5
      %v1249 = vor.u32 %v1245, %v1248
      %v1250 = vrot.slane %v1249, 4
      %v1252 = vshll.u32 %v1063, 16
      %v1254 = vrot.slane %v1252, 5
      %v1255 = vsel %vm270, %v1250, %v1254
      %v1256 = vshrl.u32 %v1063, 16
      %v1258 = vrot.slane %v1256, 4
      %v1259 = vor.u32 %v1258, %v1254
      %v1260 = vrot.slane %v1259, 4
      %v1262 = vshll.u32 %v1073, 16
      %v1264 = vrot.slane %v1262, 5
      %v1265 = vsel %vm270, %v1260, %v1264
      %s1266 = scalar_lea.vmem %s1, 8
      %v1267 = vld [vmem:[%s1266] sm:$0x3]
      %v1268 = vunpack.c.l.b16 %v1087
      %v1269 = vunpack.c.l.b16 %v1097
      %v1270 = vunpack.c.l.b16 %v1111
      %v1271 = vunpack.c.l.b16 %v1121
      %v1272 = vunpack.c.l.b16 %v1135
      %v1273 = vunpack.c.l.b16 %v1145
      %v1274 = vunpack.c.l.b16 %v1159
      %v1275 = vunpack.c.l.b16 %v1169
      %v1276 = vunpack.c.l.b16 %v1183
      %v1277 = vunpack.c.l.b16 %v1193
      %v1278 = vunpack.c.l.b16 %v1207
      %v1279 = vunpack.c.l.b16 %v1217
      %v1280 = vunpack.c.l.b16 %v1231
      %v1281 = vunpack.c.l.b16 %v1241
      %v1282 = vunpack.c.l.b16 %v1255
      %v1283 = vunpack.c.l.b16 %v1265
      %v1284 = vpack.c.b16 %v1269, %v1268
      %v1285 = vpack.c.b16 %v1271, %v1270
      %v1286 = vpack.c.b16 %v1273, %v1272
      %v1287 = vpack.c.b16 %v1275, %v1274
      %v1288 = vpack.c.b16 %v1277, %v1276
      %v1289 = vpack.c.b16 %v1279, %v1278
      %v1290 = vpack.c.b16 %v1281, %v1280
      %v1291 = vpack.c.b16 %v1283, %v1282
      %v1293 = vsel %vm489, %v1284, 0
      %v1296 = vsel %vm489, %v1285, 0
      %v1299 = vsel %vm489, %v1286, 0
      %v1302 = vsel %vm489, %v1287, 0
      %v1305 = vsel %vm489, %v1288, 0
      %v1308 = vsel %vm489, %v1289, 0
      %v1311 = vsel %vm489, %v1290, 0
      %v1314 = vsel %vm489, %v1291, 0
      %v1317 = vsel %vm514, %v1267, 0
      %1319 = vmatprep.subr.bf16.mxu0 0
      %1320 = vmatpush1.bf16.msra.mxu0 %v1317
      %1321 = vmatprep.subr.bf16.mxu0 0
      %1322 = vmatpush1.bf16.msra.mxu0 0
      %1323 = vmatprep.subr.bf16.mxu0 0
      %1324 = vmatpush1.bf16.msra.mxu0 0
      %1325 = vmatprep.subr.bf16.mxu0 0
      %1326 = vmatpush1.bf16.msra.mxu0 0
      %1327 = vmatprep.subr.bf16.mxu0 0
      %1328 = vmatpush1.bf16.msra.mxu0 0
      %1329 = vmatprep.subr.bf16.mxu0 0
      %1330 = vmatpush1.bf16.msra.mxu0 0
      %1331 = vmatprep.subr.bf16.mxu0 0
      %1332 = vmatpush1.bf16.msra.mxu0 0
      %1333 = vmatprep.subr.bf16.mxu0 0
      %1334 = vmatpush1.bf16.msra.mxu0 0
      %1335 = vmatprep.subr.bf16.mxu0 0
      %1336 = vmatpush1.bf16.msra.mxu0 0
      %1337 = vmatprep.subr.bf16.mxu0 0
      %1338 = vmatpush1.bf16.msra.mxu0 0
      %1339 = vmatprep.subr.bf16.mxu0 0
      %1340 = vmatpush1.bf16.msra.mxu0 0
      %1341 = vmatprep.subr.bf16.mxu0 0
      %1342 = vmatpush1.bf16.msra.mxu0 0
      %1343 = vmatprep.subr.bf16.mxu0 0
      %1344 = vmatpush1.bf16.msra.mxu0 0
      %1345 = vmatprep.subr.bf16.mxu0 0
      %1346 = vmatpush1.bf16.msra.mxu0 0
      %1347 = vmatprep.subr.bf16.mxu0 0
      %1348 = vmatpush1.bf16.msra.mxu0 0
      %1349 = vmatprep.subr.bf16.mxu0 0
      %1350 = vmatpush1.bf16.msra.mxu0 0
      %1351 = vmatprep.mubr.bf16.mxu0 0
      %1352 = vmatmul.mubr.bf16.gmra.mrb[0].mxu0 %v1293
      %v1353 = vpop.f32.mrb[0].mxu0
      %v1354 = vadd.f32 0.0, %v1353
      %v1355 = vpop.f32.mrb[0].mxu0
      %v1356 = vpop.f32.mrb[0].mxu0
      %v1357 = vadd.f32 0.0, %v1356
      %v1358 = vpop.f32.mrb[0].mxu0
      %1359 = vmatprep.mubr.bf16.mxu0 0
      %1360 = vmatmul.mubr.bf16.gmra.mrb[0].mxu0 %v1296
      %v1361 = vpop.f32.mrb[0].mxu0
      %v1362 = vadd.f32 0.0, %v1361
      %v1363 = vpop.f32.mrb[0].mxu0
      %v1364 = vpop.f32.mrb[0].mxu0
      %v1365 = vadd.f32 0.0, %v1364
      %v1366 = vpop.f32.mrb[0].mxu0
      %1367 = vmatprep.mubr.bf16.mxu0 0
      %1368 = vmatmul.mubr.bf16.gmra.mrb[0].mxu0 %v1299
      %v1369 = vpop.f32.mrb[0].mxu0
      %v1370 = vadd.f32 0.0, %v1369
      %v1371 = vpop.f32.mrb[0].mxu0
      %v1372 = vpop.f32.mrb[0].mxu0
      %v1373 = vadd.f32 0.0, %v1372
      %v1374 = vpop.f32.mrb[0].mxu0
      %1375 = vmatprep.mubr.bf16.mxu0 0
      %1376 = vmatmul.mubr.bf16.gmra.mrb[0].mxu0 %v1302
      %v1377 = vpop.f32.mrb[0].mxu0
      %v1378 = vadd.f32 0.0, %v1377
      %v1379 = vpop.f32.mrb[0].mxu0
      %v1380 = vpop.f32.mrb[0].mxu0
      %v1381 = vadd.f32 0.0, %v1380
      %v1382 = vpop.f32.mrb[0].mxu0
      %1383 = vmatprep.mubr.bf16.mxu0 0
      %1384 = vmatmul.mubr.bf16.gmra.mrb[0].mxu0 %v1305
      %v1385 = vpop.f32.mrb[0].mxu0
      %v1386 = vadd.f32 0.0, %v1385
      %v1387 = vpop.f32.mrb[0].mxu0
      %v1388 = vpop.f32.mrb[0].mxu0
      %v1389 = vadd.f32 0.0, %v1388
      %v1390 = vpop.f32.mrb[0].mxu0
      %1391 = vmatprep.mubr.bf16.mxu0 0
      %1392 = vmatmul.mubr.bf16.gmra.mrb[0].mxu0 %v1308
      %v1393 = vpop.f32.mrb[0].mxu0
      %v1394 = vadd.f32 0.0, %v1393
      %v1395 = vpop.f32.mrb[0].mxu0
      %v1396 = vpop.f32.mrb[0].mxu0
      %v1397 = vadd.f32 0.0, %v1396
      %v1398 = vpop.f32.mrb[0].mxu0
      %1399 = vmatprep.mubr.bf16.mxu0 0
      %1400 = vmatmul.mubr.bf16.gmra.mrb[0].mxu0 %v1311
      %v1401 = vpop.f32.mrb[0].mxu0
      %v1402 = vadd.f32 0.0, %v1401
      %v1403 = vpop.f32.mrb[0].mxu0
      %v1404 = vpop.f32.mrb[0].mxu0
      %v1405 = vadd.f32 0.0, %v1404
      %v1406 = vpop.f32.mrb[0].mxu0
      %1407 = vmatprep.mubr.bf16.mxu0 0
      %1408 = vmatmul.mubr.bf16.gmra.mrb[0].mxu0 %v1314
      %v1409 = vpop.f32.mrb[0].mxu0
      %v1410 = vadd.f32 0.0, %v1409
      %v1411 = vpop.f32.mrb[0].mxu0
      %v1412 = vpop.f32.mrb[0].mxu0
      %v1413 = vadd.f32 0.0, %v1412
      %v1414 = vpop.f32.mrb[0].mxu0
      %1415 = vdwg.mxu0
      %v1432 = vunpack.c.l.b16 %v1048
      %v1433 = vunpack.c.l.b16 %v1049
      %v1434 = vunpack.c.l.b16 %v1050
      %v1435 = vunpack.c.l.b16 %v1051
      %v1436 = vunpack.c.l.b16 %v1052
      %v1437 = vunpack.c.l.b16 %v1053
      %v1438 = vunpack.c.l.b16 %v1054
      %v1439 = vunpack.c.l.b16 %v1055
      %v1440 = vunpack.c.l.b16 %v1056
      %v1441 = vunpack.c.l.b16 %v1057
      %v1442 = vunpack.c.l.b16 %v1058
      %v1443 = vunpack.c.l.b16 %v1059
      %v1444 = vunpack.c.l.b16 %v1060
      %v1445 = vunpack.c.l.b16 %v1061
      %v1446 = vunpack.c.l.b16 %v1062
      %v1447 = vunpack.c.l.b16 %v1063
      %v1448 = vpack.c.b16 %v1433, %v1432
      %v1449 = vpack.c.b16 %v1435, %v1434
      %v1450 = vpack.c.b16 %v1437, %v1436
      %v1451 = vpack.c.b16 %v1439, %v1438
      %v1452 = vpack.c.b16 %v1441, %v1440
      %v1453 = vpack.c.b16 %v1443, %v1442
      %v1454 = vpack.c.b16 %v1445, %v1444
      %v1455 = vpack.c.b16 %v1447, %v1446
      %v1457 = vsel %vm489, %v1448, 0
      %v1460 = vsel %vm489, %v1449, 0
      %v1463 = vsel %vm489, %v1450, 0
      %v1466 = vsel %vm489, %v1451, 0
      %v1469 = vsel %vm489, %v1452, 0
      %v1472 = vsel %vm489, %v1453, 0
      %v1475 = vsel %vm489, %v1454, 0
      %v1478 = vsel %vm489, %v1455, 0
      %v1481 = vsel %vm514, %v1065, 0
      %1483 = vmatprep.subr.bf16.mxu0 0
      %1484 = vmatpush1.bf16.msra.mxu0 %v1481
      %1485 = vmatprep.subr.bf16.mxu0 0
      %1486 = vmatpush1.bf16.msra.mxu0 0
      %1487 = vmatprep.subr.bf16.mxu0 0
      %1488 = vmatpush1.bf16.msra.mxu0 0
      %1489 = vmatprep.subr.bf16.mxu0 0
      %1490 = vmatpush1.bf16.msra.mxu0 0
      %1491 = vmatprep.subr.bf16.mxu0 0
      %1492 = vmatpush1.bf16.msra.mxu0 0
      %1493 = vmatprep.subr.bf16.mxu0 0
      %1494 = vmatpush1.bf16.msra.mxu0 0
      %1495 = vmatprep.subr.bf16.mxu0 0
      %1496 = vmatpush1.bf16.msra.mxu0 0
      %1497 = vmatprep.subr.bf16.mxu0 0
      %1498 = vmatpush1.bf16.msra.mxu0 0
      %1499 = vmatprep.subr.bf16.mxu0 0
      %1500 = vmatpush1.bf16.msra.mxu0 0
      %1501 = vmatprep.subr.bf16.mxu0 0
      %1502 = vmatpush1.bf16.msra.mxu0 0
      %1503 = vmatprep.subr.bf16.mxu0 0
      %1504 = vmatpush1.bf16.msra.mxu0 0
      %1505 = vmatprep.subr.bf16.mxu0 0
      %1506 = vmatpush1.bf16.msra.mxu0 0
      %1507 = vmatprep.subr.bf16.mxu0 0
      %1508 = vmatpush1.bf16.msra.mxu0 0
      %1509 = vmatprep.subr.bf16.mxu0 0
      %1510 = vmatpush1.bf16.msra.mxu0 0
      %1511 = vmatprep.subr.bf16.mxu0 0
      %1512 = vmatpush1.bf16.msra.mxu0 0
      %1513 = vmatprep.subr.bf16.mxu0 0
      %1514 = vmatpush1.bf16.msra.mxu0 0
      %1515 = vmatprep.mubr.bf16.mxu0 0
      %1516 = vmatmul.mubr.bf16.gmra.mrb[0].mxu0 %v1457
      %v1517 = vpop.f32.mrb[0].mxu0
      %v1518 = vadd.f32 %v1354, %v1517
      %v1519 = vpop.f32.mrb[0].mxu0
      %v1520 = vpop.f32.mrb[0].mxu0
      %v1521 = vadd.f32 %v1357, %v1520
      %v1522 = vpop.f32.mrb[0].mxu0
      %1523 = vmatprep.mubr.bf16.mxu0 0
      %1524 = vmatmul.mubr.bf16.gmra.mrb[0].mxu0 %v1460
      %v1525 = vpop.f32.mrb[0].mxu0
      %v1526 = vadd.f32 %v1362, %v1525
      %v1527 = vpop.f32.mrb[0].mxu0
      %v1528 = vpop.f32.mrb[0].mxu0
      %v1529 = vadd.f32 %v1365, %v1528
      %v1530 = vpop.f32.mrb[0].mxu0
      %1531 = vmatprep.mubr.bf16.mxu0 0
      %1532 = vmatmul.mubr.bf16.gmra.mrb[0].mxu0 %v1463
      %v1533 = vpop.f32.mrb[0].mxu0
      %v1534 = vadd.f32 %v1370, %v1533
      %v1535 = vpop.f32.mrb[0].mxu0
      %v1536 = vpop.f32.mrb[0].mxu0
      %v1537 = vadd.f32 %v1373, %v1536
      %v1538 = vpop.f32.mrb[0].mxu0
      %1539 = vmatprep.mubr.bf16.mxu0 0
      %1540 = vmatmul.mubr.bf16.gmra.mrb[0].mxu0 %v1466
      %v1541 = vpop.f32.mrb[0].mxu0
      %v1542 = vadd.f32 %v1378, %v1541
      %v1543 = vpop.f32.mrb[0].mxu0
      %v1544 = vpop.f32.mrb[0].mxu0
      %v1545 = vadd.f32 %v1381, %v1544
      %v1546 = vpop.f32.mrb[0].mxu0
      %1547 = vmatprep.mubr.bf16.mxu0 0
      %1548 = vmatmul.mubr.bf16.gmra.mrb[0].mxu0 %v1469
      %v1549 = vpop.f32.mrb[0].mxu0
      %v1550 = vadd.f32 %v1386, %v1549
      %v1551 = vpop.f32.mrb[0].mxu0
      %v1552 = vpop.f32.mrb[0].mxu0
      %v1553 = vadd.f32 %v1389, %v1552
      %v1554 = vpop.f32.mrb[0].mxu0
      %1555 = vmatprep.mubr.bf16.mxu0 0
      %1556 = vmatmul.mubr.bf16.gmra.mrb[0].mxu0 %v1472
      %v1557 = vpop.f32.mrb[0].mxu0
      %v1558 = vadd.f32 %v1394, %v1557
      %v1559 = vpop.f32.mrb[0].mxu0
      %v1560 = vpop.f32.mrb[0].mxu0
      %v1561 = vadd.f32 %v1397, %v1560
      %v1562 = vpop.f32.mrb[0].mxu0
      %1563 = vmatprep.mubr.bf16.mxu0 0
      %1564 = vmatmul.mubr.bf16.gmra.mrb[0].mxu0 %v1475
      %v1565 = vpop.f32.mrb[0].mxu0
      %v1566 = vadd.f32 %v1402, %v1565
      %v1567 = vpop.f32.mrb[0].mxu0
      %v1568 = vpop.f32.mrb[0].mxu0
      %v1569 = vadd.f32 %v1405, %v1568
      %v1570 = vpop.f32.mrb[0].mxu0
      %1571 = vmatprep.mubr.bf16.mxu0 0
      %1572 = vmatmul.mubr.bf16.gmra.mrb[0].mxu0 %v1478
      %v1573 = vpop.f32.mrb[0].mxu0
      %v1574 = vadd.f32 %v1410, %v1573
      %v1575 = vpop.f32.mrb[0].mxu0
      %v1576 = vpop.f32.mrb[0].mxu0
      %v1577 = vadd.f32 %v1413, %v1576
      %v1578 = vpop.f32.mrb[0].mxu0
      %1579 = vdwg.mxu0
      %v1580 = vld [vmem:[%s1047] sm:$0xe]
      %v1581 = vld [vmem:[%s1047 + $0xc] sm:$0xe]
      %v1582 = vld [vmem:[%s1047 + $0x18] sm:$0xe]
      %v1583 = vld [vmem:[%s1047 + $0x24] sm:$0xe]
      %v1584 = vld [vmem:[%s1047 + $0x30] sm:$0xe]
      %v1585 = vld [vmem:[%s1047 + $0x3c] sm:$0xe]
      %v1586 = vld [vmem:[%s1047 + $0x48] sm:$0xe]
      %v1587 = vld [vmem:[%s1047 + $0x54] sm:$0xe]
      %v1604 = vrot.slane %v1580, 5
      %v1605 = vrot.slane %v1604, 4
      %v1606 = vrot.slane %v1049, 5
      %v1607 = vsel %vm805, %v1605, %v1606
      %v1608 = vrot.slane %v1606, 4
      %v1609 = vrot.slane %v1066, 5
      %v1610 = vsel %vm805, %v1608, %v1609
      %v1611 = vrot.slane %v1581, 5
      %v1612 = vrot.slane %v1611, 4
      %v1613 = vrot.slane %v1051, 5
      %v1614 = vsel %vm805, %v1612, %v1613
      %v1615 = vrot.slane %v1613, 4
      %v1616 = vrot.slane %v1067, 5
      %v1617 = vsel %vm805, %v1615, %v1616
      %v1618 = vrot.slane %v1582, 5
      %v1619 = vrot.slane %v1618, 4
      %v1620 = vrot.slane %v1053, 5
      %v1621 = vsel %vm805, %v1619, %v1620
      %v1622 = vrot.slane %v1620, 4
      %v1623 = vrot.slane %v1068, 5
      %v1624 = vsel %vm805, %v1622, %v1623
      %v1625 = vrot.slane %v1583, 5
      %v1626 = vrot.slane %v1625, 4
      %v1627 = vrot.slane %v1055, 5
      %v1628 = vsel %vm805, %v1626, %v1627
      %v1629 = vrot.slane %v1627, 4
      %v1630 = vrot.slane %v1069, 5
      %v1631 = vsel %vm805, %v1629, %v1630
      %v1632 = vrot.slane %v1584, 5
      %v1633 = vrot.slane %v1632, 4
      %v1634 = vrot.slane %v1057, 5
      %v1635 = vsel %vm805, %v1633, %v1634
      %v1636 = vrot.slane %v1634, 4
      %v1637 = vrot.slane %v1070, 5
      %v1638 = vsel %vm805, %v1636, %v1637
      %v1639 = vrot.slane %v1585, 5
      %v1640 = vrot.slane %v1639, 4
      %v1641 = vrot.slane %v1059, 5
      %v1642 = vsel %vm805, %v1640, %v1641
      %v1643 = vrot.slane %v1641, 4
      %v1644 = vrot.slane %v1071, 5
      %v1645 = vsel %vm805, %v1643, %v1644
      %v1646 = vrot.slane %v1586, 5
      %v1647 = vrot.slane %v1646, 4
      %v1648 = vrot.slane %v1061, 5
      %v1649 = vsel %vm805, %v1647, %v1648
      %v1650 = vrot.slane %v1648, 4
      %v1651 = vrot.slane %v1072, 5
      %v1652 = vsel %vm805, %v1650, %v1651
      %v1653 = vrot.slane %v1587, 5
      %v1654 = vrot.slane %v1653, 4
      %v1655 = vrot.slane %v1063, 5
      %v1656 = vsel %vm805, %v1654, %v1655
      %v1657 = vrot.slane %v1655, 4
      %v1658 = vrot.slane %v1073, 5
      %v1659 = vsel %vm805, %v1657, %v1658
      %s1660 = scalar_lea.vmem %s1, 10
      %v1661 = vld [vmem:[%s1660] sm:$0x3]
      %v1662 = vunpack.c.l.b16 %v1607
      %v1663 = vunpack.c.l.b16 %v1610
      %v1664 = vunpack.c.l.b16 %v1614
      %v1665 = vunpack.c.l.b16 %v1617
      %v1666 = vunpack.c.l.b16 %v1621
      %v1667 = vunpack.c.l.b16 %v1624
      %v1668 = vunpack.c.l.b16 %v1628
      %v1669 = vunpack.c.l.b16 %v1631
      %v1670 = vunpack.c.l.b16 %v1635
      %v1671 = vunpack.c.l.b16 %v1638
      %v1672 = vunpack.c.l.b16 %v1642
      %v1673 = vunpack.c.l.b16 %v1645
      %v1674 = vunpack.c.l.b16 %v1649
      %v1675 = vunpack.c.l.b16 %v1652
      %v1676 = vunpack.c.l.b16 %v1656
      %v1677 = vunpack.c.l.b16 %v1659
      %v1678 = vpack.c.b16 %v1663, %v1662
      %v1679 = vpack.c.b16 %v1665, %v1664
      %v1680 = vpack.c.b16 %v1667, %v1666
      %v1681 = vpack.c.b16 %v1669, %v1668
      %v1682 = vpack.c.b16 %v1671, %v1670
      %v1683 = vpack.c.b16 %v1673, %v1672
      %v1684 = vpack.c.b16 %v1675, %v1674
      %v1685 = vpack.c.b16 %v1677, %v1676
      %v1687 = vsel %vm489, %v1678, 0
      %v1690 = vsel %vm489, %v1679, 0
      %v1693 = vsel %vm489, %v1680, 0
      %v1696 = vsel %vm489, %v1681, 0
      %v1699 = vsel %vm489, %v1682, 0
      %v1702 = vsel %vm489, %v1683, 0
      %v1705 = vsel %vm489, %v1684, 0
      %v1708 = vsel %vm489, %v1685, 0
      %v1711 = vsel %vm514, %v1661, 0
      %1713 = vmatprep.subr.bf16.mxu0 0
      %1714 = vmatpush1.bf16.msra.mxu0 %v1711
      %1715 = vmatprep.subr.bf16.mxu0 0
      %1716 = vmatpush1.bf16.msra.mxu0 0
      %1717 = vmatprep.subr.bf16.mxu0 0
      %1718 = vmatpush1.bf16.msra.mxu0 0
      %1719 = vmatprep.subr.bf16.mxu0 0
      %1720 = vmatpush1.bf16.msra.mxu0 0
      %1721 = vmatprep.subr.bf16.mxu0 0
      %1722 = vmatpush1.bf16.msra.mxu0 0
      %1723 = vmatprep.subr.bf16.mxu0 0
      %1724 = vmatpush1.bf16.msra.mxu0 0
      %1725 = vmatprep.subr.bf16.mxu0 0
      %1726 = vmatpush1.bf16.msra.mxu0 0
      %1727 = vmatprep.subr.bf16.mxu0 0
      %1728 = vmatpush1.bf16.msra.mxu0 0
      %1729 = vmatprep.subr.bf16.mxu0 0
      %1730 = vmatpush1.bf16.msra.mxu0 0
      %1731 = vmatprep.subr.bf16.mxu0 0
      %1732 = vmatpush1.bf16.msra.mxu0 0
      %1733 = vmatprep.subr.bf16.mxu0 0
      %1734 = vmatpush1.bf16.msra.mxu0 0
      %1735 = vmatprep.subr.bf16.mxu0 0
      %1736 = vmatpush1.bf16.msra.mxu0 0
      %1737 = vmatprep.subr.bf16.mxu0 0
      %1738 = vmatpush1.bf16.msra.mxu0 0
      %1739 = vmatprep.subr.bf16.mxu0 0
      %1740 = vmatpush1.bf16.msra.mxu0 0
      %1741 = vmatprep.subr.bf16.mxu0 0
      %1742 = vmatpush1.bf16.msra.mxu0 0
      %1743 = vmatprep.subr.bf16.mxu0 0
      %1744 = vmatpush1.bf16.msra.mxu0 0
      %1745 = vmatprep.mubr.bf16.mxu0 0
      %1746 = vmatmul.mubr.bf16.gmra.mrb[0].mxu0 %v1687
      %v1747 = vpop.f32.mrb[0].mxu0
      %v1748 = vadd.f32 0.0, %v1747
      %v1749 = vpop.f32.mrb[0].mxu0
      %v1750 = vpop.f32.mrb[0].mxu0
      %v1751 = vadd.f32 0.0, %v1750
      %v1752 = vpop.f32.mrb[0].mxu0
      %1753 = vmatprep.mubr.bf16.mxu0 0
      %1754 = vmatmul.mubr.bf16.gmra.mrb[0].mxu0 %v1690
      %v1755 = vpop.f32.mrb[0].mxu0
      %v1756 = vadd.f32 0.0, %v1755
      %v1757 = vpop.f32.mrb[0].mxu0
      %v1758 = vpop.f32.mrb[0].mxu0
      %v1759 = vadd.f32 0.0, %v1758
      %v1760 = vpop.f32.mrb[0].mxu0
      %1761 = vmatprep.mubr.bf16.mxu0 0
      %1762 = vmatmul.mubr.bf16.gmra.mrb[0].mxu0 %v1693
      %v1763 = vpop.f32.mrb[0].mxu0
      %v1764 = vadd.f32 0.0, %v1763
      %v1765 = vpop.f32.mrb[0].mxu0
      %v1766 = vpop.f32.mrb[0].mxu0
      %v1767 = vadd.f32 0.0, %v1766
      %v1768 = vpop.f32.mrb[0].mxu0
      %1769 = vmatprep.mubr.bf16.mxu0 0
      %1770 = vmatmul.mubr.bf16.gmra.mrb[0].mxu0 %v1696
      %v1771 = vpop.f32.mrb[0].mxu0
      %v1772 = vadd.f32 0.0, %v1771
      %v1773 = vpop.f32.mrb[0].mxu0
      %v1774 = vpop.f32.mrb[0].mxu0
      %v1775 = vadd.f32 0.0, %v1774
      %v1776 = vpop.f32.mrb[0].mxu0
      %1777 = vmatprep.mubr.bf16.mxu0 0
      %1778 = vmatmul.mubr.bf16.gmra.mrb[0].mxu0 %v1699
      %v1779 = vpop.f32.mrb[0].mxu0
      %v1780 = vadd.f32 0.0, %v1779
      %v1781 = vpop.f32.mrb[0].mxu0
      %v1782 = vpop.f32.mrb[0].mxu0
      %v1783 = vadd.f32 0.0, %v1782
      %v1784 = vpop.f32.mrb[0].mxu0
      %1785 = vmatprep.mubr.bf16.mxu0 0
      %1786 = vmatmul.mubr.bf16.gmra.mrb[0].mxu0 %v1702
      %v1787 = vpop.f32.mrb[0].mxu0
      %v1788 = vadd.f32 0.0, %v1787
      %v1789 = vpop.f32.mrb[0].mxu0
      %v1790 = vpop.f32.mrb[0].mxu0
      %v1791 = vadd.f32 0.0, %v1790
      %v1792 = vpop.f32.mrb[0].mxu0
      %1793 = vmatprep.mubr.bf16.mxu0 0
      %1794 = vmatmul.mubr.bf16.gmra.mrb[0].mxu0 %v1705
      %v1795 = vpop.f32.mrb[0].mxu0
      %v1796 = vadd.f32 0.0, %v1795
      %v1797 = vpop.f32.mrb[0].mxu0
      %v1798 = vpop.f32.mrb[0].mxu0
      %v1799 = vadd.f32 0.0, %v1798
      %v1800 = vpop.f32.mrb[0].mxu0
      %1801 = vmatprep.mubr.bf16.mxu0 0
      %1802 = vmatmul.mubr.bf16.gmra.mrb[0].mxu0 %v1708
      %v1803 = vpop.f32.mrb[0].mxu0
      %v1804 = vadd.f32 0.0, %v1803
      %v1805 = vpop.f32.mrb[0].mxu0
      %v1806 = vpop.f32.mrb[0].mxu0
      %v1807 = vadd.f32 0.0, %v1806
      %v1808 = vpop.f32.mrb[0].mxu0
      %1809 = vdwg.mxu0
      %v1810 = vadd.f32 %v1518, %v1748
      %v1811 = vadd.f32 %v1521, %v1751
      %v1812 = vadd.f32 %v1526, %v1756
      %v1813 = vadd.f32 %v1529, %v1759
      %v1814 = vadd.f32 %v1534, %v1764
      %v1815 = vadd.f32 %v1537, %v1767
      %v1816 = vadd.f32 %v1542, %v1772
      %v1817 = vadd.f32 %v1545, %v1775
      %v1818 = vadd.f32 %v1550, %v1780
      %v1819 = vadd.f32 %v1553, %v1783
      %v1820 = vadd.f32 %v1558, %v1788
      %v1821 = vadd.f32 %v1561, %v1791
      %v1822 = vadd.f32 %v1566, %v1796
      %v1823 = vadd.f32 %v1569, %v1799
      %v1824 = vadd.f32 %v1574, %v1804
      %v1825 = vadd.f32 %v1577, %v1807
      %v1826 = vld [vmem:[#allocation2] sm:$0xff]
      %v1827 = vld [vmem:[#allocation2 + $0x8] sm:$0xff]
      %v1828 = vld [vmem:[#allocation2 + $0x10] sm:$0xff]
      %v1829 = vld [vmem:[#allocation2 + $0x18] sm:$0xff]
      %v1830 = vld [vmem:[#allocation2 + $0x20] sm:$0xff]
      %v1831 = vld [vmem:[#allocation2 + $0x28] sm:$0xff]
      %v1832 = vld [vmem:[#allocation2 + $0x30] sm:$0xff]
      %v1833 = vld [vmem:[#allocation2 + $0x38] sm:$0xff]
      %v1834 = vld [vmem:[#allocation2 + $0x40] sm:$0xff]
      %v1835 = vld [vmem:[#allocation2 + $0x48] sm:$0xff]
      %v1836 = vld [vmem:[#allocation2 + $0x50] sm:$0xff]
      %v1837 = vld [vmem:[#allocation2 + $0x58] sm:$0xff]
      %v1838 = vld [vmem:[#allocation2 + $0x60] sm:$0xff]
      %v1839 = vld [vmem:[#allocation2 + $0x68] sm:$0xff]
      %v1840 = vld [vmem:[#allocation2 + $0x70] sm:$0xff]
      %v1841 = vld [vmem:[#allocation2 + $0x78] sm:$0xff]
      %v1842 = vadd.f32 %v1826, %v1810
      %v1843 = vadd.f32 %v1827, %v1811
      %v1844 = vadd.f32 %v1828, %v1812
      %v1845 = vadd.f32 %v1829, %v1813
      %v1846 = vadd.f32 %v1830, %v1814
      %v1847 = vadd.f32 %v1831, %v1815
      %v1848 = vadd.f32 %v1832, %v1816
      %v1849 = vadd.f32 %v1833, %v1817
      %v1850 = vadd.f32 %v1834, %v1818
      %v1851 = vadd.f32 %v1835, %v1819
      %v1852 = vadd.f32 %v1836, %v1820
      %v1853 = vadd.f32 %v1837, %v1821
      %v1854 = vadd.f32 %v1838, %v1822
      %v1855 = vadd.f32 %v1839, %v1823
      %v1856 = vadd.f32 %v1840, %v1824
      %v1857 = vadd.f32 %v1841, %v1825
      %1858 = vst [vmem:[#allocation2] sm:$0xff] %v1842
      %1859 = vst [vmem:[#allocation2 + $0x8] sm:$0xff] %v1843
      %1860 = vst [vmem:[#allocation2 + $0x10] sm:$0xff] %v1844
      %1861 = vst [vmem:[#allocation2 + $0x18] sm:$0xff] %v1845
      %1862 = vst [vmem:[#allocation2 + $0x20] sm:$0xff] %v1846
      %1863 = vst [vmem:[#allocation2 + $0x28] sm:$0xff] %v1847
      %1864 = vst [vmem:[#allocation2 + $0x30] sm:$0xff] %v1848
      %1865 = vst [vmem:[#allocation2 + $0x38] sm:$0xff] %v1849
      %1866 = vst [vmem:[#allocation2 + $0x40] sm:$0xff] %v1850
      %1867 = vst [vmem:[#allocation2 + $0x48] sm:$0xff] %v1851
      %1868 = vst [vmem:[#allocation2 + $0x50] sm:$0xff] %v1852
      %1869 = vst [vmem:[#allocation2 + $0x58] sm:$0xff] %v1853
      %1870 = vst [vmem:[#allocation2 + $0x60] sm:$0xff] %v1854
      %1871 = vst [vmem:[#allocation2 + $0x68] sm:$0xff] %v1855
      %1872 = vst [vmem:[#allocation2 + $0x70] sm:$0xff] %v1856
      %1873 = vst [vmem:[#allocation2 + $0x78] sm:$0xff] %v1857
      %s1874 = sadd.s32 %s239, 2
      %s1875 = smul.u32 %s1874, 3
      %s1876 = smul.addr %s1875, 4
      %s1877 = scalar_lea.vmem %s221, %s1876
      %v1878 = vld [vmem:[%s1877] sm:$0xf]
      %v1879 = vld [vmem:[%s1877 + $0x4] sm:$0xf]
      %v1880 = vld [vmem:[%s1877 + $0xc] sm:$0xf]
      %v1881 = vld [vmem:[%s1877 + $0x10] sm:$0xf]
      %v1882 = vld [vmem:[%s1877 + $0x18] sm:$0xf]
      %v1883 = vld [vmem:[%s1877 + $0x1c] sm:$0xf]
      %v1884 = vld [vmem:[%s1877 + $0x24] sm:$0xf]
      %v1885 = vld [vmem:[%s1877 + $0x28] sm:$0xf]
      %v1886 = vld [vmem:[%s1877 + $0x30] sm:$0xf]
      %v1887 = vld [vmem:[%s1877 + $0x34] sm:$0xf]
      %v1888 = vld [vmem:[%s1877 + $0x3c] sm:$0xf]
      %v1889 = vld [vmem:[%s1877 + $0x40] sm:$0xf]
      %v1890 = vld [vmem:[%s1877 + $0x48] sm:$0xf]
      %v1891 = vld [vmem:[%s1877 + $0x4c] sm:$0xf]
      %v1892 = vld [vmem:[%s1877 + $0x54] sm:$0xf]
      %v1893 = vld [vmem:[%s1877 + $0x58] sm:$0xf]
      %s1894 = scalar_lea.vmem %s1, 12
      %v1895 = vld [vmem:[%s1894] sm:$0x3]
      %v1896 = vld [vmem:[%s1877 + $0x8] sm:$0x1]
      %v1897 = vld [vmem:[%s1877 + $0x14] sm:$0x1]
      %v1898 = vld [vmem:[%s1877 + $0x20] sm:$0x1]
      %v1899 = vld [vmem:[%s1877 + $0x2c] sm:$0x1]
      %v1900 = vld [vmem:[%s1877 + $0x38] sm:$0x1]
      %v1901 = vld [vmem:[%s1877 + $0x44] sm:$0x1]
      %v1902 = vld [vmem:[%s1877 + $0x50] sm:$0x1]
      %v1903 = vld [vmem:[%s1877 + $0x5c] sm:$0x1]
      %v1905 = vshrl.u32 %v1878, 16
      %v1907 = vrot.slane %v1905, 4
      %v1908 = vshll.u32 %v1878, 16
      %v1910 = vrot.slane %v1908, 5
      %v1911 = vor.u32 %v1907, %v1910
      %v1912 = vrot.slane %v1911, 4
      %v1914 = vshll.u32 %v1879, 16
      %v1916 = vrot.slane %v1914, 5
      %v1917 = vsel %vm270, %v1912, %v1916
      %v1918 = vshrl.u32 %v1879, 16
      %v1920 = vrot.slane %v1918, 4
      %v1921 = vor.u32 %v1920, %v1916
      %v1922 = vrot.slane %v1921, 4
      %v1924 = vshll.u32 %v1896, 16
      %v1926 = vrot.slane %v1924, 5
      %v1927 = vsel %vm270, %v1922, %v1926
      %v1929 = vshrl.u32 %v1880, 16
      %v1931 = vrot.slane %v1929, 4
      %v1932 = vshll.u32 %v1880, 16
      %v1934 = vrot.slane %v1932, 5
      %v1935 = vor.u32 %v1931, %v1934
      %v1936 = vrot.slane %v1935, 4
      %v1938 = vshll.u32 %v1881, 16
      %v1940 = vrot.slane %v1938, 5
      %v1941 = vsel %vm270, %v1936, %v1940
      %v1942 = vshrl.u32 %v1881, 16
      %v1944 = vrot.slane %v1942, 4
      %v1945 = vor.u32 %v1944, %v1940
      %v1946 = vrot.slane %v1945, 4
      %v1948 = vshll.u32 %v1897, 16
      %v1950 = vrot.slane %v1948, 5
      %v1951 = vsel %vm270, %v1946, %v1950
      %v1953 = vshrl.u32 %v1882, 16
      %v1955 = vrot.slane %v1953, 4
      %v1956 = vshll.u32 %v1882, 16
      %v1958 = vrot.slane %v1956, 5
      %v1959 = vor.u32 %v1955, %v1958
      %v1960 = vrot.slane %v1959, 4
      %v1962 = vshll.u32 %v1883, 16
      %v1964 = vrot.slane %v1962, 5
      %v1965 = vsel %vm270, %v1960, %v1964
      %v1966 = vshrl.u32 %v1883, 16
      %v1968 = vrot.slane %v1966, 4
      %v1969 = vor.u32 %v1968, %v1964
      %v1970 = vrot.slane %v1969, 4
      %v1972 = vshll.u32 %v1898, 16
      %v1974 = vrot.slane %v1972, 5
      %v1975 = vsel %vm270, %v1970, %v1974
      %v1977 = vshrl.u32 %v1884, 16
      %v1979 = vrot.slane %v1977, 4
      %v1980 = vshll.u32 %v1884, 16
      %v1982 = vrot.slane %v1980, 5
      %v1983 = vor.u32 %v1979, %v1982
      %v1984 = vrot.slane %v1983, 4
      %v1986 = vshll.u32 %v1885, 16
      %v1988 = vrot.slane %v1986, 5
      %v1989 = vsel %vm270, %v1984, %v1988
      %v1990 = vshrl.u32 %v1885, 16
      %v1992 = vrot.slane %v1990, 4
      %v1993 = vor.u32 %v1992, %v1988
      %v1994 = vrot.slane %v1993, 4
      %v1996 = vshll.u32 %v1899, 16
      %v1998 = vrot.slane %v1996, 5
      %v1999 = vsel %vm270, %v1994, %v1998
      %v2001 = vshrl.u32 %v1886, 16
      %v2003 = vrot.slane %v2001, 4
      %v2004 = vshll.u32 %v1886, 16
      %v2006 = vrot.slane %v2004, 5
      %v2007 = vor.u32 %v2003, %v2006
      %v2008 = vrot.slane %v2007, 4
      %v2010 = vshll.u32 %v1887, 16
      %v2012 = vrot.slane %v2010, 5
      %v2013 = vsel %vm270, %v2008, %v2012
      %v2014 = vshrl.u32 %v1887, 16
      %v2016 = vrot.slane %v2014, 4
      %v2017 = vor.u32 %v2016, %v2012
      %v2018 = vrot.slane %v2017, 4
      %v2020 = vshll.u32 %v1900, 16
      %v2022 = vrot.slane %v2020, 5
      %v2023 = vsel %vm270, %v2018, %v2022
      %v2025 = vshrl.u32 %v1888, 16
      %v2027 = vrot.slane %v2025, 4
      %v2028 = vshll.u32 %v1888, 16
      %v2030 = vrot.slane %v2028, 5
      %v2031 = vor.u32 %v2027, %v2030
      %v2032 = vrot.slane %v2031, 4
      %v2034 = vshll.u32 %v1889, 16
      %v2036 = vrot.slane %v2034, 5
      %v2037 = vsel %vm270, %v2032, %v2036
      %v2038 = vshrl.u32 %v1889, 16
      %v2040 = vrot.slane %v2038, 4
      %v2041 = vor.u32 %v2040, %v2036
      %v2042 = vrot.slane %v2041, 4
      %v2044 = vshll.u32 %v1901, 16
      %v2046 = vrot.slane %v2044, 5
      %v2047 = vsel %vm270, %v2042, %v2046
      %v2049 = vshrl.u32 %v1890, 16
      %v2051 = vrot.slane %v2049, 4
      %v2052 = vshll.u32 %v1890, 16
      %v2054 = vrot.slane %v2052, 5
      %v2055 = vor.u32 %v2051, %v2054
      %v2056 = vrot.slane %v2055, 4
      %v2058 = vshll.u32 %v1891, 16
      %v2060 = vrot.slane %v2058, 5
      %v2061 = vsel %vm270, %v2056, %v2060
      %v2062 = vshrl.u32 %v1891, 16
      %v2064 = vrot.slane %v2062, 4
      %v2065 = vor.u32 %v2064, %v2060
      %v2066 = vrot.slane %v2065, 4
      %v2068 = vshll.u32 %v1902, 16
      %v2070 = vrot.slane %v2068, 5
      %v2071 = vsel %vm270, %v2066, %v2070
      %v2073 = vshrl.u32 %v1892, 16
      %v2075 = vrot.slane %v2073, 4
      %v2076 = vshll.u32 %v1892, 16
      %v2078 = vrot.slane %v2076, 5
      %v2079 = vor.u32 %v2075, %v2078
      %v2080 = vrot.slane %v2079, 4
      %v2082 = vshll.u32 %v1893, 16
      %v2084 = vrot.slane %v2082, 5
      %v2085 = vsel %vm270, %v2080, %v2084
      %v2086 = vshrl.u32 %v1893, 16
      %v2088 = vrot.slane %v2086, 4
      %v2089 = vor.u32 %v2088, %v2084
      %v2090 = vrot.slane %v2089, 4
      %v2092 = vshll.u32 %v1903, 16
      %v2094 = vrot.slane %v2092, 5
      %v2095 = vsel %vm270, %v2090, %v2094
      %s2096 = scalar_lea.vmem %s1, 14
      %v2097 = vld [vmem:[%s2096] sm:$0x3]
      %v2098 = vunpack.c.l.b16 %v1917
      %v2099 = vunpack.c.l.b16 %v1927
      %v2100 = vunpack.c.l.b16 %v1941
      %v2101 = vunpack.c.l.b16 %v1951
      %v2102 = vunpack.c.l.b16 %v1965
      %v2103 = vunpack.c.l.b16 %v1975
      %v2104 = vunpack.c.l.b16 %v1989
      %v2105 = vunpack.c.l.b16 %v1999
      %v2106 = vunpack.c.l.b16 %v2013
      %v2107 = vunpack.c.l.b16 %v2023
      %v2108 = vunpack.c.l.b16 %v2037
      %v2109 = vunpack.c.l.b16 %v2047
      %v2110 = vunpack.c.l.b16 %v2061
      %v2111 = vunpack.c.l.b16 %v2071
      %v2112 = vunpack.c.l.b16 %v2085
      %v2113 = vunpack.c.l.b16 %v2095
      %v2114 = vpack.c.b16 %v2099, %v2098
      %v2115 = vpack.c.b16 %v2101, %v2100
      %v2116 = vpack.c.b16 %v2103, %v2102
      %v2117 = vpack.c.b16 %v2105, %v2104
      %v2118 = vpack.c.b16 %v2107, %v2106
      %v2119 = vpack.c.b16 %v2109, %v2108
      %v2120 = vpack.c.b16 %v2111, %v2110
      %v2121 = vpack.c.b16 %v2113, %v2112
      %v2123 = vsel %vm489, %v2114, 0
      %v2126 = vsel %vm489, %v2115, 0
      %v2129 = vsel %vm489, %v2116, 0
      %v2132 = vsel %vm489, %v2117, 0
      %v2135 = vsel %vm489, %v2118, 0
      %v2138 = vsel %vm489, %v2119, 0
      %v2141 = vsel %vm489, %v2120, 0
      %v2144 = vsel %vm489, %v2121, 0
      %v2147 = vsel %vm514, %v2097, 0
      %2149 = vmatprep.subr.bf16.mxu0 0
      %2150 = vmatpush1.bf16.msra.mxu0 %v2147
      %2151 = vmatprep.subr.bf16.mxu0 0
      %2152 = vmatpush1.bf16.msra.mxu0 0
      %2153 = vmatprep.subr.bf16.mxu0 0
      %2154 = vmatpush1.bf16.msra.mxu0 0
      %2155 = vmatprep.subr.bf16.mxu0 0
      %2156 = vmatpush1.bf16.msra.mxu0 0
      %2157 = vmatprep.subr.bf16.mxu0 0
      %2158 = vmatpush1.bf16.msra.mxu0 0
      %2159 = vmatprep.subr.bf16.mxu0 0
      %2160 = vmatpush1.bf16.msra.mxu0 0
      %2161 = vmatprep.subr.bf16.mxu0 0
      %2162 = vmatpush1.bf16.msra.mxu0 0
      %2163 = vmatprep.subr.bf16.mxu0 0
      %2164 = vmatpush1.bf16.msra.mxu0 0
      %2165 = vmatprep.subr.bf16.mxu0 0
      %2166 = vmatpush1.bf16.msra.mxu0 0
      %2167 = vmatprep.subr.bf16.mxu0 0
      %2168 = vmatpush1.bf16.msra.mxu0 0
      %2169 = vmatprep.subr.bf16.mxu0 0
      %2170 = vmatpush1.bf16.msra.mxu0 0
      %2171 = vmatprep.subr.bf16.mxu0 0
      %2172 = vmatpush1.bf16.msra.mxu0 0
      %2173 = vmatprep.subr.bf16.mxu0 0
      %2174 = vmatpush1.bf16.msra.mxu0 0
      %2175 = vmatprep.subr.bf16.mxu0 0
      %2176 = vmatpush1.bf16.msra.mxu0 0
      %2177 = vmatprep.subr.bf16.mxu0 0
      %2178 = vmatpush1.bf16.msra.mxu0 0
      %2179 = vmatprep.subr.bf16.mxu0 0
      %2180 = vmatpush1.bf16.msra.mxu0 0
      %2181 = vmatprep.mubr.bf16.mxu0 0
      %2182 = vmatmul.mubr.bf16.gmra.mrb[0].mxu0 %v2123
      %v2183 = vpop.f32.mrb[0].mxu0
      %v2184 = vadd.f32 0.0, %v2183
      %v2185 = vpop.f32.mrb[0].mxu0
      %v2186 = vpop.f32.mrb[0].mxu0
      %v2187 = vadd.f32 0.0, %v2186
      %v2188 = vpop.f32.mrb[0].mxu0
      %2189 = vmatprep.mubr.bf16.mxu0 0
      %2190 = vmatmul.mubr.bf16.gmra.mrb[0].mxu0 %v2126
      %v2191 = vpop.f32.mrb[0].mxu0
      %v2192 = vadd.f32 0.0, %v2191
      %v2193 = vpop.f32.mrb[0].mxu0
      %v2194 = vpop.f32.mrb[0].mxu0
      %v2195 = vadd.f32 0.0, %v2194
      %v2196 = vpop.f32.mrb[0].mxu0
      %2197 = vmatprep.mubr.bf16.mxu0 0
      %2198 = vmatmul.mubr.bf16.gmra.mrb[0].mxu0 %v2129
      %v2199 = vpop.f32.mrb[0].mxu0
      %v2200 = vadd.f32 0.0, %v2199
      %v2201 = vpop.f32.mrb[0].mxu0
      %v2202 = vpop.f32.mrb[0].mxu0
      %v2203 = vadd.f32 0.0, %v2202
      %v2204 = vpop.f32.mrb[0].mxu0
      %2205 = vmatprep.mubr.bf16.mxu0 0
      %2206 = vmatmul.mubr.bf16.gmra.mrb[0].mxu0 %v2132
      %v2207 = vpop.f32.mrb[0].mxu0
      %v2208 = vadd.f32 0.0, %v2207
      %v2209 = vpop.f32.mrb[0].mxu0
      %v2210 = vpop.f32.mrb[0].mxu0
      %v2211 = vadd.f32 0.0, %v2210
      %v2212 = vpop.f32.mrb[0].mxu0
      %2213 = vmatprep.mubr.bf16.mxu0 0
      %2214 = vmatmul.mubr.bf16.gmra.mrb[0].mxu0 %v2135
      %v2215 = vpop.f32.mrb[0].mxu0
      %v2216 = vadd.f32 0.0, %v2215
      %v2217 = vpop.f32.mrb[0].mxu0
      %v2218 = vpop.f32.mrb[0].mxu0
      %v2219 = vadd.f32 0.0, %v2218
      %v2220 = vpop.f32.mrb[0].mxu0
      %2221 = vmatprep.mubr.bf16.mxu0 0
      %2222 = vmatmul.mubr.bf16.gmra.mrb[0].mxu0 %v2138
      %v2223 = vpop.f32.mrb[0].mxu0
      %v2224 = vadd.f32 0.0, %v2223
      %v2225 = vpop.f32.mrb[0].mxu0
      %v2226 = vpop.f32.mrb[0].mxu0
      %v2227 = vadd.f32 0.0, %v2226
      %v2228 = vpop.f32.mrb[0].mxu0
      %2229 = vmatprep.mubr.bf16.mxu0 0
      %2230 = vmatmul.mubr.bf16.gmra.mrb[0].mxu0 %v2141
      %v2231 = vpop.f32.mrb[0].mxu0
      %v2232 = vadd.f32 0.0, %v2231
      %v2233 = vpop.f32.mrb[0].mxu0
      %v2234 = vpop.f32.mrb[0].mxu0
      %v2235 = vadd.f32 0.0, %v2234
      %v2236 = vpop.f32.mrb[0].mxu0
      %2237 = vmatprep.mubr.bf16.mxu0 0
      %2238 = vmatmul.mubr.bf16.gmra.mrb[0].mxu0 %v2144
      %v2239 = vpop.f32.mrb[0].mxu0
      %v2240 = vadd.f32 0.0, %v2239
      %v2241 = vpop.f32.mrb[0].mxu0
      %v2242 = vpop.f32.mrb[0].mxu0
      %v2243 = vadd.f32 0.0, %v2242
      %v2244 = vpop.f32.mrb[0].mxu0
      %2245 = vdwg.mxu0
      %v2262 = vunpack.c.l.b16 %v1878
      %v2263 = vunpack.c.l.b16 %v1879
      %v2264 = vunpack.c.l.b16 %v1880
      %v2265 = vunpack.c.l.b16 %v1881
      %v2266 = vunpack.c.l.b16 %v1882
      %v2267 = vunpack.c.l.b16 %v1883
      %v2268 = vunpack.c.l.b16 %v1884
      %v2269 = vunpack.c.l.b16 %v1885
      %v2270 = vunpack.c.l.b16 %v1886
      %v2271 = vunpack.c.l.b16 %v1887
      %v2272 = vunpack.c.l.b16 %v1888
      %v2273 = vunpack.c.l.b16 %v1889
      %v2274 = vunpack.c.l.b16 %v1890
      %v2275 = vunpack.c.l.b16 %v1891
      %v2276 = vunpack.c.l.b16 %v1892
      %v2277 = vunpack.c.l.b16 %v1893
      %v2278 = vpack.c.b16 %v2263, %v2262
      %v2279 = vpack.c.b16 %v2265, %v2264
      %v2280 = vpack.c.b16 %v2267, %v2266
      %v2281 = vpack.c.b16 %v2269, %v2268
      %v2282 = vpack.c.b16 %v2271, %v2270
      %v2283 = vpack.c.b16 %v2273, %v2272
      %v2284 = vpack.c.b16 %v2275, %v2274
      %v2285 = vpack.c.b16 %v2277, %v2276
      %v2287 = vsel %vm489, %v2278, 0
      %v2290 = vsel %vm489, %v2279, 0
      %v2293 = vsel %vm489, %v2280, 0
      %v2296 = vsel %vm489, %v2281, 0
      %v2299 = vsel %vm489, %v2282, 0
      %v2302 = vsel %vm489, %v2283, 0
      %v2305 = vsel %vm489, %v2284, 0
      %v2308 = vsel %vm489, %v2285, 0
      %v2311 = vsel %vm514, %v1895, 0
      %2313 = vmatprep.subr.bf16.mxu0 0
      %2314 = vmatpush1.bf16.msra.mxu0 %v2311
      %2315 = vmatprep.subr.bf16.mxu0 0
      %2316 = vmatpush1.bf16.msra.mxu0 0
      %2317 = vmatprep.subr.bf16.mxu0 0
      %2318 = vmatpush1.bf16.msra.mxu0 0
      %2319 = vmatprep.subr.bf16.mxu0 0
      %2320 = vmatpush1.bf16.msra.mxu0 0
      %2321 = vmatprep.subr.bf16.mxu0 0
      %2322 = vmatpush1.bf16.msra.mxu0 0
      %2323 = vmatprep.subr.bf16.mxu0 0
      %2324 = vmatpush1.bf16.msra.mxu0 0
      %2325 = vmatprep.subr.bf16.mxu0 0
      %2326 = vmatpush1.bf16.msra.mxu0 0
      %2327 = vmatprep.subr.bf16.mxu0 0
      %2328 = vmatpush1.bf16.msra.mxu0 0
      %2329 = vmatprep.subr.bf16.mxu0 0
      %2330 = vmatpush1.bf16.msra.mxu0 0
      %2331 = vmatprep.subr.bf16.mxu0 0
      %2332 = vmatpush1.bf16.msra.mxu0 0
      %2333 = vmatprep.subr.bf16.mxu0 0
      %2334 = vmatpush1.bf16.msra.mxu0 0
      %2335 = vmatprep.subr.bf16.mxu0 0
      %2336 = vmatpush1.bf16.msra.mxu0 0
      %2337 = vmatprep.subr.bf16.mxu0 0
      %2338 = vmatpush1.bf16.msra.mxu0 0
      %2339 = vmatprep.subr.bf16.mxu0 0
      %2340 = vmatpush1.bf16.msra.mxu0 0
      %2341 = vmatprep.subr.bf16.mxu0 0
      %2342 = vmatpush1.bf16.msra.mxu0 0
      %2343 = vmatprep.subr.bf16.mxu0 0
      %2344 = vmatpush1.bf16.msra.mxu0 0
      %2345 = vmatprep.mubr.bf16.mxu0 0
      %2346 = vmatmul.mubr.bf16.gmra.mrb[0].mxu0 %v2287
      %v2347 = vpop.f32.mrb[0].mxu0
      %v2348 = vadd.f32 %v2184, %v2347
      %v2349 = vpop.f32.mrb[0].mxu0
      %v2350 = vpop.f32.mrb[0].mxu0
      %v2351 = vadd.f32 %v2187, %v2350
      %v2352 = vpop.f32.mrb[0].mxu0
      %2353 = vmatprep.mubr.bf16.mxu0 0
      %2354 = vmatmul.mubr.bf16.gmra.mrb[0].mxu0 %v2290
      %v2355 = vpop.f32.mrb[0].mxu0
      %v2356 = vadd.f32 %v2192, %v2355
      %v2357 = vpop.f32.mrb[0].mxu0
      %v2358 = vpop.f32.mrb[0].mxu0
      %v2359 = vadd.f32 %v2195, %v2358
      %v2360 = vpop.f32.mrb[0].mxu0
      %2361 = vmatprep.mubr.bf16.mxu0 0
      %2362 = vmatmul.mubr.bf16.gmra.mrb[0].mxu0 %v2293
      %v2363 = vpop.f32.mrb[0].mxu0
      %v2364 = vadd.f32 %v2200, %v2363
      %v2365 = vpop.f32.mrb[0].mxu0
      %v2366 = vpop.f32.mrb[0].mxu0
      %v2367 = vadd.f32 %v2203, %v2366
      %v2368 = vpop.f32.mrb[0].mxu0
      %2369 = vmatprep.mubr.bf16.mxu0 0
      %2370 = vmatmul.mubr.bf16.gmra.mrb[0].mxu0 %v2296
      %v2371 = vpop.f32.mrb[0].mxu0
      %v2372 = vadd.f32 %v2208, %v2371
      %v2373 = vpop.f32.mrb[0].mxu0
      %v2374 = vpop.f32.mrb[0].mxu0
      %v2375 = vadd.f32 %v2211, %v2374
      %v2376 = vpop.f32.mrb[0].mxu0
      %2377 = vmatprep.mubr.bf16.mxu0 0
      %2378 = vmatmul.mubr.bf16.gmra.mrb[0].mxu0 %v2299
      %v2379 = vpop.f32.mrb[0].mxu0
      %v2380 = vadd.f32 %v2216, %v2379
      %v2381 = vpop.f32.mrb[0].mxu0
      %v2382 = vpop.f32.mrb[0].mxu0
      %v2383 = vadd.f32 %v2219, %v2382
      %v2384 = vpop.f32.mrb[0].mxu0
      %2385 = vmatprep.mubr.bf16.mxu0 0
      %2386 = vmatmul.mubr.bf16.gmra.mrb[0].mxu0 %v2302
      %v2387 = vpop.f32.mrb[0].mxu0
      %v2388 = vadd.f32 %v2224, %v2387
      %v2389 = vpop.f32.mrb[0].mxu0
      %v2390 = vpop.f32.mrb[0].mxu0
      %v2391 = vadd.f32 %v2227, %v2390
      %v2392 = vpop.f32.mrb[0].mxu0
      %2393 = vmatprep.mubr.bf16.mxu0 0
      %2394 = vmatmul.mubr.bf16.gmra.mrb[0].mxu0 %v2305
      %v2395 = vpop.f32.mrb[0].mxu0
      %v2396 = vadd.f32 %v2232, %v2395
      %v2397 = vpop.f32.mrb[0].mxu0
      %v2398 = vpop.f32.mrb[0].mxu0
      %v2399 = vadd.f32 %v2235, %v2398
      %v2400 = vpop.f32.mrb[0].mxu0
      %2401 = vmatprep.mubr.bf16.mxu0 0
      %2402 = vmatmul.mubr.bf16.gmra.mrb[0].mxu0 %v2308
      %v2403 = vpop.f32.mrb[0].mxu0
      %v2404 = vadd.f32 %v2240, %v2403
      %v2405 = vpop.f32.mrb[0].mxu0
      %v2406 = vpop.f32.mrb[0].mxu0
      %v2407 = vadd.f32 %v2243, %v2406
      %v2408 = vpop.f32.mrb[0].mxu0
      %2409 = vdwg.mxu0
      %v2410 = vld [vmem:[%s1877] sm:$0xe]
      %v2411 = vld [vmem:[%s1877 + $0xc] sm:$0xe]
      %v2412 = vld [vmem:[%s1877 + $0x18] sm:$0xe]
      %v2413 = vld [vmem:[%s1877 + $0x24] sm:$0xe]
      %v2414 = vld [vmem:[%s1877 + $0x30] sm:$0xe]
      %v2415 = vld [vmem:[%s1877 + $0x3c] sm:$0xe]
      %v2416 = vld [vmem:[%s1877 + $0x48] sm:$0xe]
      %v2417 = vld [vmem:[%s1877 + $0x54] sm:$0xe]
      %v2434 = vrot.slane %v2410, 5
      %v2435 = vrot.slane %v2434, 4
      %v2436 = vrot.slane %v1879, 5
      %v2437 = vsel %vm805, %v2435, %v2436
      %v2438 = vrot.slane %v2436, 4
      %v2439 = vrot.slane %v1896, 5
      %v2440 = vsel %vm805, %v2438, %v2439
      %v2441 = vrot.slane %v2411, 5
      %v2442 = vrot.slane %v2441, 4
      %v2443 = vrot.slane %v1881, 5
      %v2444 = vsel %vm805, %v2442, %v2443
      %v2445 = vrot.slane %v2443, 4
      %v2446 = vrot.slane %v1897, 5
      %v2447 = vsel %vm805, %v2445, %v2446
      %v2448 = vrot.slane %v2412, 5
      %v2449 = vrot.slane %v2448, 4
      %v2450 = vrot.slane %v1883, 5
      %v2451 = vsel %vm805, %v2449, %v2450
      %v2452 = vrot.slane %v2450, 4
      %v2453 = vrot.slane %v1898, 5
      %v2454 = vsel %vm805, %v2452, %v2453
      %v2455 = vrot.slane %v2413, 5
      %v2456 = vrot.slane %v2455, 4
      %v2457 = vrot.slane %v1885, 5
      %v2458 = vsel %vm805, %v2456, %v2457
      %v2459 = vrot.slane %v2457, 4
      %v2460 = vrot.slane %v1899, 5
      %v2461 = vsel %vm805, %v2459, %v2460
      %v2462 = vrot.slane %v2414, 5
      %v2463 = vrot.slane %v2462, 4
      %v2464 = vrot.slane %v1887, 5
      %v2465 = vsel %vm805, %v2463, %v2464
      %v2466 = vrot.slane %v2464, 4
      %v2467 = vrot.slane %v1900, 5
      %v2468 = vsel %vm805, %v2466, %v2467
      %v2469 = vrot.slane %v2415, 5
      %v2470 = vrot.slane %v2469, 4
      %v2471 = vrot.slane %v1889, 5
      %v2472 = vsel %vm805, %v2470, %v2471
      %v2473 = vrot.slane %v2471, 4
      %v2474 = vrot.slane %v1901, 5
      %v2475 = vsel %vm805, %v2473, %v2474
      %v2476 = vrot.slane %v2416, 5
      %v2477 = vrot.slane %v2476, 4
      %v2478 = vrot.slane %v1891, 5
      %v2479 = vsel %vm805, %v2477, %v2478
      %v2480 = vrot.slane %v2478, 4
      %v2481 = vrot.slane %v1902, 5
      %v2482 = vsel %vm805, %v2480, %v2481
      %v2483 = vrot.slane %v2417, 5
      %v2484 = vrot.slane %v2483, 4
      %v2485 = vrot.slane %v1893, 5
      %v2486 = vsel %vm805, %v2484, %v2485
      %v2487 = vrot.slane %v2485, 4
      %v2488 = vrot.slane %v1903, 5
      %v2489 = vsel %vm805, %v2487, %v2488
      %s2490 = scalar_lea.vmem %s1, 16
      %v2491 = vld [vmem:[%s2490] sm:$0x3]
      %v2492 = vunpack.c.l.b16 %v2437
      %v2493 = vunpack.c.l.b16 %v2440
      %v2494 = vunpack.c.l.b16 %v2444
      %v2495 = vunpack.c.l.b16 %v2447
      %v2496 = vunpack.c.l.b16 %v2451
      %v2497 = vunpack.c.l.b16 %v2454
      %v2498 = vunpack.c.l.b16 %v2458
      %v2499 = vunpack.c.l.b16 %v2461
      %v2500 = vunpack.c.l.b16 %v2465
      %v2501 = vunpack.c.l.b16 %v2468
      %v2502 = vunpack.c.l.b16 %v2472
      %v2503 = vunpack.c.l.b16 %v2475
      %v2504 = vunpack.c.l.b16 %v2479
      %v2505 = vunpack.c.l.b16 %v2482
      %v2506 = vunpack.c.l.b16 %v2486
      %v2507 = vunpack.c.l.b16 %v2489
      %v2508 = vpack.c.b16 %v2493, %v2492
      %v2509 = vpack.c.b16 %v2495, %v2494
      %v2510 = vpack.c.b16 %v2497, %v2496
      %v2511 = vpack.c.b16 %v2499, %v2498
      %v2512 = vpack.c.b16 %v2501, %v2500
      %v2513 = vpack.c.b16 %v2503, %v2502
      %v2514 = vpack.c.b16 %v2505, %v2504
      %v2515 = vpack.c.b16 %v2507, %v2506
      %v2517 = vsel %vm489, %v2508, 0
      %v2520 = vsel %vm489, %v2509, 0
      %v2523 = vsel %vm489, %v2510, 0
      %v2526 = vsel %vm489, %v2511, 0
      %v2529 = vsel %vm489, %v2512, 0
      %v2532 = vsel %vm489, %v2513, 0
      %v2535 = vsel %vm489, %v2514, 0
      %v2538 = vsel %vm489, %v2515, 0
      %v2541 = vsel %vm514, %v2491, 0
      %2543 = vmatprep.subr.bf16.mxu0 0
      %2544 = vmatpush1.bf16.msra.mxu0 %v2541
      %2545 = vmatprep.subr.bf16.mxu0 0
      %2546 = vmatpush1.bf16.msra.mxu0 0
      %2547 = vmatprep.subr.bf16.mxu0 0
      %2548 = vmatpush1.bf16.msra.mxu0 0
      %2549 = vmatprep.subr.bf16.mxu0 0
      %2550 = vmatpush1.bf16.msra.mxu0 0
      %2551 = vmatprep.subr.bf16.mxu0 0
      %2552 = vmatpush1.bf16.msra.mxu0 0
      %2553 = vmatprep.subr.bf16.mxu0 0
      %2554 = vmatpush1.bf16.msra.mxu0 0
      %2555 = vmatprep.subr.bf16.mxu0 0
      %2556 = vmatpush1.bf16.msra.mxu0 0
      %2557 = vmatprep.subr.bf16.mxu0 0
      %2558 = vmatpush1.bf16.msra.mxu0 0
      %2559 = vmatprep.subr.bf16.mxu0 0
      %2560 = vmatpush1.bf16.msra.mxu0 0
      %2561 = vmatprep.subr.bf16.mxu0 0
      %2562 = vmatpush1.bf16.msra.mxu0 0
      %2563 = vmatprep.subr.bf16.mxu0 0
      %2564 = vmatpush1.bf16.msra.mxu0 0
      %2565 = vmatprep.subr.bf16.mxu0 0
      %2566 = vmatpush1.bf16.msra.mxu0 0
      %2567 = vmatprep.subr.bf16.mxu0 0
      %2568 = vmatpush1.bf16.msra.mxu0 0
      %2569 = vmatprep.subr.bf16.mxu0 0
      %2570 = vmatpush1.bf16.msra.mxu0 0
      %2571 = vmatprep.subr.bf16.mxu0 0
      %2572 = vmatpush1.bf16.msra.mxu0 0
      %2573 = vmatprep.subr.bf16.mxu0 0
      %2574 = vmatpush1.bf16.msra.mxu0 0
      %2575 = vmatprep.mubr.bf16.mxu0 0
      %2576 = vmatmul.mubr.bf16.gmra.mrb[0].mxu0 %v2517
      %v2577 = vpop.f32.mrb[0].mxu0
      %v2578 = vadd.f32 0.0, %v2577
      %v2579 = vpop.f32.mrb[0].mxu0
      %v2580 = vpop.f32.mrb[0].mxu0
      %v2581 = vadd.f32 0.0, %v2580
      %v2582 = vpop.f32.mrb[0].mxu0
      %2583 = vmatprep.mubr.bf16.mxu0 0
      %2584 = vmatmul.mubr.bf16.gmra.mrb[0].mxu0 %v2520
      %v2585 = vpop.f32.mrb[0].mxu0
      %v2586 = vadd.f32 0.0, %v2585
      %v2587 = vpop.f32.mrb[0].mxu0
      %v2588 = vpop.f32.mrb[0].mxu0
      %v2589 = vadd.f32 0.0, %v2588
      %v2590 = vpop.f32.mrb[0].mxu0
      %2591 = vmatprep.mubr.bf16.mxu0 0
      %2592 = vmatmul.mubr.bf16.gmra.mrb[0].mxu0 %v2523
      %v2593 = vpop.f32.mrb[0].mxu0
      %v2594 = vadd.f32 0.0, %v2593
      %v2595 = vpop.f32.mrb[0].mxu0
      %v2596 = vpop.f32.mrb[0].mxu0
      %v2597 = vadd.f32 0.0, %v2596
      %v2598 = vpop.f32.mrb[0].mxu0
      %2599 = vmatprep.mubr.bf16.mxu0 0
      %2600 = vmatmul.mubr.bf16.gmra.mrb[0].mxu0 %v2526
      %v2601 = vpop.f32.mrb[0].mxu0
      %v2602 = vadd.f32 0.0, %v2601
      %v2603 = vpop.f32.mrb[0].mxu0
      %v2604 = vpop.f32.mrb[0].mxu0
      %v2605 = vadd.f32 0.0, %v2604
      %v2606 = vpop.f32.mrb[0].mxu0
      %2607 = vmatprep.mubr.bf16.mxu0 0
      %2608 = vmatmul.mubr.bf16.gmra.mrb[0].mxu0 %v2529
      %v2609 = vpop.f32.mrb[0].mxu0
      %v2610 = vadd.f32 0.0, %v2609
      %v2611 = vpop.f32.mrb[0].mxu0
      %v2612 = vpop.f32.mrb[0].mxu0
      %v2613 = vadd.f32 0.0, %v2612
      %v2614 = vpop.f32.mrb[0].mxu0
      %2615 = vmatprep.mubr.bf16.mxu0 0
      %2616 = vmatmul.mubr.bf16.gmra.mrb[0].mxu0 %v2532
      %v2617 = vpop.f32.mrb[0].mxu0
      %v2618 = vadd.f32 0.0, %v2617
      %v2619 = vpop.f32.mrb[0].mxu0
      %v2620 = vpop.f32.mrb[0].mxu0
      %v2621 = vadd.f32 0.0, %v2620
      %v2622 = vpop.f32.mrb[0].mxu0
      %2623 = vmatprep.mubr.bf16.mxu0 0
      %2624 = vmatmul.mubr.bf16.gmra.mrb[0].mxu0 %v2535
      %v2625 = vpop.f32.mrb[0].mxu0
      %v2626 = vadd.f32 0.0, %v2625
      %v2627 = vpop.f32.mrb[0].mxu0
      %v2628 = vpop.f32.mrb[0].mxu0
      %v2629 = vadd.f32 0.0, %v2628
      %v2630 = vpop.f32.mrb[0].mxu0
      %2631 = vmatprep.mubr.bf16.mxu0 0
      %2632 = vmatmul.mubr.bf16.gmra.mrb[0].mxu0 %v2538
      %v2633 = vpop.f32.mrb[0].mxu0
      %v2634 = vadd.f32 0.0, %v2633
      %v2635 = vpop.f32.mrb[0].mxu0
      %v2636 = vpop.f32.mrb[0].mxu0
      %v2637 = vadd.f32 0.0, %v2636
      %v2638 = vpop.f32.mrb[0].mxu0
      %2639 = vdwg.mxu0
      %v2640 = vadd.f32 %v2348, %v2578
      %v2641 = vadd.f32 %v2351, %v2581
      %v2642 = vadd.f32 %v2356, %v2586
      %v2643 = vadd.f32 %v2359, %v2589
      %v2644 = vadd.f32 %v2364, %v2594
      %v2645 = vadd.f32 %v2367, %v2597
      %v2646 = vadd.f32 %v2372, %v2602
      %v2647 = vadd.f32 %v2375, %v2605
      %v2648 = vadd.f32 %v2380, %v2610
      %v2649 = vadd.f32 %v2383, %v2613
      %v2650 = vadd.f32 %v2388, %v2618
      %v2651 = vadd.f32 %v2391, %v2621
      %v2652 = vadd.f32 %v2396, %v2626
      %v2653 = vadd.f32 %v2399, %v2629
      %v2654 = vadd.f32 %v2404, %v2634
      %v2655 = vadd.f32 %v2407, %v2637
      %v2656 = vld [vmem:[#allocation2] sm:$0xff]
      %v2657 = vld [vmem:[#allocation2 + $0x8] sm:$0xff]
      %v2658 = vld [vmem:[#allocation2 + $0x10] sm:$0xff]
      %v2659 = vld [vmem:[#allocation2 + $0x18] sm:$0xff]
      %v2660 = vld [vmem:[#allocation2 + $0x20] sm:$0xff]
      %v2661 = vld [vmem:[#allocation2 + $0x28] sm:$0xff]
      %v2662 = vld [vmem:[#allocation2 + $0x30] sm:$0xff]
      %v2663 = vld [vmem:[#allocation2 + $0x38] sm:$0xff]
      %v2664 = vld [vmem:[#allocation2 + $0x40] sm:$0xff]
      %v2665 = vld [vmem:[#allocation2 + $0x48] sm:$0xff]
      %v2666 = vld [vmem:[#allocation2 + $0x50] sm:$0xff]
      %v2667 = vld [vmem:[#allocation2 + $0x58] sm:$0xff]
      %v2668 = vld [vmem:[#allocation2 + $0x60] sm:$0xff]
      %v2669 = vld [vmem:[#allocation2 + $0x68] sm:$0xff]
      %v2670 = vld [vmem:[#allocation2 + $0x70] sm:$0xff]
      %v2671 = vld [vmem:[#allocation2 + $0x78] sm:$0xff]
      %v2672 = vadd.f32 %v2656, %v2640
      %v2673 = vadd.f32 %v2657, %v2641
      %v2674 = vadd.f32 %v2658, %v2642
      %v2675 = vadd.f32 %v2659, %v2643
      %v2676 = vadd.f32 %v2660, %v2644
      %v2677 = vadd.f32 %v2661, %v2645
      %v2678 = vadd.f32 %v2662, %v2646
      %v2679 = vadd.f32 %v2663, %v2647
      %v2680 = vadd.f32 %v2664, %v2648
      %v2681 = vadd.f32 %v2665, %v2649
      %v2682 = vadd.f32 %v2666, %v2650
      %v2683 = vadd.f32 %v2667, %v2651
      %v2684 = vadd.f32 %v2668, %v2652
      %v2685 = vadd.f32 %v2669, %v2653
      %v2686 = vadd.f32 %v2670, %v2654
      %v2687 = vadd.f32 %v2671, %v2655
      %2688 = vst [vmem:[#allocation2] sm:$0xff] %v2672
      %2689 = vst [vmem:[#allocation2 + $0x8] sm:$0xff] %v2673
      %2690 = vst [vmem:[#allocation2 + $0x10] sm:$0xff] %v2674
      %2691 = vst [vmem:[#allocation2 + $0x18] sm:$0xff] %v2675
      %2692 = vst [vmem:[#allocation2 + $0x20] sm:$0xff] %v2676
      %2693 = vst [vmem:[#allocation2 + $0x28] sm:$0xff] %v2677
      %2694 = vst [vmem:[#allocation2 + $0x30] sm:$0xff] %v2678
      %2695 = vst [vmem:[#allocation2 + $0x38] sm:$0xff] %v2679
      %2696 = vst [vmem:[#allocation2 + $0x40] sm:$0xff] %v2680
      %2697 = vst [vmem:[#allocation2 + $0x48] sm:$0xff] %v2681
      %2698 = vst [vmem:[#allocation2 + $0x50] sm:$0xff] %v2682
      %2699 = vst [vmem:[#allocation2 + $0x58] sm:$0xff] %v2683
      %2700 = vst [vmem:[#allocation2 + $0x60] sm:$0xff] %v2684
      %2701 = vst [vmem:[#allocation2 + $0x68] sm:$0xff] %v2685
      %2702 = vst [vmem:[#allocation2 + $0x70] sm:$0xff] %v2686
      %2703 = vst [vmem:[#allocation2 + $0x78] sm:$0xff] %v2687
      %v2704 = vld [vmem:[#allocation2] sm:$0xff]
      %v2705 = vld [vmem:[#allocation2 + $0x8] sm:$0xff]
      %v2706 = vld [vmem:[#allocation2 + $0x10] sm:$0xff]
      %v2707 = vld [vmem:[#allocation2 + $0x18] sm:$0xff]
      %v2708 = vld [vmem:[#allocation2 + $0x20] sm:$0xff]
      %v2709 = vld [vmem:[#allocation2 + $0x28] sm:$0xff]
      %v2710 = vld [vmem:[#allocation2 + $0x30] sm:$0xff]
      %v2711 = vld [vmem:[#allocation2 + $0x38] sm:$0xff]
      %v2712 = vld [vmem:[#allocation2 + $0x40] sm:$0xff]
      %v2713 = vld [vmem:[#allocation2 + $0x48] sm:$0xff]
      %v2714 = vld [vmem:[#allocation2 + $0x50] sm:$0xff]
      %v2715 = vld [vmem:[#allocation2 + $0x58] sm:$0xff]
      %v2716 = vld [vmem:[#allocation2 + $0x60] sm:$0xff]
      %v2717 = vld [vmem:[#allocation2 + $0x68] sm:$0xff]
      %v2718 = vld [vmem:[#allocation2 + $0x70] sm:$0xff]
      %v2719 = vld [vmem:[#allocation2 + $0x78] sm:$0xff]
      %v2720 = vpack.c.bf16 %v2705, %v2704
      %v2721 = vpack.c.bf16 %v2707, %v2706
      %v2722 = vpack.c.bf16 %v2709, %v2708
      %v2723 = vpack.c.bf16 %v2711, %v2710
      %v2724 = vpack.c.bf16 %v2713, %v2712
      %v2725 = vpack.c.bf16 %v2715, %v2714
      %v2726 = vpack.c.bf16 %v2717, %v2716
      %v2727 = vpack.c.bf16 %v2719, %v2718
      %v2736 = vunpack.c.l.b16 %v2720
      %v2737 = vunpack.c.h.b16 %v2720
      %v2738 = vunpack.c.l.b16 %v2721
      %v2739 = vunpack.c.h.b16 %v2721
      %v2740 = vunpack.c.l.b16 %v2722
      %v2741 = vunpack.c.h.b16 %v2722
      %v2742 = vunpack.c.l.b16 %v2723
      %v2743 = vunpack.c.h.b16 %v2723
      %v2744 = vunpack.c.l.b16 %v2724
      %v2745 = vunpack.c.h.b16 %v2724
      %v2746 = vunpack.c.l.b16 %v2725
      %v2747 = vunpack.c.h.b16 %v2725
      %v2748 = vunpack.c.l.b16 %v2726
      %v2749 = vunpack.c.h.b16 %v2726
      %v2750 = vunpack.c.l.b16 %v2727
      %v2751 = vunpack.c.h.b16 %v2727
      %v2752 = vpack.c.b16 %v2736, %v2736
      %v2753 = vpack.c.b16 %v2737, %v2737
      %v2754 = vpack.c.b16 %v2738, %v2738
      %v2755 = vpack.c.b16 %v2739, %v2739
      %v2756 = vpack.c.b16 %v2740, %v2740
      %v2757 = vpack.c.b16 %v2741, %v2741
      %v2758 = vpack.c.b16 %v2742, %v2742
      %v2759 = vpack.c.b16 %v2743, %v2743
      %v2760 = vpack.c.b16 %v2744, %v2744
      %v2761 = vpack.c.b16 %v2745, %v2745
      %v2762 = vpack.c.b16 %v2746, %v2746
      %v2763 = vpack.c.b16 %v2747, %v2747
      %v2764 = vpack.c.b16 %v2748, %v2748
      %v2765 = vpack.c.b16 %v2749, %v2749
      %v2766 = vpack.c.b16 %v2750, %v2750
      %v2767 = vpack.c.b16 %v2751, %v2751
      %2784 = vst [vmem:[%s230] sm:$0xf] %v2752
      %2785 = vst [vmem:[%s230 + $0x4] sm:$0xf] %v2753
      %2786 = vst [vmem:[%s230 + $0x8] sm:$0xf] %v2754
      %2787 = vst [vmem:[%s230 + $0xc] sm:$0xf] %v2755
      %2788 = vst [vmem:[%s230 + $0x10] sm:$0xf] %v2756
      %2789 = vst [vmem:[%s230 + $0x14] sm:$0xf] %v2757
      %2790 = vst [vmem:[%s230 + $0x18] sm:$0xf] %v2758
      %2791 = vst [vmem:[%s230 + $0x1c] sm:$0xf] %v2759
      %2792 = vst [vmem:[%s230 + $0x20] sm:$0xf] %v2760
      %2793 = vst [vmem:[%s230 + $0x24] sm:$0xf] %v2761
      %2794 = vst [vmem:[%s230 + $0x28] sm:$0xf] %v2762
      %2795 = vst [vmem:[%s230 + $0x2c] sm:$0xf] %v2763
      %2796 = vst [vmem:[%s230 + $0x30] sm:$0xf] %v2764
      %2797 = vst [vmem:[%s230 + $0x34] sm:$0xf] %v2765
      %2798 = vst [vmem:[%s230 + $0x38] sm:$0xf] %v2766
      %2799 = vst [vmem:[%s230 + $0x3c] sm:$0xf] %v2767
      %v2800 = vadd.f32 %v2704, %v2705
      %v2801 = vadd.f32 %v2800, %v2706
      %v2802 = vadd.f32 %v2801, %v2707
      %v2803 = vadd.f32 %v2802, %v2708
      %v2804 = vadd.f32 %v2803, %v2709
      %v2805 = vadd.f32 %v2804, %v2710
      %v2806 = vadd.f32 %v2805, %v2711
      %v2807 = vadd.f32 %v2806, %v2712
      %v2808 = vadd.f32 %v2807, %v2713
      %v2809 = vadd.f32 %v2808, %v2714
      %v2810 = vadd.f32 %v2809, %v2715
      %v2811 = vadd.f32 %v2810, %v2716
      %v2812 = vadd.f32 %v2811, %v2717
      %v2813 = vadd.f32 %v2812, %v2718
      %v2814 = vadd.f32 %v2813, %v2719
      %v2815 = vrot.slane %v2814, 4
      %v2816 = vadd.f32 %v2814, %v2815
      %v2817 = vrot.slane %v2816, 2
      %v2818 = vadd.f32 %v2816, %v2817
      %v2819 = vrot.slane %v2818, 1
      %v2820 = vadd.f32 %v2818, %v2819
      %v2821 = vmul.f32 %v2704, %v2704
      %v2822 = vmul.f32 %v2705, %v2705
      %v2823 = vmul.f32 %v2706, %v2706
      %v2824 = vmul.f32 %v2707, %v2707
      %v2825 = vmul.f32 %v2708, %v2708
      %v2826 = vmul.f32 %v2709, %v2709
      %v2827 = vmul.f32 %v2710, %v2710
      %v2828 = vmul.f32 %v2711, %v2711
      %v2829 = vmul.f32 %v2712, %v2712
      %v2830 = vmul.f32 %v2713, %v2713
      %v2831 = vmul.f32 %v2714, %v2714
      %v2832 = vmul.f32 %v2715, %v2715
      %v2833 = vmul.f32 %v2716, %v2716
      %v2834 = vmul.f32 %v2717, %v2717
      %v2835 = vmul.f32 %v2718, %v2718
      %v2836 = vmul.f32 %v2719, %v2719
      %v2837 = vadd.f32 %v2821, %v2822
      %v2838 = vadd.f32 %v2837, %v2823
      %v2839 = vadd.f32 %v2838, %v2824
      %v2840 = vadd.f32 %v2839, %v2825
      %v2841 = vadd.f32 %v2840, %v2826
      %v2842 = vadd.f32 %v2841, %v2827
      %v2843 = vadd.f32 %v2842, %v2828
      %v2844 = vadd.f32 %v2843, %v2829
      %v2845 = vadd.f32 %v2844, %v2830
      %v2846 = vadd.f32 %v2845, %v2831
      %v2847 = vadd.f32 %v2846, %v2832
      %v2848 = vadd.f32 %v2847, %v2833
      %v2849 = vadd.f32 %v2848, %v2834
      %v2850 = vadd.f32 %v2849, %v2835
      %v2851 = vadd.f32 %v2850, %v2836
      %v2852 = vrot.slane %v2851, 4
      %v2853 = vadd.f32 %v2851, %v2852
      %v2854 = vrot.slane %v2853, 2
      %v2855 = vadd.f32 %v2853, %v2854
      %v2856 = vrot.slane %v2855, 1
      %v2857 = vadd.f32 %v2855, %v2856
      %p2858 = scmp.eq.s32.totalorder %s21, 0
      // Predicated region
      $region29: #{cnn_block_forward.2} parent=27 // pred_check
        %p2859 = pneg %p2858
      $region30: #{cnn_block_forward.2} parent=27 // pred_check_branch
        %2861 = sbr.rel (%p2859) target = $region32
      $region31: #{cnn_block_forward.2} parent=27 // pred_region
        %2862 = vst [vmem:[%s234] sm:$0x1] %v2820
        %2863 = vst [vmem:[%s237] sm:$0x1] %v2857
      $region32: #{cnn_block_forward.2} parent=27 // pred_fallthru
        _
      %p2864 = scmp.gt.s32.totalorder %s21, 0
      // Predicated region
      $region33: #{cnn_block_forward.2} parent=27 // pred_check
        %p2865 = pneg %p2864
      $region34: #{cnn_block_forward.2} parent=27 // pred_check_branch
        %2867 = sbr.rel (%p2865) target = $region36
      $region35: #{cnn_block_forward.2} parent=27 // pred_region
        %v2868 = vld [vmem:[%s234] sm:$0x1]
        %v2869 = vadd.f32 %v2868, %v2820
        %2870 = vst [vmem:[%s234] sm:$0x1] %v2869
        %v2871 = vld [vmem:[%s237] sm:$0x1]
        %v2872 = vadd.f32 %v2871, %v2857
        %2873 = vst [vmem:[%s237] sm:$0x1] %v2872
      $region36: #{cnn_block_forward.2} parent=27 // pred_fallthru
        _
      %s2874 = smul.u32 16, %s21
      %p2875 = scmp.lt.s32.totalorder %s20, 1
      %s2876 = scalar_select %p2875, %s20, 1
      %p2877 = scmp.lt.s32.totalorder %s2874, 31
      %s2878 = scalar_select %p2877, %s2874, 31
      %s2879 = smul.addr %s2876, 32
      %s2880 = sadd.s32 %s2878, %s2879
      %s2881 = smul.addr %s2880, 4
      %s2882 = scalar_lea.vmem %s2, %s2881
      %p2883 = scmp.lt.s32.totalorder %s20, 1
      %s2884 = scalar_select %p2883, %s20, 1
      %s2885 = scalar_lea.vmem %s3, %s2884
      %p2886 = scmp.lt.s32.totalorder %s20, 1
      %s2887 = scalar_select %p2886, %s20, 1
      %s2888 = scalar_lea.vmem %s4, %s2887
      // Predicated region
      $region37: #{cnn_block_forward.2} parent=27 // pred_check
        %p2889 = pneg %p95
      $region38: #{cnn_block_forward.2} parent=27 // pred_check_branch
        %2891 = sbr.rel (%p2889) target = $region40
      $region39: #{cnn_block_forward.2} parent=27 // pred_region
        %s2892 = smul.u32 16, %s21
      $region40: #{cnn_block_forward.2} parent=27 // pred_fallthru
        _
      // Predicated region
      $region41: #{cnn_block_forward.2} parent=27 // pred_check
        %p2893 = pneg %p121
      $region42: #{cnn_block_forward.2} parent=27 // pred_check_branch
        %2895 = sbr.rel (%p2893) target = $region44
      $region43: #{cnn_block_forward.2} parent=27 // pred_region
        _
      $region44: #{cnn_block_forward.2} parent=27 // pred_fallthru
        _
      // Predicated region
      $region45: #{cnn_block_forward.2} parent=27 // pred_check
        %p2896 = pneg %p147
      $region46: #{cnn_block_forward.2} parent=27 // pred_check_branch
        %2898 = sbr.rel (%p2896) target = $region48
      $region47: #{cnn_block_forward.2} parent=27 // pred_region
        _
      $region48: #{cnn_block_forward.2} parent=27 // pred_fallthru
        _
    $region28: #{cnn_block_forward.2} parent=5 // pred_fallthru
      _
    %p2899 = scmp.le.s32.totalorder 2, %s11
    // Predicated region
    $region49: #{cnn_block_forward.2} parent=5 // pred_check
      %p2900 = pneg %p2899
    $region50: #{cnn_block_forward.2} parent=5 // pred_check_branch
      %2902 = sbr.rel (%p2900) target = $region52
    $region51: #{cnn_block_forward.2} parent=5 // pred_region
      %s2903 = ssub.s32 %s11, 2
      // Predicated region
      $region53: #{cnn_block_forward.2} parent=51 // pred_check
        %p2904 = pneg %p101
      $region54: #{cnn_block_forward.2} parent=51 // pred_check_branch
        %2906 = sbr.rel (%p2904) target = $region56
      $region55: #{cnn_block_forward.2} parent=51 // pred_region
        %s2907 = smul.u32 16, %s23
        %p2908 = scmp.lt.s32.totalorder %s22, 1
        %s2909 = scalar_select %p2908, %s22, 1
        %p2910 = scmp.lt.s32.totalorder %s2907, 31
        %s2911 = scalar_select %p2910, %s2907, 31
        %s2912 = smul.addr %s2909, 32
        %s2913 = sadd.s32 %s2911, %s2912
        %s2914 = smul.addr %s2913, 4
        %s2915 = scalar_lea.vmem %s2, %s2914
      $region56: #{cnn_block_forward.2} parent=51 // pred_fallthru
        _
      // Predicated region
      $region57: #{cnn_block_forward.2} parent=51 // pred_check
        %p2916 = pneg %p127
      $region58: #{cnn_block_forward.2} parent=51 // pred_check_branch
        %2918 = sbr.rel (%p2916) target = $region60
      $region59: #{cnn_block_forward.2} parent=51 // pred_region
        %p2919 = scmp.lt.s32.totalorder %s22, 1
        %s2920 = scalar_select %p2919, %s22, 1
        %s2921 = scalar_lea.vmem %s3, %s2920
      $region60: #{cnn_block_forward.2} parent=51 // pred_fallthru
        _
      // Predicated region
      $region61: #{cnn_block_forward.2} parent=51 // pred_check
        %p2922 = pneg %p153
      $region62: #{cnn_block_forward.2} parent=51 // pred_check_branch
        %2924 = sbr.rel (%p2922) target = $region64
      $region63: #{cnn_block_forward.2} parent=51 // pred_region
        %p2925 = scmp.lt.s32.totalorder %s22, 1
        %s2926 = scalar_select %p2925, %s22, 1
        %s2927 = scalar_lea.vmem %s4, %s2926
      $region64: #{cnn_block_forward.2} parent=51 // pred_fallthru
        _
    $region52: #{cnn_block_forward.2} parent=5 // pred_fallthru
      _
  $region6: #{cnn_block_forward.2} parent=0 // loop_footer
    %s15 = sadd.s32 1, %s11
  $region7: #{cnn_block_forward.2} parent=0 // loop_footer_branch
    %10 = sbr.rel target = $region3
  $region8: #{cnn_block_forward.2} parent=0 // loop_exit
    _

</llo_original>
